<compile_context>
chip_gen: v6e
topology: v6e:2x2x1
jax: 0.10.0
libtpu: 0.0.40
codegen_flags: <defaults>
</compile_context>

<pallas_src>
import functools

import jax
import jax.numpy as jnp
from jax.experimental import pallas as pl
from jax.experimental.pallas import tpu as pltpu


def _attention_inter_kernel(x_ref, bias_ref, wq_ref, wk_ref, wv_ref, wp_ref,
                            bproj_ref, o_ref, ocat_ref, *, num_heads, scale):
    """One grid step: `batch_block` batch elements, all heads, both halves."""
    tokens, C = x_ref.shape
    H = num_heads
    hd = C // H
    cdt = x_ref.dtype                       # MXU operand dtype (bf16 recommended)

    x = x_ref[...]                          # (tokens, C)

    # Head-batched QKV: the head axis is a *batch* dim born from the host-side
    # (H, C, hd) weight layout, so there are no in-kernel lane slices of a
    # (tokens, 3C) intermediate and no per-head q/k/v extraction.
    xb = jnp.broadcast_to(x, (H, tokens, C))
    q = jnp.einsum('htc,hcd->htd', xb, wq_ref[...],
                   preferred_element_type=jnp.float32)
    q = (q * scale).astype(cdt)             # attention scale folded into q in f32
    k = jnp.einsum('htc,hcd->htd', xb, wk_ref[...],
                   preferred_element_type=jnp.float32).astype(cdt)
    v = jnp.einsum('htc,hcd->htd', xb, wv_ref[...],
                   preferred_element_type=jnp.float32).astype(cdt)

    # Cross-half attention for all heads in one batched MXU einsum.  The
    # additive bias (0 where the query half differs from the key half inside
    # the same batch element, -1e30 otherwise) reproduces softmax(q1 k2^T) v2
    # and softmax(q2 k1^T) v1 without any per-(head, half, batch) slicing.
    # TODO(synk): for large N, flash-tile the kv axis (online softmax) instead
    # of materializing the (tokens, tokens) score matrix per head.
    s = jnp.einsum('hqd,hkd->hqk', q, k, preferred_element_type=jnp.float32)
    s = s + bias_ref[...]                   # (tokens, tokens), broadcast over heads
    s = s - jnp.max(s, axis=-1, keepdims=True)
    p = jnp.exp(s)                          # f32 softmax math (v5e-safe)
    denom = jnp.sum(p, axis=-1, keepdims=True)
    o = jnp.einsum('hqk,hkd->hqd', p.astype(cdt), v,
                   preferred_element_type=jnp.float32)
    # Deferred normalization: multiply (H, tokens, hd) elements; reciprocal
    # goes to the EUP slot instead of a VPU divide on the score matrix.
    o = (o * pl.reciprocal(denom, approx=True)).astype(cdt)

    # Head concat into a lane-dense (tokens, C) VMEM scratch via H narrow
    # slice stores, then ONE K=C output-projection matmul (instead of H
    # accumulating K=hd matmuls).
    for h in range(H):                      # H small, static stores, no concat
        ocat_ref[:, h * hd:(h + 1) * hd] = o[h]
    y = jnp.dot(ocat_ref[...], wp_ref[...], preferred_element_type=jnp.float32)
    y = y + bproj_ref[...].astype(jnp.float32)
    # TODO(synk): attn_drop / proj_drop / drop_path are identity at inference.
    o_ref[...] = y.astype(o_ref.dtype)      # single dense full-tile store


def _step_vmem_bytes(batch_block, N, C, H, itemsize):
    """Rough per-grid-step VMEM working-set estimate (activations only)."""
    tokens = batch_block * N
    act = tokens * C
    return ((3 * H + 5) * act * itemsize        # x, broadcast copies, q/k/v, o, ocat
            + 4 * act * 4                       # f32 intermediates / proj accum
            + 2 * H * tokens * tokens * 4)      # scores + probs (f32)


def prepare_attention_inter_params(w_qkv, w_proj, b_proj, num_heads):
    """One-time host-side weight layout prep (layout plumbing, not per-call).

    w_qkv:  (C, 3C) stored (in, out)  [== torch W_qkv.T], no bias
    w_proj: (C, C)  stored (in, out)  [== torch W_proj.T]
    b_proj: (C,)
    Returns head-major (H, C, hd) QKV weights plus the projection weight/bias.
    """
    C = w_proj.shape[0]
    H = num_heads
    hd = C // H

    def heads(w):                               # (C, C) -> (H, C, hd)
        return jnp.transpose(w.reshape(C, H, hd), (1, 0, 2))

    return {
        "w_q": heads(w_qkv[:, :C]),
        "w_k": heads(w_qkv[:, C:2 * C]),
        "w_v": heads(w_qkv[:, 2 * C:]),
        "w_proj": w_proj,
        "b_proj": b_proj.reshape(1, C),
        "num_heads": H,
    }


def attention_inter(x, params, *, batch_block=None):
    """Pallas Attention_inter forward (eval mode).

    x:      (B, N, C) activations (any float dtype; bf16 recommended)
    params: output of prepare_attention_inter_params(...)
    """
    B, N, C = x.shape
    H = params["num_heads"]
    hd = C // H
    assert N % 2 == 0 and C % H == 0
    half = N // 2
    scale = hd ** -0.5
    itemsize = jnp.dtype(x.dtype).itemsize

    # Per-generation VMEM budget: query the hardware and leave headroom for
    # Mosaic internal scratch and double-buffered BlockSpec slabs
    # (~54 MiB on v7x's 64 MiB, ~109 MiB on v5e/v6e's 128 MiB).
    try:
        vmem_cap = pltpu.get_tpu_info().vmem_capacity_bytes
    except Exception:
        vmem_cap = 56 * 1024 * 1024             # conservative, safe on v7x too
    vmem_limit = min(int(vmem_cap * 0.85), 110 * 1024 * 1024)

    # Grid: one batch element per step by default (grid = (B,)): the pipeline
    # gets as many steps as B allows (even for even B -> both v7x TCs busy).
    # Larger batch_block fattens the per-step matmuls but pays extra masked
    # score work, so it is only auto-enabled for very short sequences and
    # only while it fits the VMEM budget.
    if batch_block is None:
        batch_block = 1
        if N <= 32:
            while (batch_block * 2 <= max(B // 4, 1)
                   and B % (batch_block * 2) == 0
                   and _step_vmem_bytes(batch_block * 2, N, C, H, itemsize)
                   < vmem_limit // 4):
                batch_block *= 2
    assert B % batch_block == 0
    tokens = batch_block * N
    grid = (B // batch_block,)
    steps = B // batch_block

    # Additive cross-half bias built host-side (layout plumbing): query tokens
    # may only attend keys of the *other* half of the *same* batch element.
    t = jnp.arange(tokens)
    same_batch = (t[:, None] // N) == (t[None, :] // N)
    other_half = ((t[:, None] % N) // half) != ((t[None, :] % N) // half)
    bias = jnp.where(same_batch & other_half, 0.0, -1e30).astype(jnp.float32)

    # Advisory cost estimate so XLA schedules around the custom call.
    w_itemsize = jnp.dtype(params["w_proj"].dtype).itemsize
    flops = (2 * B * N * C * (3 * C)                  # QKV projections
             + 4 * steps * H * tokens * tokens * hd   # scores + AV (masked full)
             + 2 * B * N * C * C)                     # output projection
    transcendentals = steps * H * tokens * tokens     # exp
    bytes_accessed = (2 * B * N * C * itemsize        # x in + y out
                      + 4 * C * C * w_itemsize        # Wq,Wk,Wv,Wproj
                      + C * 4 + tokens * tokens * 4)  # bias vectors
    cost = pl.CostEstimate(flops=int(flops),
                           transcendentals=int(transcendentals),
                           bytes_accessed=int(bytes_accessed))

    x_tok = x.reshape(B * N, C)                        # token-major slab
    kernel = functools.partial(_attention_inter_kernel, num_heads=H, scale=scale)

    out_tok = pl.pallas_call(
        kernel,
        out_shape=jax.ShapeDtypeStruct((B * N, C), x.dtype),
        grid=grid,
        in_specs=[
            pl.BlockSpec((tokens, C), lambda i: (i, 0)),        # activations
            # Constant index maps: mask / weights / bias fetched once.
            # TODO(synk): single-buffer these (pipeline_mode=pl.Buffered(1))
            # and K-tile the contractions for large C on v7x.
            pl.BlockSpec((tokens, tokens), lambda i: (0, 0)),   # additive mask
            pl.BlockSpec((H, C, hd), lambda i: (0, 0, 0)),      # Wq (head-major)
            pl.BlockSpec((H, C, hd), lambda i: (0, 0, 0)),      # Wk
            pl.BlockSpec((H, C, hd), lambda i: (0, 0, 0)),      # Wv
            pl.BlockSpec((C, C), lambda i: (0, 0)),             # Wproj
            pl.BlockSpec((1, C), lambda i: (0, 0)),             # bproj
        ],
        out_specs=pl.BlockSpec((tokens, C), lambda i: (i, 0)),
        scratch_shapes=[pltpu.VMEM((tokens, C), x.dtype)],      # head-concat buffer
        compiler_params=pltpu.CompilerParams(
            dimension_semantics=("parallel",),
            vmem_limit_bytes=int(vmem_limit),
        ),
        cost_estimate=cost,
    )(x_tok, bias, params["w_q"], params["w_k"], params["w_v"],
      params["w_proj"], params["b_proj"])
    return out_tok.reshape(B, N, C)


def attention_inter_reference(x, w_qkv, w_proj, b_proj, num_heads):
    """Pure-JAX mirror of the PyTorch Attention_inter.forward (eval mode)."""
    B, N, C = x.shape
    hd = C // num_heads
    scale = hd ** (-0.5)
    half = N // 2

    def split_qkv(f):
        qkv = (f @ w_qkv).reshape(B, half, 3, num_heads, hd).transpose(2, 0, 3, 1, 4)
        return qkv[0], qkv[1], qkv[2]

    q1, k1, v1 = split_qkv(x[:, :half, :])
    q2, k2, v2 = split_qkv(x[:, half:, :])

    def attend(q, k, v):
        a = jax.nn.softmax(jnp.einsum('bhqd,bhkd->bhqk', q, k) * scale, axis=-1)
        o = jnp.einsum('bhqk,bhkd->bhqd', a, v)
        return o.transpose(0, 2, 1, 3).reshape(B, half, C) @ w_proj + b_proj

    return jnp.concatenate([attend(q1, k2, v2), attend(q2, k1, v1)], axis=1)


if __name__ == "__main__":
    # Small shapes consistent with the module: batch=2, tokens=16 (two halves
    # of 8), dim=64, heads=8 -> head_dim=8.
    B, N, C, H = 2, 16, 64, 8

    key = jax.random.PRNGKey(0)
    kx, kq, kp, kb = jax.random.split(key, 4)
    x = jax.random.normal(kx, (B, N, C), dtype=jnp.float32)
    # Deterministic synthetic parameters, stored (in, out).
    w_qkv = 0.05 * jax.random.normal(kq, (C, 3 * C), dtype=jnp.float32)
    w_proj = 0.1 * jax.random.normal(kp, (C, C), dtype=jnp.float32)
    b_proj = 0.1 * jax.random.normal(kb, (C,), dtype=jnp.float32)

    # bf16 MXU operands (native on v5e/v6e/v7x); accumulation stays f32 in-kernel.
    x_bf = x.astype(jnp.bfloat16)
    wq_bf = w_qkv.astype(jnp.bfloat16)
    wp_bf = w_proj.astype(jnp.bfloat16)

    # One-time weight layout preparation (outside the per-call path).
    params = prepare_attention_inter_params(wq_bf, wp_bf, b_proj, H)

    out = attention_inter(x_bf, params)          # grid = (B,) = (2,) steps
    out = jax.block_until_ready(out)
    assert out.shape == (B, N, C)

    ref = attention_inter_reference(
        x_bf.astype(jnp.float32), wq_bf.astype(jnp.float32),
        wp_bf.astype(jnp.float32), b_proj, H)
    err = float(jnp.max(jnp.abs(out.astype(jnp.float32) - ref)))
    assert jnp.allclose(out.astype(jnp.float32), ref, atol=3e-2, rtol=3e-2), err

    print("KERNEL_OK")
</pallas_src>

<mosaic_0001>
module attributes {stable_mosaic.version = 11 : i64} {
  func.func @_attention_inter_kernel(%arg0: i32, %arg1: memref<16x64xbf16, #tpu.memory_space<vmem>>, %arg2: memref<16x16xf32, #tpu.memory_space<vmem>>, %arg3: memref<8x64x8xbf16, #tpu.memory_space<vmem>>, %arg4: memref<8x64x8xbf16, #tpu.memory_space<vmem>>, %arg5: memref<8x64x8xbf16, #tpu.memory_space<vmem>>, %arg6: memref<64x64xbf16, #tpu.memory_space<vmem>>, %arg7: memref<1x64xf32, #tpu.memory_space<vmem>>, %arg8: memref<16x64xbf16, #tpu.memory_space<vmem>>, %arg9: memref<16x64xbf16, #tpu.memory_space<vmem>>) attributes {dimension_semantics = [#tpu.dimension_semantics<parallel>], iteration_bounds = array<i64: 2>, scalar_prefetch = 0 : i64, scratch_operands = 1 : i64, tpu.core_type = #tpu.core_type<tc>, window_params = [{transform_indices = @transform_0, window_bounds = array<i64: 16, 64>}, {pipeline_mode = #tpu.pipeline_mode<synchronous>, transform_indices = @transform_1, window_bounds = array<i64: 16, 16>}, {pipeline_mode = #tpu.pipeline_mode<synchronous>, transform_indices = @transform_2, window_bounds = array<i64: 8, 64, 8>}, {pipeline_mode = #tpu.pipeline_mode<synchronous>, transform_indices = @transform_3, window_bounds = array<i64: 8, 64, 8>}, {pipeline_mode = #tpu.pipeline_mode<synchronous>, transform_indices = @transform_4, window_bounds = array<i64: 8, 64, 8>}, {pipeline_mode = #tpu.pipeline_mode<synchronous>, transform_indices = @transform_5, window_bounds = array<i64: 64, 64>}, {pipeline_mode = #tpu.pipeline_mode<synchronous>, transform_indices = @transform_6, window_bounds = array<i64: 1, 64>}, {transform_indices = @transform_7, window_bounds = array<i64: 16, 64>}]} {
    %c0 = arith.constant 0 : index
    %c0_0 = arith.constant 0 : index
    %0 = vector.load %arg1[%c0, %c0_0] : memref<16x64xbf16, #tpu.memory_space<vmem>>, vector<16x64xbf16>
    %1 = vector.shape_cast %0 : vector<16x64xbf16> to vector<1x16x64xbf16>
    %2 = vector.broadcast %1 : vector<1x16x64xbf16> to vector<8x16x64xbf16>
    %c0_1 = arith.constant 0 : index
    %c0_2 = arith.constant 0 : index
    %c0_3 = arith.constant 0 : index
    %3 = vector.load %arg3[%c0_1, %c0_2, %c0_3] : memref<8x64x8xbf16, #tpu.memory_space<vmem>>, vector<8x64x8xbf16>
    "tpu.trace_start"() <{level = 10 : i32, message = "htc,hcd->htd"}> : () -> ()
    %cst = arith.constant dense<0.000000e+00> : vector<8x16x8xf32>
    %4 = tpu.matmul %2, %3, %cst {dimension_numbers = #tpu.dot_dimension_numbers<[2], [1], [1], [2], [0, 0, 0, 1, 1, 2], [0], [0]>} : vector<8x16x64xbf16>, vector<8x64x8xbf16>, vector<8x16x8xf32> -> vector<8x16x8xf32>
    "tpu.trace_stop"() : () -> ()
    %cst_4 = arith.constant 0.353553385 : f32
    %5 = vector.broadcast %cst_4 : f32 to vector<8x16x8xf32>
    %6 = arith.mulf %4, %5 : vector<8x16x8xf32>
    %7 = arith.truncf %6 : vector<8x16x8xf32> to vector<8x16x8xbf16>
    %c0_5 = arith.constant 0 : index
    %c0_6 = arith.constant 0 : index
    %c0_7 = arith.constant 0 : index
    %8 = vector.load %arg4[%c0_5, %c0_6, %c0_7] : memref<8x64x8xbf16, #tpu.memory_space<vmem>>, vector<8x64x8xbf16>
    "tpu.trace_start"() <{level = 10 : i32, message = "htc,hcd->htd"}> : () -> ()
    %cst_8 = arith.constant dense<0.000000e+00> : vector<8x16x8xf32>
    %9 = tpu.matmul %2, %8, %cst_8 {dimension_numbers = #tpu.dot_dimension_numbers<[2], [1], [1], [2], [0, 0, 0, 1, 1, 2], [0], [0]>} : vector<8x16x64xbf16>, vector<8x64x8xbf16>, vector<8x16x8xf32> -> vector<8x16x8xf32>
    "tpu.trace_stop"() : () -> ()
    %10 = arith.truncf %9 : vector<8x16x8xf32> to vector<8x16x8xbf16>
    %c0_9 = arith.constant 0 : index
    %c0_10 = arith.constant 0 : index
    %c0_11 = arith.constant 0 : index
    %11 = vector.load %arg5[%c0_9, %c0_10, %c0_11] : memref<8x64x8xbf16, #tpu.memory_space<vmem>>, vector<8x64x8xbf16>
    "tpu.trace_start"() <{level = 10 : i32, message = "htc,hcd->htd"}> : () -> ()
    %cst_12 = arith.constant dense<0.000000e+00> : vector<8x16x8xf32>
    %12 = tpu.matmul %2, %11, %cst_12 {dimension_numbers = #tpu.dot_dimension_numbers<[2], [1], [1], [2], [0, 0, 0, 1, 1, 2], [0], [0]>} : vector<8x16x64xbf16>, vector<8x64x8xbf16>, vector<8x16x8xf32> -> vector<8x16x8xf32>
    "tpu.trace_stop"() : () -> ()
    %13 = arith.truncf %12 : vector<8x16x8xf32> to vector<8x16x8xbf16>
    "tpu.trace_start"() <{level = 10 : i32, message = "hqd,hkd->hqk"}> : () -> ()
    %cst_13 = arith.constant dense<0.000000e+00> : vector<8x16x16xf32>
    %14 = tpu.matmul %7, %10, %cst_13 {dimension_numbers = #tpu.dot_dimension_numbers<[2], [2], [1], [1], [0, 0, 0, 1, 1, 1], [0], [0]>} : vector<8x16x8xbf16>, vector<8x16x8xbf16>, vector<8x16x16xf32> -> vector<8x16x16xf32>
    "tpu.trace_stop"() : () -> ()
    %c0_14 = arith.constant 0 : index
    %c0_15 = arith.constant 0 : index
    %15 = vector.load %arg2[%c0_14, %c0_15] : memref<16x16xf32, #tpu.memory_space<vmem>>, vector<16x16xf32>
    %16 = vector.shape_cast %15 : vector<16x16xf32> to vector<1x16x16xf32>
    %17 = vector.broadcast %16 : vector<1x16x16xf32> to vector<8x16x16xf32>
    %18 = arith.addf %14, %17 : vector<8x16x16xf32>
    %cst_16 = arith.constant dense<0xFF800000> : vector<8x16xf32>
    %19 = vector.multi_reduction <maximumf>, %18, %cst_16 [2] : vector<8x16x16xf32> to vector<8x16xf32>
    %20 = vector.shape_cast %19 : vector<8x16xf32> to vector<8x16x1xf32>
    %21 = vector.broadcast %20 : vector<8x16x1xf32> to vector<8x16x16xf32>
    %22 = arith.subf %18, %21 : vector<8x16x16xf32>
    %23 = math.exp %22 : vector<8x16x16xf32>
    %cst_17 = arith.constant dense<0.000000e+00> : vector<8x16xf32>
    %24 = vector.multi_reduction <add>, %23, %cst_17 [2] : vector<8x16x16xf32> to vector<8x16xf32>
    %25 = vector.shape_cast %24 : vector<8x16xf32> to vector<8x16x1xf32>
    %26 = arith.truncf %23 : vector<8x16x16xf32> to vector<8x16x16xbf16>
    "tpu.trace_start"() <{level = 10 : i32, message = "hqk,hkd->hqd"}> : () -> ()
    %cst_18 = arith.constant dense<0.000000e+00> : vector<8x16x8xf32>
    %27 = tpu.matmul %26, %13, %cst_18 {dimension_numbers = #tpu.dot_dimension_numbers<[2], [1], [1], [2], [0, 0, 0, 1, 1, 2], [0], [0]>} : vector<8x16x16xbf16>, vector<8x16x8xbf16>, vector<8x16x8xf32> -> vector<8x16x8xf32>
    "tpu.trace_stop"() : () -> ()
    %28 = tpu.reciprocal %25 {approx = true} : vector<8x16x1xf32> -> vector<8x16x1xf32>
    %29 = vector.broadcast %28 : vector<8x16x1xf32> to vector<8x16x8xf32>
    %30 = arith.mulf %27, %29 : vector<8x16x8xf32>
    %31 = arith.truncf %30 : vector<8x16x8xf32> to vector<8x16x8xbf16>
    %32 = vector.extract_strided_slice %31 {offsets = [0, 0, 0], sizes = [1, 16, 8], strides = [1, 1, 1]} : vector<8x16x8xbf16> to vector<1x16x8xbf16>
    %33 = vector.shape_cast %32 : vector<1x16x8xbf16> to vector<16x8xbf16>
    %c0_19 = arith.constant 0 : index
    %c0_20 = arith.constant 0 : index
    %34 = vector.load %arg9[%c0_19, %c0_20] : memref<16x64xbf16, #tpu.memory_space<vmem>>, vector<16x8xbf16>
    tpu.vector_store %arg9[%c0_19, %c0_20], %33 {strides = array<i32>} : memref<16x64xbf16, #tpu.memory_space<vmem>>, vector<16x8xbf16>,
    %35 = vector.extract_strided_slice %31 {offsets = [1, 0, 0], sizes = [1, 16, 8], strides = [1, 1, 1]} : vector<8x16x8xbf16> to vector<1x16x8xbf16>
    %36 = vector.shape_cast %35 : vector<1x16x8xbf16> to vector<16x8xbf16>
    %c0_21 = arith.constant 0 : index
    %c8 = arith.constant 8 : index
    %37 = vector.load %arg9[%c0_21, %c8] : memref<16x64xbf16, #tpu.memory_space<vmem>>, vector<16x8xbf16>
    tpu.vector_store %arg9[%c0_21, %c8], %36 {strides = array<i32>} : memref<16x64xbf16, #tpu.memory_space<vmem>>, vector<16x8xbf16>,
    %38 = vector.extract_strided_slice %31 {offsets = [2, 0, 0], sizes = [1, 16, 8], strides = [1, 1, 1]} : vector<8x16x8xbf16> to vector<1x16x8xbf16>
    %39 = vector.shape_cast %38 : vector<1x16x8xbf16> to vector<16x8xbf16>
    %c0_22 = arith.constant 0 : index
    %c16 = arith.constant 16 : index
    %40 = vector.load %arg9[%c0_22, %c16] : memref<16x64xbf16, #tpu.memory_space<vmem>>, vector<16x8xbf16>
    tpu.vector_store %arg9[%c0_22, %c16], %39 {strides = array<i32>} : memref<16x64xbf16, #tpu.memory_space<vmem>>, vector<16x8xbf16>,
    %41 = vector.extract_strided_slice %31 {offsets = [3, 0, 0], sizes = [1, 16, 8], strides = [1, 1, 1]} : vector<8x16x8xbf16> to vector<1x16x8xbf16>
    %42 = vector.shape_cast %41 : vector<1x16x8xbf16> to vector<16x8xbf16>
    %c0_23 = arith.constant 0 : index
    %c24 = arith.constant 24 : index
    %43 = vector.load %arg9[%c0_23, %c24] : memref<16x64xbf16, #tpu.memory_space<vmem>>, vector<16x8xbf16>
    tpu.vector_store %arg9[%c0_23, %c24], %42 {strides = array<i32>} : memref<16x64xbf16, #tpu.memory_space<vmem>>, vector<16x8xbf16>,
    %44 = vector.extract_strided_slice %31 {offsets = [4, 0, 0], sizes = [1, 16, 8], strides = [1, 1, 1]} : vector<8x16x8xbf16> to vector<1x16x8xbf16>
    %45 = vector.shape_cast %44 : vector<1x16x8xbf16> to vector<16x8xbf16>
    %c0_24 = arith.constant 0 : index
    %c32 = arith.constant 32 : index
    %46 = vector.load %arg9[%c0_24, %c32] : memref<16x64xbf16, #tpu.memory_space<vmem>>, vector<16x8xbf16>
    tpu.vector_store %arg9[%c0_24, %c32], %45 {strides = array<i32>} : memref<16x64xbf16, #tpu.memory_space<vmem>>, vector<16x8xbf16>,
    %47 = vector.extract_strided_slice %31 {offsets = [5, 0, 0], sizes = [1, 16, 8], strides = [1, 1, 1]} : vector<8x16x8xbf16> to vector<1x16x8xbf16>
    %48 = vector.shape_cast %47 : vector<1x16x8xbf16> to vector<16x8xbf16>
    %c0_25 = arith.constant 0 : index
    %c40 = arith.constant 40 : index
    %49 = vector.load %arg9[%c0_25, %c40] : memref<16x64xbf16, #tpu.memory_space<vmem>>, vector<16x8xbf16>
    tpu.vector_store %arg9[%c0_25, %c40], %48 {strides = array<i32>} : memref<16x64xbf16, #tpu.memory_space<vmem>>, vector<16x8xbf16>,
    %50 = vector.extract_strided_slice %31 {offsets = [6, 0, 0], sizes = [1, 16, 8], strides = [1, 1, 1]} : vector<8x16x8xbf16> to vector<1x16x8xbf16>
    %51 = vector.shape_cast %50 : vector<1x16x8xbf16> to vector<16x8xbf16>
    %c0_26 = arith.constant 0 : index
    %c48 = arith.constant 48 : index
    %52 = vector.load %arg9[%c0_26, %c48] : memref<16x64xbf16, #tpu.memory_space<vmem>>, vector<16x8xbf16>
    tpu.vector_store %arg9[%c0_26, %c48], %51 {strides = array<i32>} : memref<16x64xbf16, #tpu.memory_space<vmem>>, vector<16x8xbf16>,
    %53 = vector.extract_strided_slice %31 {offsets = [7, 0, 0], sizes = [1, 16, 8], strides = [1, 1, 1]} : vector<8x16x8xbf16> to vector<1x16x8xbf16>
    %54 = vector.shape_cast %53 : vector<1x16x8xbf16> to vector<16x8xbf16>
    %c0_27 = arith.constant 0 : index
    %c56 = arith.constant 56 : index
    %55 = vector.load %arg9[%c0_27, %c56] : memref<16x64xbf16, #tpu.memory_space<vmem>>, vector<16x8xbf16>
    tpu.vector_store %arg9[%c0_27, %c56], %54 {strides = array<i32>} : memref<16x64xbf16, #tpu.memory_space<vmem>>, vector<16x8xbf16>,
    %c0_28 = arith.constant 0 : index
    %c0_29 = arith.constant 0 : index
    %56 = vector.load %arg9[%c0_28, %c0_29] : memref<16x64xbf16, #tpu.memory_space<vmem>>, vector<16x64xbf16>
    %c0_30 = arith.constant 0 : index
    %c0_31 = arith.constant 0 : index
    %57 = vector.load %arg6[%c0_30, %c0_31] : memref<64x64xbf16, #tpu.memory_space<vmem>>, vector<64x64xbf16>
    %cst_32 = arith.constant dense<0.000000e+00> : vector<16x64xf32>
    %58 = tpu.matmul %56, %57, %cst_32 {dimension_numbers = #tpu.dot_dimension_numbers<[1], [0], [0], [1], [0, 0, 1, 1], [], []>} : vector<16x64xbf16>, vector<64x64xbf16>, vector<16x64xf32> -> vector<16x64xf32>
    %c0_33 = arith.constant 0 : index
    %c0_34 = arith.constant 0 : index
    %59 = vector.load %arg7[%c0_33, %c0_34] : memref<1x64xf32, #tpu.memory_space<vmem>>, vector<1x64xf32>
    %60 = vector.broadcast %59 : vector<1x64xf32> to vector<16x64xf32>
    %61 = arith.addf %58, %60 : vector<16x64xf32>
    %62 = arith.truncf %61 : vector<16x64xf32> to vector<16x64xbf16>
    %c0_35 = arith.constant 0 : index
    %c0_36 = arith.constant 0 : index
    %63 = vector.load %arg8[%c0_35, %c0_36] : memref<16x64xbf16, #tpu.memory_space<vmem>>, vector<16x64xbf16>
    tpu.vector_store %arg8[%c0_35, %c0_36], %62 {strides = array<i32>} : memref<16x64xbf16, #tpu.memory_space<vmem>>, vector<16x64xbf16>,
    return
  }
  func.func @transform_0(%arg0: i32) -> (i32, i32) {
    %c0_i32 = arith.constant 0 : i32
    %c0_i32_0 = arith.constant 0 : i32
    return %arg0, %c0_i32 : i32, i32
  }
  func.func @transform_1(%arg0: i32) -> (i32, i32) {
    %c0_i32 = arith.constant 0 : i32
    %c0_i32_0 = arith.constant 0 : i32
    %c0_i32_1 = arith.constant 0 : i32
    return %c0_i32, %c0_i32_0 : i32, i32
  }
  func.func @transform_2(%arg0: i32) -> (i32, i32, i32) {
    %c0_i32 = arith.constant 0 : i32
    %c0_i32_0 = arith.constant 0 : i32
    %c0_i32_1 = arith.constant 0 : i32
    %c0_i32_2 = arith.constant 0 : i32
    return %c0_i32, %c0_i32_0, %c0_i32_1 : i32, i32, i32
  }
  func.func @transform_3(%arg0: i32) -> (i32, i32, i32) {
    %c0_i32 = arith.constant 0 : i32
    %c0_i32_0 = arith.constant 0 : i32
    %c0_i32_1 = arith.constant 0 : i32
    %c0_i32_2 = arith.constant 0 : i32
    return %c0_i32, %c0_i32_0, %c0_i32_1 : i32, i32, i32
  }
  func.func @transform_4(%arg0: i32) -> (i32, i32, i32) {
    %c0_i32 = arith.constant 0 : i32
    %c0_i32_0 = arith.constant 0 : i32
    %c0_i32_1 = arith.constant 0 : i32
    %c0_i32_2 = arith.constant 0 : i32
    return %c0_i32, %c0_i32_0, %c0_i32_1 : i32, i32, i32
  }
  func.func @transform_5(%arg0: i32) -> (i32, i32) {
    %c0_i32 = arith.constant 0 : i32
    %c0_i32_0 = arith.constant 0 : i32
    %c0_i32_1 = arith.constant 0 : i32
    return %c0_i32, %c0_i32_0 : i32, i32
  }
  func.func @transform_6(%arg0: i32) -> (i32, i32) {
    %c0_i32 = arith.constant 0 : i32
    %c0_i32_0 = arith.constant 0 : i32
    %c0_i32_1 = arith.constant 0 : i32
    return %c0_i32, %c0_i32_0 : i32, i32
  }
  func.func @transform_7(%arg0: i32) -> (i32, i32) {
    %c0_i32 = arith.constant 0 : i32
    %c0_i32_0 = arith.constant 0 : i32
    return %arg0, %c0_i32 : i32, i32
  }
}

</mosaic_0001>

<llo_original>
// kernel: tpu_custom_call.1
$region0: #{tpu_custom_call.1}
  #allocation0 [shape = 'u32[]', space=smem, size = 0x4, offset = 0x4, fixed_abs, tag = 'smem constant byte address 0x4 - core index']
  #allocation1 [shape = 'u32[144,128]{1,0:T(1,128)}', space=vmem, size = 0x12000, scoped, tag = 'internal scratch']
  #allocation2 [shape = 'bf16[16,64]{1,0:T(8,128)(2,1)}', space=vmem, size = 0x1000, scoped, tag = 'scratch operand']
  %s0 = inlined_call_operand.vmem [shape: bf16[32,64], index: 0, kind: input, shape index: {}]
  %s1 = inlined_call_operand.vmem [shape: f32[16,16], index: 1, kind: input, shape index: {}]
  %s2 = inlined_call_operand.vmem [shape: bf16[8,64,8], index: 2, kind: input, shape index: {}]
  %s3 = inlined_call_operand.vmem [shape: bf16[8,64,8], index: 3, kind: input, shape index: {}]
  %s4 = inlined_call_operand.vmem [shape: bf16[8,64,8], index: 4, kind: input, shape index: {}]
  %s5 = inlined_call_operand.vmem [shape: bf16[64,64], index: 5, kind: input, shape index: {}]
  %s6 = inlined_call_operand.vmem [shape: f32[1,64], index: 6, kind: input, shape index: {}]
  %s7 = inlined_call_operand.hbm [shape: bf16[32,64], index: 7, kind: output, shape index: {}]
  %s8 = sld [smem:[#allocation0]]
  $region61: #{tpu_custom_call.1} parent=0
    _
  %s10 = ssub.s32 1, %s8
  %s11 = scalar_select 0, %s10, %s8
  $region1: #{tpu_custom_call.1} parent=0
    #allocation3 [shape = 'u8[8192]{0}', space=vmem, size = 0x2000, scoped, tag = 'output window, operand 0']
    #allocation4 [shape = 's32[2]{0}', space=sflag, size = 0x8, scoped, tag = 'scoped memory for tpu_custom_call.1']
    %12 = vsyncpa [#allocation4], 0
    %s13 = scalar_lea.sflag [#allocation4], 1
    %14 = vsyncpa %s13, 0
    loop: start=0, step=1, limit=4
    $region2: #{tpu_custom_call.1} parent=1 // loop_pre_header
      _
    $region3: #{tpu_custom_call.1} parent=1 // loop_header
      %s16 = sphi 0, %s20
      %p17 = scmp.ge.s32.totalorder %s16, 4
      %s26 = sphi 0, %s28
      %s29 = sphi 0, %s26
      %s30 = sphi 0, %s29
      %s46 = sphi 0, %s30
      %s50 = sphi 0, %s50
      %s52 = sphi 0, %s50
      %s53 = sphi 0, %s52
      %s67 = sphi 0, %s53
      %s71 = sphi 0, %s71
      %s73 = sphi 0, %s71
      %s74 = sphi 0, %s73
      %s88 = sphi 0, %s74
      %s92 = sphi 0, %s92
      %s94 = sphi 0, %s92
      %s95 = sphi 0, %s94
      %s109 = sphi 0, %s95
      %s113 = sphi 0, %s113
      %s115 = sphi 0, %s113
      %s116 = sphi 0, %s115
      %s130 = sphi 0, %s116
      %s134 = sphi 0, %s134
      %s136 = sphi 0, %s134
      %s137 = sphi 0, %s136
      %s151 = sphi 0, %s137
      %s155 = sphi 0, %s155
      %s157 = sphi 0, %s155
      %s158 = sphi 0, %s157
      %s172 = sphi 0, %s158
      %s178 = sphi 0, %s180
      %s181 = sphi 0, %s178
      %s182 = sphi 0, %s181
      %s198 = sphi 0, %s182
    $region4: #{tpu_custom_call.1} parent=1 // loop_header_branch
      %19 = sbr.rel (%p17) target = $region8
    $region5: #{tpu_custom_call.1} parent=1 // loop_body
      %s21 = ssub.s32 %s16, 1
      %s22 = ssub.s32 %s16, 2
      %s23 = sadd.s32 %s16, 1
      %s24 = ssub.s32 %s16, %s23
      %p25 = scmp.eq.s32.totalorder %s24, 0
      %s27 = sadd.s32 %s26, 1
      %s28 = scalar_select %p25, %s26, %s27
      %p31 = pneg %p25
      %p32 = scmp.eq.s32.totalorder %s16, 1
      %p33 = por %p31, %p32
      %p34 = scmp.ne.s32.totalorder %s26, %s29
      %p35 = scmp.eq.s32.totalorder %s16, 0
      %p36 = por %p34, %p35
      %p37 = scmp.ne.s32.totalorder %s26, %s29
      %p38 = scmp.eq.s32.totalorder %s21, 1
      %p39 = por %p37, %p38
      %p40 = scmp.ne.s32.totalorder %s29, %s30
      %p41 = scmp.eq.s32.totalorder %s21, 0
      %p42 = por %p40, %p41
      %p43 = scmp.ne.s32.totalorder %s29, %s30
      %p44 = scmp.eq.s32.totalorder %s22, 1
      %p45 = por %p43, %p44
      %p47 = scmp.ne.s32.totalorder %s30, %s46
      %p48 = scmp.eq.s32.totalorder %s22, 0
      %p49 = por %p47, %p48
      %s51 = sadd.s32 %s50, 1
      %p54 = scmp.eq.s32.totalorder %s16, 1
      %p55 = scmp.ne.s32.totalorder %s50, %s52
      %p56 = scmp.eq.s32.totalorder %s16, 0
      %p57 = por %p55, %p56
      %p58 = scmp.ne.s32.totalorder %s50, %s52
      %p59 = scmp.eq.s32.totalorder %s21, 1
      %p60 = por %p58, %p59
      %p61 = scmp.ne.s32.totalorder %s52, %s53
      %p62 = scmp.eq.s32.totalorder %s21, 0
      %p63 = por %p61, %p62
      %p64 = scmp.ne.s32.totalorder %s52, %s53
      %p65 = scmp.eq.s32.totalorder %s22, 1
      %p66 = por %p64, %p65
      %p68 = scmp.ne.s32.totalorder %s53, %s67
      %p69 = scmp.eq.s32.totalorder %s22, 0
      %p70 = por %p68, %p69
      %s72 = sadd.s32 %s71, 1
      %p75 = scmp.eq.s32.totalorder %s16, 1
      %p76 = scmp.ne.s32.totalorder %s71, %s73
      %p77 = scmp.eq.s32.totalorder %s16, 0
      %p78 = por %p76, %p77
      %p79 = scmp.ne.s32.totalorder %s71, %s73
      %p80 = scmp.eq.s32.totalorder %s21, 1
      %p81 = por %p79, %p80
      %p82 = scmp.ne.s32.totalorder %s73, %s74
      %p83 = scmp.eq.s32.totalorder %s21, 0
      %p84 = por %p82, %p83
      %p85 = scmp.ne.s32.totalorder %s73, %s74
      %p86 = scmp.eq.s32.totalorder %s22, 1
      %p87 = por %p85, %p86
      %p89 = scmp.ne.s32.totalorder %s74, %s88
      %p90 = scmp.eq.s32.totalorder %s22, 0
      %p91 = por %p89, %p90
      %s93 = sadd.s32 %s92, 1
      %p96 = scmp.eq.s32.totalorder %s16, 1
      %p97 = scmp.ne.s32.totalorder %s92, %s94
      %p98 = scmp.eq.s32.totalorder %s16, 0
      %p99 = por %p97, %p98
      %p100 = scmp.ne.s32.totalorder %s92, %s94
      %p101 = scmp.eq.s32.totalorder %s21, 1
      %p102 = por %p100, %p101
      %p103 = scmp.ne.s32.totalorder %s94, %s95
      %p104 = scmp.eq.s32.totalorder %s21, 0
      %p105 = por %p103, %p104
      %p106 = scmp.ne.s32.totalorder %s94, %s95
      %p107 = scmp.eq.s32.totalorder %s22, 1
      %p108 = por %p106, %p107
      %p110 = scmp.ne.s32.totalorder %s95, %s109
      %p111 = scmp.eq.s32.totalorder %s22, 0
      %p112 = por %p110, %p111
      %s114 = sadd.s32 %s113, 1
      %p117 = scmp.eq.s32.totalorder %s16, 1
      %p118 = scmp.ne.s32.totalorder %s113, %s115
      %p119 = scmp.eq.s32.totalorder %s16, 0
      %p120 = por %p118, %p119
      %p121 = scmp.ne.s32.totalorder %s113, %s115
      %p122 = scmp.eq.s32.totalorder %s21, 1
      %p123 = por %p121, %p122
      %p124 = scmp.ne.s32.totalorder %s115, %s116
      %p125 = scmp.eq.s32.totalorder %s21, 0
      %p126 = por %p124, %p125
      %p127 = scmp.ne.s32.totalorder %s115, %s116
      %p128 = scmp.eq.s32.totalorder %s22, 1
      %p129 = por %p127, %p128
      %p131 = scmp.ne.s32.totalorder %s116, %s130
      %p132 = scmp.eq.s32.totalorder %s22, 0
      %p133 = por %p131, %p132
      %s135 = sadd.s32 %s134, 1
      %p138 = scmp.eq.s32.totalorder %s16, 1
      %p139 = scmp.ne.s32.totalorder %s134, %s136
      %p140 = scmp.eq.s32.totalorder %s16, 0
      %p141 = por %p139, %p140
      %p142 = scmp.ne.s32.totalorder %s134, %s136
      %p143 = scmp.eq.s32.totalorder %s21, 1
      %p144 = por %p142, %p143
      %p145 = scmp.ne.s32.totalorder %s136, %s137
      %p146 = scmp.eq.s32.totalorder %s21, 0
      %p147 = por %p145, %p146
      %p148 = scmp.ne.s32.totalorder %s136, %s137
      %p149 = scmp.eq.s32.totalorder %s22, 1
      %p150 = por %p148, %p149
      %p152 = scmp.ne.s32.totalorder %s137, %s151
      %p153 = scmp.eq.s32.totalorder %s22, 0
      %p154 = por %p152, %p153
      %s156 = sadd.s32 %s155, 1
      %p159 = scmp.eq.s32.totalorder %s16, 1
      %p160 = scmp.ne.s32.totalorder %s155, %s157
      %p161 = scmp.eq.s32.totalorder %s16, 0
      %p162 = por %p160, %p161
      %p163 = scmp.ne.s32.totalorder %s155, %s157
      %p164 = scmp.eq.s32.totalorder %s21, 1
      %p165 = por %p163, %p164
      %p166 = scmp.ne.s32.totalorder %s157, %s158
      %p167 = scmp.eq.s32.totalorder %s21, 0
      %p168 = por %p166, %p167
      %p169 = scmp.ne.s32.totalorder %s157, %s158
      %p170 = scmp.eq.s32.totalorder %s22, 1
      %p171 = por %p169, %p170
      %p173 = scmp.ne.s32.totalorder %s158, %s172
      %p174 = scmp.eq.s32.totalorder %s22, 0
      %p175 = por %p173, %p174
      %s176 = ssub.s32 %s16, %s23
      %p177 = scmp.eq.s32.totalorder %s176, 0
      %s179 = sadd.s32 %s178, 1
      %s180 = scalar_select %p177, %s178, %s179
      %p183 = pneg %p177
      %p184 = scmp.eq.s32.totalorder %s16, 1
      %p185 = por %p183, %p184
      %p186 = scmp.ne.s32.totalorder %s178, %s181
      %p187 = scmp.eq.s32.totalorder %s16, 0
      %p188 = por %p186, %p187
      %p189 = scmp.ne.s32.totalorder %s178, %s181
      %p190 = scmp.eq.s32.totalorder %s21, 1
      %p191 = por %p189, %p190
      %p192 = scmp.ne.s32.totalorder %s181, %s182
      %p193 = scmp.eq.s32.totalorder %s21, 0
      %p194 = por %p192, %p193
      %p195 = scmp.ne.s32.totalorder %s181, %s182
      %p196 = scmp.eq.s32.totalorder %s22, 1
      %p197 = por %p195, %p196
      %p199 = scmp.ne.s32.totalorder %s182, %s198
      %p200 = scmp.eq.s32.totalorder %s22, 0
      %p201 = por %p199, %p200
      %p202 = scmp.le.s32.totalorder 1, %s16
      %p203 = scmp.lt.s32.totalorder %s16, 3
      %p204 = pnand %p202, %p203
      %p205 = pneg %p204
      // Predicated region
      $region9: #{tpu_custom_call.1} parent=5 // pred_check
        _
      $region10: #{tpu_custom_call.1} parent=5 // pred_check_branch
        %207 = sbr.rel (%p204) target = $region12
      $region11: #{tpu_custom_call.1} parent=5 // pred_region
        %s208 = ssub.s32 %s16, 1
        // Predicated region
        $region13: #{tpu_custom_call.1} parent=11 // pred_check
          %p209 = pneg %p63
        $region14: #{tpu_custom_call.1} parent=11 // pred_check_branch
          %211 = sbr.rel (%p209) target = $region16
        $region15: #{tpu_custom_call.1} parent=11 // pred_region
          _
        $region16: #{tpu_custom_call.1} parent=11 // pred_fallthru
          _
        // Predicated region
        $region17: #{tpu_custom_call.1} parent=11 // pred_check
          %p212 = pneg %p84
        $region18: #{tpu_custom_call.1} parent=11 // pred_check_branch
          %214 = sbr.rel (%p212) target = $region20
        $region19: #{tpu_custom_call.1} parent=11 // pred_region
          _
        $region20: #{tpu_custom_call.1} parent=11 // pred_fallthru
          _
        // Predicated region
        $region21: #{tpu_custom_call.1} parent=11 // pred_check
          %p215 = pneg %p105
        $region22: #{tpu_custom_call.1} parent=11 // pred_check_branch
          %217 = sbr.rel (%p215) target = $region24
        $region23: #{tpu_custom_call.1} parent=11 // pred_region
          _
        $region24: #{tpu_custom_call.1} parent=11 // pred_fallthru
          _
        // Predicated region
        $region25: #{tpu_custom_call.1} parent=11 // pred_check
          %p218 = pneg %p126
        $region26: #{tpu_custom_call.1} parent=11 // pred_check_branch
          %220 = sbr.rel (%p218) target = $region28
        $region27: #{tpu_custom_call.1} parent=11 // pred_region
          _
        $region28: #{tpu_custom_call.1} parent=11 // pred_fallthru
          _
        // Predicated region
        $region29: #{tpu_custom_call.1} parent=11 // pred_check
          %p221 = pneg %p147
        $region30: #{tpu_custom_call.1} parent=11 // pred_check_branch
          %223 = sbr.rel (%p221) target = $region32
        $region31: #{tpu_custom_call.1} parent=11 // pred_region
          _
        $region32: #{tpu_custom_call.1} parent=11 // pred_fallthru
          _
        // Predicated region
        $region33: #{tpu_custom_call.1} parent=11 // pred_check
          %p224 = pneg %p168
        $region34: #{tpu_custom_call.1} parent=11 // pred_check_branch
          %226 = sbr.rel (%p224) target = $region36
        $region35: #{tpu_custom_call.1} parent=11 // pred_region
          _
        $region36: #{tpu_custom_call.1} parent=11 // pred_fallthru
          _
      $region12: #{tpu_custom_call.1} parent=5 // pred_fallthru
        _
      %p227 = scmp.lt.s32.totalorder %s16, 2
      // Predicated region
      $region37: #{tpu_custom_call.1} parent=5 // pred_check
        %p228 = pneg %p227
      $region38: #{tpu_custom_call.1} parent=5 // pred_check_branch
        %230 = sbr.rel (%p228) target = $region40
      $region39: #{tpu_custom_call.1} parent=5 // pred_region
        // Predicated region
        $region41: #{tpu_custom_call.1} parent=39 // pred_check
          %p231 = pneg %p36
        $region42: #{tpu_custom_call.1} parent=39 // pred_check_branch
          %233 = sbr.rel (%p231) target = $region44
        $region43: #{tpu_custom_call.1} parent=39 // pred_region
          %s234 = smul.u32 2, %s16
          %p235 = scmp.lt.s32.totalorder %s234, 3
          %s236 = scalar_select %p235, %s234, 3
          %s237 = smul.addr %s236, 4
          %s238 = scalar_lea.vmem %s0, %s237
          %s239 = smul.u32 2, %s16
        $region44: #{tpu_custom_call.1} parent=39 // pred_fallthru
          _
      $region40: #{tpu_custom_call.1} parent=5 // pred_fallthru
        _
      %p240 = scmp.le.s32.totalorder 1, %s16
      %p241 = scmp.lt.s32.totalorder %s16, 3
      %p242 = pnand %p240, %p241
      %p243 = pneg %p242
      // Predicated region
      $region45: #{tpu_custom_call.1} parent=5 // pred_check
        _
      $region46: #{tpu_custom_call.1} parent=5 // pred_check_branch
        %245 = sbr.rel (%p242) target = $region48
      $region47: #{tpu_custom_call.1} parent=5 // pred_region
        %s246 = ssub.s32 %s16, 1
        %s247 = smul.u32 2, %s21
        %p248 = scmp.lt.s32.totalorder %s247, 3
        %s249 = scalar_select %p248, %s247, 3
        %s250 = smul.addr %s249, 4
        %s251 = scalar_lea.vmem %s0, %s250
        %p252 = pneg %p42
        %p253 = pneg %p39
        %p254 = pneg %p63
        %p255 = pneg %p60
        %p256 = pneg %p84
        %p257 = pneg %p81
        %p258 = pneg %p105
        %p259 = pneg %p102
        %p260 = pneg %p126
        %p261 = pneg %p123
        %p262 = pneg %p147
        %p263 = pneg %p144
        %p264 = pneg %p168
        %p265 = pneg %p165
        %p266 = pneg %p194
        %p267 = pneg %p191
        %s268 = sand.u32 %s181, 1
        %s269 = scalar_lea.sflag [#allocation4], %s268
        %s270 = sand.u32 %s181, 1
        %s271 = smul.addr %s270, 8
        %s272 = scalar_lea.vmem [#allocation3], %s271
        %s273 = smul.u32 2, %s21
        %p274 = scmp.lt.s32.totalorder %s273, 3
        %s275 = scalar_select %p274, %s273, 3
        %s276 = smul.addr %s275, 4
        %s277 = scalar_lea.vmem %s0, %s276
        %s278 = smul.u32 2, %s21
        %s279 = smul.u32 2, %s21
        %v281 = vld [vmem:[%s277] sm:$0xf]
        %v282 = vld [vmem:[%s277 + $0x4] sm:$0xf]
        %v283 = vld [vmem:[%s2] sm:$0xf]
        %v284 = vld [vmem:[%s2 + $0x4] sm:$0xf]
        %v285 = vld [vmem:[%s2 + $0x8] sm:$0xf]
        %v286 = vld [vmem:[%s2 + $0xc] sm:$0xf]
        %v287 = vld [vmem:[%s2 + $0x10] sm:$0xf]
        %v288 = vld [vmem:[%s2 + $0x14] sm:$0xf]
        %v289 = vld [vmem:[%s2 + $0x18] sm:$0xf]
        %v290 = vld [vmem:[%s2 + $0x1c] sm:$0xf]
        %v291 = vld [vmem:[%s2 + $0x20] sm:$0xf]
        %v292 = vld [vmem:[%s2 + $0x24] sm:$0xf]
        %v293 = vld [vmem:[%s2 + $0x28] sm:$0xf]
        %v294 = vld [vmem:[%s2 + $0x2c] sm:$0xf]
        %v295 = vld [vmem:[%s2 + $0x30] sm:$0xf]
        %v296 = vld [vmem:[%s2 + $0x34] sm:$0xf]
        %v297 = vld [vmem:[%s2 + $0x38] sm:$0xf]
        %v298 = vld [vmem:[%s2 + $0x3c] sm:$0xf]
        %v299 = vld [vmem:[%s2 + $0x40] sm:$0xf]
        %v300 = vld [vmem:[%s2 + $0x44] sm:$0xf]
        %v301 = vld [vmem:[%s2 + $0x48] sm:$0xf]
        %v302 = vld [vmem:[%s2 + $0x4c] sm:$0xf]
        %v303 = vld [vmem:[%s2 + $0x50] sm:$0xf]
        %v304 = vld [vmem:[%s2 + $0x54] sm:$0xf]
        %v305 = vld [vmem:[%s2 + $0x58] sm:$0xf]
        %v306 = vld [vmem:[%s2 + $0x5c] sm:$0xf]
        %v307 = vld [vmem:[%s2 + $0x60] sm:$0xf]
        %v308 = vld [vmem:[%s2 + $0x64] sm:$0xf]
        %v309 = vld [vmem:[%s2 + $0x68] sm:$0xf]
        %v310 = vld [vmem:[%s2 + $0x6c] sm:$0xf]
        %v311 = vld [vmem:[%s2 + $0x70] sm:$0xf]
        %v312 = vld [vmem:[%s2 + $0x74] sm:$0xf]
        %v313 = vld [vmem:[%s2 + $0x78] sm:$0xf]
        %v314 = vld [vmem:[%s2 + $0x7c] sm:$0xf]
        %v315 = vld [vmem:[%s2 + $0x80] sm:$0xf]
        %v316 = vld [vmem:[%s2 + $0x84] sm:$0xf]
        %v317 = vld [vmem:[%s2 + $0x88] sm:$0xf]
        %v318 = vld [vmem:[%s2 + $0x8c] sm:$0xf]
        %v319 = vld [vmem:[%s2 + $0x90] sm:$0xf]
        %v320 = vld [vmem:[%s2 + $0x94] sm:$0xf]
        %v321 = vld [vmem:[%s2 + $0x98] sm:$0xf]
        %v322 = vld [vmem:[%s2 + $0x9c] sm:$0xf]
        %v323 = vld [vmem:[%s2 + $0xa0] sm:$0xf]
        %v324 = vld [vmem:[%s2 + $0xa4] sm:$0xf]
        %v325 = vld [vmem:[%s2 + $0xa8] sm:$0xf]
        %v326 = vld [vmem:[%s2 + $0xac] sm:$0xf]
        %v327 = vld [vmem:[%s2 + $0xb0] sm:$0xf]
        %v328 = vld [vmem:[%s2 + $0xb4] sm:$0xf]
        %v329 = vld [vmem:[%s2 + $0xb8] sm:$0xf]
        %v330 = vld [vmem:[%s2 + $0xbc] sm:$0xf]
        %v331 = vld [vmem:[%s2 + $0xc0] sm:$0xf]
        %v332 = vld [vmem:[%s2 + $0xc4] sm:$0xf]
        %v333 = vld [vmem:[%s2 + $0xc8] sm:$0xf]
        %v334 = vld [vmem:[%s2 + $0xcc] sm:$0xf]
        %v335 = vld [vmem:[%s2 + $0xd0] sm:$0xf]
        %v336 = vld [vmem:[%s2 + $0xd4] sm:$0xf]
        %v337 = vld [vmem:[%s2 + $0xd8] sm:$0xf]
        %v338 = vld [vmem:[%s2 + $0xdc] sm:$0xf]
        %v339 = vld [vmem:[%s2 + $0xe0] sm:$0xf]
        %v340 = vld [vmem:[%s2 + $0xe4] sm:$0xf]
        %v341 = vld [vmem:[%s2 + $0xe8] sm:$0xf]
        %v342 = vld [vmem:[%s2 + $0xec] sm:$0xf]
        %v343 = vld [vmem:[%s2 + $0xf0] sm:$0xf]
        %v344 = vld [vmem:[%s2 + $0xf4] sm:$0xf]
        %v345 = vld [vmem:[%s2 + $0xf8] sm:$0xf]
        %v346 = vld [vmem:[%s2 + $0xfc] sm:$0xf]
        %v349 = vunpack.c.l.b16 %v281
        %v350 = vunpack.c.l.b16 %v282
        %v351 = vpack.c.b16 %v350, %v349
        %v360 = vunpack.c.l.b16 %v283
        %v361 = vunpack.c.l.b16 %v284
        %v362 = vunpack.c.l.b16 %v285
        %v363 = vunpack.c.l.b16 %v286
        %v364 = vunpack.c.l.b16 %v287
        %v365 = vunpack.c.l.b16 %v288
        %v366 = vunpack.c.l.b16 %v289
        %v367 = vunpack.c.l.b16 %v290
        %v368 = vpack.c.b16 %v361, %v360
        %v369 = vpack.c.b16 %v363, %v362
        %v370 = vpack.c.b16 %v365, %v364
        %v371 = vpack.c.b16 %v367, %v366
        %vm376 = vcmask 523264
        %v378 = vsel %vm376, %v351, 0
        %380 = vmatprep.subr.bf16.mxu0 0
        %381 = vmatpush1.bf16.msra.mxu0 0
        %382 = vmatprep.subr.bf16.mxu0 0
        %383 = vmatpush1.bf16.msra.mxu0 0
        %384 = vmatprep.subr.bf16.mxu0 0
        %385 = vmatpush1.bf16.msra.mxu0 0
        %386 = vmatprep.subr.bf16.mxu0 0
        %387 = vmatpush1.bf16.msra.mxu0 0
        %388 = vmatprep.subr.bf16.mxu0 0
        %389 = vmatpush1.bf16.msra.mxu0 %v371
        %390 = vmatprep.subr.bf16.mxu0 0
        %391 = vmatpush1.bf16.msra.mxu0 %v370
        %392 = vmatprep.subr.bf16.mxu0 0
        %393 = vmatpush1.bf16.msra.mxu0 %v369
        %394 = vmatprep.subr.bf16.mxu0 0
        %395 = vmatpush1.bf16.msra.mxu0 %v368
        %396 = vmatprep.subr.bf16.mxu0 0
        %397 = vmatpush2.bf16.msra.mxu0 0
        %398 = vmatprep.subr.bf16.mxu0 0
        %399 = vmatpush2.bf16.msra.mxu0 0
        %400 = vmatprep.subr.bf16.mxu0 0
        %401 = vmatpush2.bf16.msra.mxu0 0
        %402 = vmatprep.subr.bf16.mxu0 0
        %403 = vmatpush2.bf16.msra.mxu0 0
        %404 = vmatprep.subr.bf16.mxu0 0
        %405 = vmatpush2.bf16.msra.mxu0 0
        %406 = vmatprep.subr.bf16.mxu0 0
        %407 = vmatpush2.bf16.msra.mxu0 0
        %408 = vmatprep.subr.bf16.mxu0 0
        %409 = vmatpush2.bf16.msra.mxu0 0
        %410 = vmatprep.subr.bf16.mxu0 0
        %411 = vmatpush2.bf16.msra.mxu0 0
        %412 = vmatprep.mubr.bf16.mxu0 0
        %413 = vmatmul.mubr.bf16.gmra.mxu0 %v378
        %v414 = vpop.f32.mrf.mxu0
        %v415 = vadd.f32 0.0, %v414
        %v416 = vpop.f32.mrf.mxu0
        %v417 = vpop.f32.mrf.mxu0
        %v418 = vadd.f32 0.0, %v417
        %v419 = vpop.f32.mrf.mxu0
        %420 = vdwg.mxu0
        %v429 = vunpack.c.l.b16 %v291
        %v430 = vunpack.c.l.b16 %v292
        %v431 = vunpack.c.l.b16 %v293
        %v432 = vunpack.c.l.b16 %v294
        %v433 = vunpack.c.l.b16 %v295
        %v434 = vunpack.c.l.b16 %v296
        %v435 = vunpack.c.l.b16 %v297
        %v436 = vunpack.c.l.b16 %v298
        %v437 = vpack.c.b16 %v430, %v429
        %v438 = vpack.c.b16 %v432, %v431
        %v439 = vpack.c.b16 %v434, %v433
        %v440 = vpack.c.b16 %v436, %v435
        %445 = vmatprep.subr.bf16.mxu0 0
        %446 = vmatpush1.bf16.msra.mxu0 0
        %447 = vmatprep.subr.bf16.mxu0 0
        %448 = vmatpush1.bf16.msra.mxu0 0
        %449 = vmatprep.subr.bf16.mxu0 0
        %450 = vmatpush1.bf16.msra.mxu0 0
        %451 = vmatprep.subr.bf16.mxu0 0
        %452 = vmatpush1.bf16.msra.mxu0 0
        %453 = vmatprep.subr.bf16.mxu0 0
        %454 = vmatpush1.bf16.msra.mxu0 %v440
        %455 = vmatprep.subr.bf16.mxu0 0
        %456 = vmatpush1.bf16.msra.mxu0 %v439
        %457 = vmatprep.subr.bf16.mxu0 0
        %458 = vmatpush1.bf16.msra.mxu0 %v438
        %459 = vmatprep.subr.bf16.mxu0 0
        %460 = vmatpush1.bf16.msra.mxu0 %v437
        %461 = vmatprep.subr.bf16.mxu0 0
        %462 = vmatpush2.bf16.msra.mxu0 0
        %463 = vmatprep.subr.bf16.mxu0 0
        %464 = vmatpush2.bf16.msra.mxu0 0
        %465 = vmatprep.subr.bf16.mxu0 0
        %466 = vmatpush2.bf16.msra.mxu0 0
        %467 = vmatprep.subr.bf16.mxu0 0
        %468 = vmatpush2.bf16.msra.mxu0 0
        %469 = vmatprep.subr.bf16.mxu0 0
        %470 = vmatpush2.bf16.msra.mxu0 0
        %471 = vmatprep.subr.bf16.mxu0 0
        %472 = vmatpush2.bf16.msra.mxu0 0
        %473 = vmatprep.subr.bf16.mxu0 0
        %474 = vmatpush2.bf16.msra.mxu0 0
        %475 = vmatprep.subr.bf16.mxu0 0
        %476 = vmatpush2.bf16.msra.mxu0 0
        %477 = vmatprep.mubr.bf16.mxu0 0
        %478 = vmatmul.mubr.bf16.gmra.mxu0 %v378
        %v479 = vpop.f32.mrf.mxu0
        %v480 = vadd.f32 0.0, %v479
        %v481 = vpop.f32.mrf.mxu0
        %v482 = vpop.f32.mrf.mxu0
        %v483 = vadd.f32 0.0, %v482
        %v484 = vpop.f32.mrf.mxu0
        %485 = vdwg.mxu0
        %v494 = vunpack.c.l.b16 %v299
        %v495 = vunpack.c.l.b16 %v300
        %v496 = vunpack.c.l.b16 %v301
        %v497 = vunpack.c.l.b16 %v302
        %v498 = vunpack.c.l.b16 %v303
        %v499 = vunpack.c.l.b16 %v304
        %v500 = vunpack.c.l.b16 %v305
        %v501 = vunpack.c.l.b16 %v306
        %v502 = vpack.c.b16 %v495, %v494
        %v503 = vpack.c.b16 %v497, %v496
        %v504 = vpack.c.b16 %v499, %v498
        %v505 = vpack.c.b16 %v501, %v500
        %510 = vmatprep.subr.bf16.mxu0 0
        %511 = vmatpush1.bf16.msra.mxu0 0
        %512 = vmatprep.subr.bf16.mxu0 0
        %513 = vmatpush1.bf16.msra.mxu0 0
        %514 = vmatprep.subr.bf16.mxu0 0
        %515 = vmatpush1.bf16.msra.mxu0 0
        %516 = vmatprep.subr.bf16.mxu0 0
        %517 = vmatpush1.bf16.msra.mxu0 0
        %518 = vmatprep.subr.bf16.mxu0 0
        %519 = vmatpush1.bf16.msra.mxu0 %v505
        %520 = vmatprep.subr.bf16.mxu0 0
        %521 = vmatpush1.bf16.msra.mxu0 %v504
        %522 = vmatprep.subr.bf16.mxu0 0
        %523 = vmatpush1.bf16.msra.mxu0 %v503
        %524 = vmatprep.subr.bf16.mxu0 0
        %525 = vmatpush1.bf16.msra.mxu0 %v502
        %526 = vmatprep.subr.bf16.mxu0 0
        %527 = vmatpush2.bf16.msra.mxu0 0
        %528 = vmatprep.subr.bf16.mxu0 0
        %529 = vmatpush2.bf16.msra.mxu0 0
        %530 = vmatprep.subr.bf16.mxu0 0
        %531 = vmatpush2.bf16.msra.mxu0 0
        %532 = vmatprep.subr.bf16.mxu0 0
        %533 = vmatpush2.bf16.msra.mxu0 0
        %534 = vmatprep.subr.bf16.mxu0 0
        %535 = vmatpush2.bf16.msra.mxu0 0
        %536 = vmatprep.subr.bf16.mxu0 0
        %537 = vmatpush2.bf16.msra.mxu0 0
        %538 = vmatprep.subr.bf16.mxu0 0
        %539 = vmatpush2.bf16.msra.mxu0 0
        %540 = vmatprep.subr.bf16.mxu0 0
        %541 = vmatpush2.bf16.msra.mxu0 0
        %542 = vmatprep.mubr.bf16.mxu0 0
        %543 = vmatmul.mubr.bf16.gmra.mxu0 %v378
        %v544 = vpop.f32.mrf.mxu0
        %v545 = vadd.f32 0.0, %v544
        %v546 = vpop.f32.mrf.mxu0
        %v547 = vpop.f32.mrf.mxu0
        %v548 = vadd.f32 0.0, %v547
        %v549 = vpop.f32.mrf.mxu0
        %550 = vdwg.mxu0
        %v559 = vunpack.c.l.b16 %v307
        %v560 = vunpack.c.l.b16 %v308
        %v561 = vunpack.c.l.b16 %v309
        %v562 = vunpack.c.l.b16 %v310
        %v563 = vunpack.c.l.b16 %v311
        %v564 = vunpack.c.l.b16 %v312
        %v565 = vunpack.c.l.b16 %v313
        %v566 = vunpack.c.l.b16 %v314
        %v567 = vpack.c.b16 %v560, %v559
        %v568 = vpack.c.b16 %v562, %v561
        %v569 = vpack.c.b16 %v564, %v563
        %v570 = vpack.c.b16 %v566, %v565
        %575 = vmatprep.subr.bf16.mxu0 0
        %576 = vmatpush1.bf16.msra.mxu0 0
        %577 = vmatprep.subr.bf16.mxu0 0
        %578 = vmatpush1.bf16.msra.mxu0 0
        %579 = vmatprep.subr.bf16.mxu0 0
        %580 = vmatpush1.bf16.msra.mxu0 0
        %581 = vmatprep.subr.bf16.mxu0 0
        %582 = vmatpush1.bf16.msra.mxu0 0
        %583 = vmatprep.subr.bf16.mxu0 0
        %584 = vmatpush1.bf16.msra.mxu0 %v570
        %585 = vmatprep.subr.bf16.mxu0 0
        %586 = vmatpush1.bf16.msra.mxu0 %v569
        %587 = vmatprep.subr.bf16.mxu0 0
        %588 = vmatpush1.bf16.msra.mxu0 %v568
        %589 = vmatprep.subr.bf16.mxu0 0
        %590 = vmatpush1.bf16.msra.mxu0 %v567
        %591 = vmatprep.subr.bf16.mxu0 0
        %592 = vmatpush2.bf16.msra.mxu0 0
        %593 = vmatprep.subr.bf16.mxu0 0
        %594 = vmatpush2.bf16.msra.mxu0 0
        %595 = vmatprep.subr.bf16.mxu0 0
        %596 = vmatpush2.bf16.msra.mxu0 0
        %597 = vmatprep.subr.bf16.mxu0 0
        %598 = vmatpush2.bf16.msra.mxu0 0
        %599 = vmatprep.subr.bf16.mxu0 0
        %600 = vmatpush2.bf16.msra.mxu0 0
        %601 = vmatprep.subr.bf16.mxu0 0
        %602 = vmatpush2.bf16.msra.mxu0 0
        %603 = vmatprep.subr.bf16.mxu0 0
        %604 = vmatpush2.bf16.msra.mxu0 0
        %605 = vmatprep.subr.bf16.mxu0 0
        %606 = vmatpush2.bf16.msra.mxu0 0
        %607 = vmatprep.mubr.bf16.mxu0 0
        %608 = vmatmul.mubr.bf16.gmra.mxu0 %v378
        %v609 = vpop.f32.mrf.mxu0
        %v610 = vadd.f32 0.0, %v609
        %v611 = vpop.f32.mrf.mxu0
        %v612 = vpop.f32.mrf.mxu0
        %v613 = vadd.f32 0.0, %v612
        %v614 = vpop.f32.mrf.mxu0
        %615 = vdwg.mxu0
        %v624 = vunpack.c.l.b16 %v315
        %v625 = vunpack.c.l.b16 %v316
        %v626 = vunpack.c.l.b16 %v317
        %v627 = vunpack.c.l.b16 %v318
        %v628 = vunpack.c.l.b16 %v319
        %v629 = vunpack.c.l.b16 %v320
        %v630 = vunpack.c.l.b16 %v321
        %v631 = vunpack.c.l.b16 %v322
        %v632 = vpack.c.b16 %v625, %v624
        %v633 = vpack.c.b16 %v627, %v626
        %v634 = vpack.c.b16 %v629, %v628
        %v635 = vpack.c.b16 %v631, %v630
        %640 = vmatprep.subr.bf16.mxu0 0
        %641 = vmatpush1.bf16.msra.mxu0 0
        %642 = vmatprep.subr.bf16.mxu0 0
        %643 = vmatpush1.bf16.msra.mxu0 0
        %644 = vmatprep.subr.bf16.mxu0 0
        %645 = vmatpush1.bf16.msra.mxu0 0
        %646 = vmatprep.subr.bf16.mxu0 0
        %647 = vmatpush1.bf16.msra.mxu0 0
        %648 = vmatprep.subr.bf16.mxu0 0
        %649 = vmatpush1.bf16.msra.mxu0 %v635
        %650 = vmatprep.subr.bf16.mxu0 0
        %651 = vmatpush1.bf16.msra.mxu0 %v634
        %652 = vmatprep.subr.bf16.mxu0 0
        %653 = vmatpush1.bf16.msra.mxu0 %v633
        %654 = vmatprep.subr.bf16.mxu0 0
        %655 = vmatpush1.bf16.msra.mxu0 %v632
        %656 = vmatprep.subr.bf16.mxu0 0
        %657 = vmatpush2.bf16.msra.mxu0 0
        %658 = vmatprep.subr.bf16.mxu0 0
        %659 = vmatpush2.bf16.msra.mxu0 0
        %660 = vmatprep.subr.bf16.mxu0 0
        %661 = vmatpush2.bf16.msra.mxu0 0
        %662 = vmatprep.subr.bf16.mxu0 0
        %663 = vmatpush2.bf16.msra.mxu0 0
        %664 = vmatprep.subr.bf16.mxu0 0
        %665 = vmatpush2.bf16.msra.mxu0 0
        %666 = vmatprep.subr.bf16.mxu0 0
        %667 = vmatpush2.bf16.msra.mxu0 0
        %668 = vmatprep.subr.bf16.mxu0 0
        %669 = vmatpush2.bf16.msra.mxu0 0
        %670 = vmatprep.subr.bf16.mxu0 0
        %671 = vmatpush2.bf16.msra.mxu0 0
        %672 = vmatprep.mubr.bf16.mxu0 0
        %673 = vmatmul.mubr.bf16.gmra.mxu0 %v378
        %v674 = vpop.f32.mrf.mxu0
        %v675 = vadd.f32 0.0, %v674
        %v676 = vpop.f32.mrf.mxu0
        %v677 = vpop.f32.mrf.mxu0
        %v678 = vadd.f32 0.0, %v677
        %v679 = vpop.f32.mrf.mxu0
        %680 = vdwg.mxu0
        %v689 = vunpack.c.l.b16 %v323
        %v690 = vunpack.c.l.b16 %v324
        %v691 = vunpack.c.l.b16 %v325
        %v692 = vunpack.c.l.b16 %v326
        %v693 = vunpack.c.l.b16 %v327
        %v694 = vunpack.c.l.b16 %v328
        %v695 = vunpack.c.l.b16 %v329
        %v696 = vunpack.c.l.b16 %v330
        %v697 = vpack.c.b16 %v690, %v689
        %v698 = vpack.c.b16 %v692, %v691
        %v699 = vpack.c.b16 %v694, %v693
        %v700 = vpack.c.b16 %v696, %v695
        %705 = vmatprep.subr.bf16.mxu0 0
        %706 = vmatpush1.bf16.msra.mxu0 0
        %707 = vmatprep.subr.bf16.mxu0 0
        %708 = vmatpush1.bf16.msra.mxu0 0
        %709 = vmatprep.subr.bf16.mxu0 0
        %710 = vmatpush1.bf16.msra.mxu0 0
        %711 = vmatprep.subr.bf16.mxu0 0
        %712 = vmatpush1.bf16.msra.mxu0 0
        %713 = vmatprep.subr.bf16.mxu0 0
        %714 = vmatpush1.bf16.msra.mxu0 %v700
        %715 = vmatprep.subr.bf16.mxu0 0
        %716 = vmatpush1.bf16.msra.mxu0 %v699
        %717 = vmatprep.subr.bf16.mxu0 0
        %718 = vmatpush1.bf16.msra.mxu0 %v698
        %719 = vmatprep.subr.bf16.mxu0 0
        %720 = vmatpush1.bf16.msra.mxu0 %v697
        %721 = vmatprep.subr.bf16.mxu0 0
        %722 = vmatpush2.bf16.msra.mxu0 0
        %723 = vmatprep.subr.bf16.mxu0 0
        %724 = vmatpush2.bf16.msra.mxu0 0
        %725 = vmatprep.subr.bf16.mxu0 0
        %726 = vmatpush2.bf16.msra.mxu0 0
        %727 = vmatprep.subr.bf16.mxu0 0
        %728 = vmatpush2.bf16.msra.mxu0 0
        %729 = vmatprep.subr.bf16.mxu0 0
        %730 = vmatpush2.bf16.msra.mxu0 0
        %731 = vmatprep.subr.bf16.mxu0 0
        %732 = vmatpush2.bf16.msra.mxu0 0
        %733 = vmatprep.subr.bf16.mxu0 0
        %734 = vmatpush2.bf16.msra.mxu0 0
        %735 = vmatprep.subr.bf16.mxu0 0
        %736 = vmatpush2.bf16.msra.mxu0 0
        %737 = vmatprep.mubr.bf16.mxu0 0
        %738 = vmatmul.mubr.bf16.gmra.mxu0 %v378
        %v739 = vpop.f32.mrf.mxu0
        %v740 = vadd.f32 0.0, %v739
        %v741 = vpop.f32.mrf.mxu0
        %v742 = vpop.f32.mrf.mxu0
        %v743 = vadd.f32 0.0, %v742
        %v744 = vpop.f32.mrf.mxu0
        %745 = vdwg.mxu0
        %v754 = vunpack.c.l.b16 %v331
        %v755 = vunpack.c.l.b16 %v332
        %v756 = vunpack.c.l.b16 %v333
        %v757 = vunpack.c.l.b16 %v334
        %v758 = vunpack.c.l.b16 %v335
        %v759 = vunpack.c.l.b16 %v336
        %v760 = vunpack.c.l.b16 %v337
        %v761 = vunpack.c.l.b16 %v338
        %v762 = vpack.c.b16 %v755, %v754
        %v763 = vpack.c.b16 %v757, %v756
        %v764 = vpack.c.b16 %v759, %v758
        %v765 = vpack.c.b16 %v761, %v760
        %770 = vmatprep.subr.bf16.mxu0 0
        %771 = vmatpush1.bf16.msra.mxu0 0
        %772 = vmatprep.subr.bf16.mxu0 0
        %773 = vmatpush1.bf16.msra.mxu0 0
        %774 = vmatprep.subr.bf16.mxu0 0
        %775 = vmatpush1.bf16.msra.mxu0 0
        %776 = vmatprep.subr.bf16.mxu0 0
        %777 = vmatpush1.bf16.msra.mxu0 0
        %778 = vmatprep.subr.bf16.mxu0 0
        %779 = vmatpush1.bf16.msra.mxu0 %v765
        %780 = vmatprep.subr.bf16.mxu0 0
        %781 = vmatpush1.bf16.msra.mxu0 %v764
        %782 = vmatprep.subr.bf16.mxu0 0
        %783 = vmatpush1.bf16.msra.mxu0 %v763
        %784 = vmatprep.subr.bf16.mxu0 0
        %785 = vmatpush1.bf16.msra.mxu0 %v762
        %786 = vmatprep.subr.bf16.mxu0 0
        %787 = vmatpush2.bf16.msra.mxu0 0
        %788 = vmatprep.subr.bf16.mxu0 0
        %789 = vmatpush2.bf16.msra.mxu0 0
        %790 = vmatprep.subr.bf16.mxu0 0
        %791 = vmatpush2.bf16.msra.mxu0 0
        %792 = vmatprep.subr.bf16.mxu0 0
        %793 = vmatpush2.bf16.msra.mxu0 0
        %794 = vmatprep.subr.bf16.mxu0 0
        %795 = vmatpush2.bf16.msra.mxu0 0
        %796 = vmatprep.subr.bf16.mxu0 0
        %797 = vmatpush2.bf16.msra.mxu0 0
        %798 = vmatprep.subr.bf16.mxu0 0
        %799 = vmatpush2.bf16.msra.mxu0 0
        %800 = vmatprep.subr.bf16.mxu0 0
        %801 = vmatpush2.bf16.msra.mxu0 0
        %802 = vmatprep.mubr.bf16.mxu0 0
        %803 = vmatmul.mubr.bf16.gmra.mxu0 %v378
        %v804 = vpop.f32.mrf.mxu0
        %v805 = vadd.f32 0.0, %v804
        %v806 = vpop.f32.mrf.mxu0
        %v807 = vpop.f32.mrf.mxu0
        %v808 = vadd.f32 0.0, %v807
        %v809 = vpop.f32.mrf.mxu0
        %810 = vdwg.mxu0
        %v819 = vunpack.c.l.b16 %v339
        %v820 = vunpack.c.l.b16 %v340
        %v821 = vunpack.c.l.b16 %v341
        %v822 = vunpack.c.l.b16 %v342
        %v823 = vunpack.c.l.b16 %v343
        %v824 = vunpack.c.l.b16 %v344
        %v825 = vunpack.c.l.b16 %v345
        %v826 = vunpack.c.l.b16 %v346
        %v827 = vpack.c.b16 %v820, %v819
        %v828 = vpack.c.b16 %v822, %v821
        %v829 = vpack.c.b16 %v824, %v823
        %v830 = vpack.c.b16 %v826, %v825
        %835 = vmatprep.subr.bf16.mxu0 0
        %836 = vmatpush1.bf16.msra.mxu0 0
        %837 = vmatprep.subr.bf16.mxu0 0
        %838 = vmatpush1.bf16.msra.mxu0 0
        %839 = vmatprep.subr.bf16.mxu0 0
        %840 = vmatpush1.bf16.msra.mxu0 0
        %841 = vmatprep.subr.bf16.mxu0 0
        %842 = vmatpush1.bf16.msra.mxu0 0
        %843 = vmatprep.subr.bf16.mxu0 0
        %844 = vmatpush1.bf16.msra.mxu0 %v830
        %845 = vmatprep.subr.bf16.mxu0 0
        %846 = vmatpush1.bf16.msra.mxu0 %v829
        %847 = vmatprep.subr.bf16.mxu0 0
        %848 = vmatpush1.bf16.msra.mxu0 %v828
        %849 = vmatprep.subr.bf16.mxu0 0
        %850 = vmatpush1.bf16.msra.mxu0 %v827
        %851 = vmatprep.subr.bf16.mxu0 0
        %852 = vmatpush2.bf16.msra.mxu0 0
        %853 = vmatprep.subr.bf16.mxu0 0
        %854 = vmatpush2.bf16.msra.mxu0 0
        %855 = vmatprep.subr.bf16.mxu0 0
        %856 = vmatpush2.bf16.msra.mxu0 0
        %857 = vmatprep.subr.bf16.mxu0 0
        %858 = vmatpush2.bf16.msra.mxu0 0
        %859 = vmatprep.subr.bf16.mxu0 0
        %860 = vmatpush2.bf16.msra.mxu0 0
        %861 = vmatprep.subr.bf16.mxu0 0
        %862 = vmatpush2.bf16.msra.mxu0 0
        %863 = vmatprep.subr.bf16.mxu0 0
        %864 = vmatpush2.bf16.msra.mxu0 0
        %865 = vmatprep.subr.bf16.mxu0 0
        %866 = vmatpush2.bf16.msra.mxu0 0
        %867 = vmatprep.mubr.bf16.mxu0 0
        %868 = vmatmul.mubr.bf16.gmra.mxu0 %v378
        %v869 = vpop.f32.mrf.mxu0
        %v870 = vadd.f32 0.0, %v869
        %v871 = vpop.f32.mrf.mxu0
        %v872 = vpop.f32.mrf.mxu0
        %v873 = vadd.f32 0.0, %v872
        %v874 = vpop.f32.mrf.mxu0
        %875 = vdwg.mxu0
        %v876 = vmul.f32 %v415, 0.35355338
        %v877 = vmul.f32 %v418, 0.35355338
        %v878 = vmul.f32 %v480, 0.35355338
        %v879 = vmul.f32 %v483, 0.35355338
        %v880 = vmul.f32 %v545, 0.35355338
        %v881 = vmul.f32 %v548, 0.35355338
        %v882 = vmul.f32 %v610, 0.35355338
        %v883 = vmul.f32 %v613, 0.35355338
        %v884 = vmul.f32 %v675, 0.35355338
        %v885 = vmul.f32 %v678, 0.35355338
        %v886 = vmul.f32 %v740, 0.35355338
        %v887 = vmul.f32 %v743, 0.35355338
        %v888 = vmul.f32 %v805, 0.35355338
        %v889 = vmul.f32 %v808, 0.35355338
        %v890 = vmul.f32 %v870, 0.35355338
        %v891 = vmul.f32 %v873, 0.35355338
        %v892 = vpack.c.bf16 %v877, %v876
        %v893 = vpack.c.bf16 %v879, %v878
        %v894 = vpack.c.bf16 %v881, %v880
        %v895 = vpack.c.bf16 %v883, %v882
        %v896 = vpack.c.bf16 %v885, %v884
        %v897 = vpack.c.bf16 %v887, %v886
        %v898 = vpack.c.bf16 %v889, %v888
        %v899 = vpack.c.bf16 %v891, %v890
        %v900 = vld [vmem:[%s3] sm:$0xf]
        %v901 = vld [vmem:[%s3 + $0x4] sm:$0xf]
        %v902 = vld [vmem:[%s3 + $0x8] sm:$0xf]
        %v903 = vld [vmem:[%s3 + $0xc] sm:$0xf]
        %v904 = vld [vmem:[%s3 + $0x10] sm:$0xf]
        %v905 = vld [vmem:[%s3 + $0x14] sm:$0xf]
        %v906 = vld [vmem:[%s3 + $0x18] sm:$0xf]
        %v907 = vld [vmem:[%s3 + $0x1c] sm:$0xf]
        %v908 = vld [vmem:[%s3 + $0x20] sm:$0xf]
        %v909 = vld [vmem:[%s3 + $0x24] sm:$0xf]
        %v910 = vld [vmem:[%s3 + $0x28] sm:$0xf]
        %v911 = vld [vmem:[%s3 + $0x2c] sm:$0xf]
        %v912 = vld [vmem:[%s3 + $0x30] sm:$0xf]
        %v913 = vld [vmem:[%s3 + $0x34] sm:$0xf]
        %v914 = vld [vmem:[%s3 + $0x38] sm:$0xf]
        %v915 = vld [vmem:[%s3 + $0x3c] sm:$0xf]
        %v916 = vld [vmem:[%s3 + $0x40] sm:$0xf]
        %v917 = vld [vmem:[%s3 + $0x44] sm:$0xf]
        %v918 = vld [vmem:[%s3 + $0x48] sm:$0xf]
        %v919 = vld [vmem:[%s3 + $0x4c] sm:$0xf]
        %v920 = vld [vmem:[%s3 + $0x50] sm:$0xf]
        %v921 = vld [vmem:[%s3 + $0x54] sm:$0xf]
        %v922 = vld [vmem:[%s3 + $0x58] sm:$0xf]
        %v923 = vld [vmem:[%s3 + $0x5c] sm:$0xf]
        %v924 = vld [vmem:[%s3 + $0x60] sm:$0xf]
        %v925 = vld [vmem:[%s3 + $0x64] sm:$0xf]
        %v926 = vld [vmem:[%s3 + $0x68] sm:$0xf]
        %v927 = vld [vmem:[%s3 + $0x6c] sm:$0xf]
        %v928 = vld [vmem:[%s3 + $0x70] sm:$0xf]
        %v929 = vld [vmem:[%s3 + $0x74] sm:$0xf]
        %v930 = vld [vmem:[%s3 + $0x78] sm:$0xf]
        %v931 = vld [vmem:[%s3 + $0x7c] sm:$0xf]
        %v932 = vld [vmem:[%s3 + $0x80] sm:$0xf]
        %v933 = vld [vmem:[%s3 + $0x84] sm:$0xf]
        %v934 = vld [vmem:[%s3 + $0x88] sm:$0xf]
        %v935 = vld [vmem:[%s3 + $0x8c] sm:$0xf]
        %v936 = vld [vmem:[%s3 + $0x90] sm:$0xf]
        %v937 = vld [vmem:[%s3 + $0x94] sm:$0xf]
        %v938 = vld [vmem:[%s3 + $0x98] sm:$0xf]
        %v939 = vld [vmem:[%s3 + $0x9c] sm:$0xf]
        %v940 = vld [vmem:[%s3 + $0xa0] sm:$0xf]
        %v941 = vld [vmem:[%s3 + $0xa4] sm:$0xf]
        %v942 = vld [vmem:[%s3 + $0xa8] sm:$0xf]
        %v943 = vld [vmem:[%s3 + $0xac] sm:$0xf]
        %v944 = vld [vmem:[%s3 + $0xb0] sm:$0xf]
        %v945 = vld [vmem:[%s3 + $0xb4] sm:$0xf]
        %v946 = vld [vmem:[%s3 + $0xb8] sm:$0xf]
        %v947 = vld [vmem:[%s3 + $0xbc] sm:$0xf]
        %v948 = vld [vmem:[%s3 + $0xc0] sm:$0xf]
        %v949 = vld [vmem:[%s3 + $0xc4] sm:$0xf]
        %v950 = vld [vmem:[%s3 + $0xc8] sm:$0xf]
        %v951 = vld [vmem:[%s3 + $0xcc] sm:$0xf]
        %v952 = vld [vmem:[%s3 + $0xd0] sm:$0xf]
        %v953 = vld [vmem:[%s3 + $0xd4] sm:$0xf]
        %v954 = vld [vmem:[%s3 + $0xd8] sm:$0xf]
        %v955 = vld [vmem:[%s3 + $0xdc] sm:$0xf]
        %v956 = vld [vmem:[%s3 + $0xe0] sm:$0xf]
        %v957 = vld [vmem:[%s3 + $0xe4] sm:$0xf]
        %v958 = vld [vmem:[%s3 + $0xe8] sm:$0xf]
        %v959 = vld [vmem:[%s3 + $0xec] sm:$0xf]
        %v960 = vld [vmem:[%s3 + $0xf0] sm:$0xf]
        %v961 = vld [vmem:[%s3 + $0xf4] sm:$0xf]
        %v962 = vld [vmem:[%s3 + $0xf8] sm:$0xf]
        %v963 = vld [vmem:[%s3 + $0xfc] sm:$0xf]
        %v972 = vunpack.c.l.b16 %v900
        %v973 = vunpack.c.l.b16 %v901
        %v974 = vunpack.c.l.b16 %v902
        %v975 = vunpack.c.l.b16 %v903
        %v976 = vunpack.c.l.b16 %v904
        %v977 = vunpack.c.l.b16 %v905
        %v978 = vunpack.c.l.b16 %v906
        %v979 = vunpack.c.l.b16 %v907
        %v980 = vpack.c.b16 %v973, %v972
        %v981 = vpack.c.b16 %v975, %v974
        %v982 = vpack.c.b16 %v977, %v976
        %v983 = vpack.c.b16 %v979, %v978
        %988 = vmatprep.subr.bf16.mxu0 0
        %989 = vmatpush1.bf16.msra.mxu0 0
        %990 = vmatprep.subr.bf16.mxu0 0
        %991 = vmatpush1.bf16.msra.mxu0 0
        %992 = vmatprep.subr.bf16.mxu0 0
        %993 = vmatpush1.bf16.msra.mxu0 0
        %994 = vmatprep.subr.bf16.mxu0 0
        %995 = vmatpush1.bf16.msra.mxu0 0
        %996 = vmatprep.subr.bf16.mxu0 0
        %997 = vmatpush1.bf16.msra.mxu0 %v983
        %998 = vmatprep.subr.bf16.mxu0 0
        %999 = vmatpush1.bf16.msra.mxu0 %v982
        %1000 = vmatprep.subr.bf16.mxu0 0
        %1001 = vmatpush1.bf16.msra.mxu0 %v981
        %1002 = vmatprep.subr.bf16.mxu0 0
        %1003 = vmatpush1.bf16.msra.mxu0 %v980
        %1004 = vmatprep.subr.bf16.mxu0 0
        %1005 = vmatpush2.bf16.msra.mxu0 0
        %1006 = vmatprep.subr.bf16.mxu0 0
        %1007 = vmatpush2.bf16.msra.mxu0 0
        %1008 = vmatprep.subr.bf16.mxu0 0
        %1009 = vmatpush2.bf16.msra.mxu0 0
        %1010 = vmatprep.subr.bf16.mxu0 0
        %1011 = vmatpush2.bf16.msra.mxu0 0
        %1012 = vmatprep.subr.bf16.mxu0 0
        %1013 = vmatpush2.bf16.msra.mxu0 0
        %1014 = vmatprep.subr.bf16.mxu0 0
        %1015 = vmatpush2.bf16.msra.mxu0 0
        %1016 = vmatprep.subr.bf16.mxu0 0
        %1017 = vmatpush2.bf16.msra.mxu0 0
        %1018 = vmatprep.subr.bf16.mxu0 0
        %1019 = vmatpush2.bf16.msra.mxu0 0
        %1020 = vmatprep.mubr.bf16.mxu0 0
        %1021 = vmatmul.mubr.bf16.gmra.mxu0 %v378
        %v1022 = vpop.f32.mrf.mxu0
        %v1023 = vadd.f32 0.0, %v1022
        %v1024 = vpop.f32.mrf.mxu0
        %v1025 = vpop.f32.mrf.mxu0
        %v1026 = vadd.f32 0.0, %v1025
        %v1027 = vpop.f32.mrf.mxu0
        %1028 = vdwg.mxu0
        %v1037 = vunpack.c.l.b16 %v908
        %v1038 = vunpack.c.l.b16 %v909
        %v1039 = vunpack.c.l.b16 %v910
        %v1040 = vunpack.c.l.b16 %v911
        %v1041 = vunpack.c.l.b16 %v912
        %v1042 = vunpack.c.l.b16 %v913
        %v1043 = vunpack.c.l.b16 %v914
        %v1044 = vunpack.c.l.b16 %v915
        %v1045 = vpack.c.b16 %v1038, %v1037
        %v1046 = vpack.c.b16 %v1040, %v1039
        %v1047 = vpack.c.b16 %v1042, %v1041
        %v1048 = vpack.c.b16 %v1044, %v1043
        %1053 = vmatprep.subr.bf16.mxu0 0
        %1054 = vmatpush1.bf16.msra.mxu0 0
        %1055 = vmatprep.subr.bf16.mxu0 0
        %1056 = vmatpush1.bf16.msra.mxu0 0
        %1057 = vmatprep.subr.bf16.mxu0 0
        %1058 = vmatpush1.bf16.msra.mxu0 0
        %1059 = vmatprep.subr.bf16.mxu0 0
        %1060 = vmatpush1.bf16.msra.mxu0 0
        %1061 = vmatprep.subr.bf16.mxu0 0
        %1062 = vmatpush1.bf16.msra.mxu0 %v1048
        %1063 = vmatprep.subr.bf16.mxu0 0
        %1064 = vmatpush1.bf16.msra.mxu0 %v1047
        %1065 = vmatprep.subr.bf16.mxu0 0
        %1066 = vmatpush1.bf16.msra.mxu0 %v1046
        %1067 = vmatprep.subr.bf16.mxu0 0
        %1068 = vmatpush1.bf16.msra.mxu0 %v1045
        %1069 = vmatprep.subr.bf16.mxu0 0
        %1070 = vmatpush2.bf16.msra.mxu0 0
        %1071 = vmatprep.subr.bf16.mxu0 0
        %1072 = vmatpush2.bf16.msra.mxu0 0
        %1073 = vmatprep.subr.bf16.mxu0 0
        %1074 = vmatpush2.bf16.msra.mxu0 0
        %1075 = vmatprep.subr.bf16.mxu0 0
        %1076 = vmatpush2.bf16.msra.mxu0 0
        %1077 = vmatprep.subr.bf16.mxu0 0
        %1078 = vmatpush2.bf16.msra.mxu0 0
        %1079 = vmatprep.subr.bf16.mxu0 0
        %1080 = vmatpush2.bf16.msra.mxu0 0
        %1081 = vmatprep.subr.bf16.mxu0 0
        %1082 = vmatpush2.bf16.msra.mxu0 0
        %1083 = vmatprep.subr.bf16.mxu0 0
        %1084 = vmatpush2.bf16.msra.mxu0 0
        %1085 = vmatprep.mubr.bf16.mxu0 0
        %1086 = vmatmul.mubr.bf16.gmra.mxu0 %v378
        %v1087 = vpop.f32.mrf.mxu0
        %v1088 = vadd.f32 0.0, %v1087
        %v1089 = vpop.f32.mrf.mxu0
        %v1090 = vpop.f32.mrf.mxu0
        %v1091 = vadd.f32 0.0, %v1090
        %v1092 = vpop.f32.mrf.mxu0
        %1093 = vdwg.mxu0
        %v1102 = vunpack.c.l.b16 %v916
        %v1103 = vunpack.c.l.b16 %v917
        %v1104 = vunpack.c.l.b16 %v918
        %v1105 = vunpack.c.l.b16 %v919
        %v1106 = vunpack.c.l.b16 %v920
        %v1107 = vunpack.c.l.b16 %v921
        %v1108 = vunpack.c.l.b16 %v922
        %v1109 = vunpack.c.l.b16 %v923
        %v1110 = vpack.c.b16 %v1103, %v1102
        %v1111 = vpack.c.b16 %v1105, %v1104
        %v1112 = vpack.c.b16 %v1107, %v1106
        %v1113 = vpack.c.b16 %v1109, %v1108
        %1118 = vmatprep.subr.bf16.mxu0 0
        %1119 = vmatpush1.bf16.msra.mxu0 0
        %1120 = vmatprep.subr.bf16.mxu0 0
        %1121 = vmatpush1.bf16.msra.mxu0 0
        %1122 = vmatprep.subr.bf16.mxu0 0
        %1123 = vmatpush1.bf16.msra.mxu0 0
        %1124 = vmatprep.subr.bf16.mxu0 0
        %1125 = vmatpush1.bf16.msra.mxu0 0
        %1126 = vmatprep.subr.bf16.mxu0 0
        %1127 = vmatpush1.bf16.msra.mxu0 %v1113
        %1128 = vmatprep.subr.bf16.mxu0 0
        %1129 = vmatpush1.bf16.msra.mxu0 %v1112
        %1130 = vmatprep.subr.bf16.mxu0 0
        %1131 = vmatpush1.bf16.msra.mxu0 %v1111
        %1132 = vmatprep.subr.bf16.mxu0 0
        %1133 = vmatpush1.bf16.msra.mxu0 %v1110
        %1134 = vmatprep.subr.bf16.mxu0 0
        %1135 = vmatpush2.bf16.msra.mxu0 0
        %1136 = vmatprep.subr.bf16.mxu0 0
        %1137 = vmatpush2.bf16.msra.mxu0 0
        %1138 = vmatprep.subr.bf16.mxu0 0
        %1139 = vmatpush2.bf16.msra.mxu0 0
        %1140 = vmatprep.subr.bf16.mxu0 0
        %1141 = vmatpush2.bf16.msra.mxu0 0
        %1142 = vmatprep.subr.bf16.mxu0 0
        %1143 = vmatpush2.bf16.msra.mxu0 0
        %1144 = vmatprep.subr.bf16.mxu0 0
        %1145 = vmatpush2.bf16.msra.mxu0 0
        %1146 = vmatprep.subr.bf16.mxu0 0
        %1147 = vmatpush2.bf16.msra.mxu0 0
        %1148 = vmatprep.subr.bf16.mxu0 0
        %1149 = vmatpush2.bf16.msra.mxu0 0
        %1150 = vmatprep.mubr.bf16.mxu0 0
        %1151 = vmatmul.mubr.bf16.gmra.mxu0 %v378
        %v1152 = vpop.f32.mrf.mxu0
        %v1153 = vadd.f32 0.0, %v1152
        %v1154 = vpop.f32.mrf.mxu0
        %v1155 = vpop.f32.mrf.mxu0
        %v1156 = vadd.f32 0.0, %v1155
        %v1157 = vpop.f32.mrf.mxu0
        %1158 = vdwg.mxu0
        %v1167 = vunpack.c.l.b16 %v924
        %v1168 = vunpack.c.l.b16 %v925
        %v1169 = vunpack.c.l.b16 %v926
        %v1170 = vunpack.c.l.b16 %v927
        %v1171 = vunpack.c.l.b16 %v928
        %v1172 = vunpack.c.l.b16 %v929
        %v1173 = vunpack.c.l.b16 %v930
        %v1174 = vunpack.c.l.b16 %v931
        %v1175 = vpack.c.b16 %v1168, %v1167
        %v1176 = vpack.c.b16 %v1170, %v1169
        %v1177 = vpack.c.b16 %v1172, %v1171
        %v1178 = vpack.c.b16 %v1174, %v1173
        %1183 = vmatprep.subr.bf16.mxu0 0
        %1184 = vmatpush1.bf16.msra.mxu0 0
        %1185 = vmatprep.subr.bf16.mxu0 0
        %1186 = vmatpush1.bf16.msra.mxu0 0
        %1187 = vmatprep.subr.bf16.mxu0 0
        %1188 = vmatpush1.bf16.msra.mxu0 0
        %1189 = vmatprep.subr.bf16.mxu0 0
        %1190 = vmatpush1.bf16.msra.mxu0 0
        %1191 = vmatprep.subr.bf16.mxu0 0
        %1192 = vmatpush1.bf16.msra.mxu0 %v1178
        %1193 = vmatprep.subr.bf16.mxu0 0
        %1194 = vmatpush1.bf16.msra.mxu0 %v1177
        %1195 = vmatprep.subr.bf16.mxu0 0
        %1196 = vmatpush1.bf16.msra.mxu0 %v1176
        %1197 = vmatprep.subr.bf16.mxu0 0
        %1198 = vmatpush1.bf16.msra.mxu0 %v1175
        %1199 = vmatprep.subr.bf16.mxu0 0
        %1200 = vmatpush2.bf16.msra.mxu0 0
        %1201 = vmatprep.subr.bf16.mxu0 0
        %1202 = vmatpush2.bf16.msra.mxu0 0
        %1203 = vmatprep.subr.bf16.mxu0 0
        %1204 = vmatpush2.bf16.msra.mxu0 0
        %1205 = vmatprep.subr.bf16.mxu0 0
        %1206 = vmatpush2.bf16.msra.mxu0 0
        %1207 = vmatprep.subr.bf16.mxu0 0
        %1208 = vmatpush2.bf16.msra.mxu0 0
        %1209 = vmatprep.subr.bf16.mxu0 0
        %1210 = vmatpush2.bf16.msra.mxu0 0
        %1211 = vmatprep.subr.bf16.mxu0 0
        %1212 = vmatpush2.bf16.msra.mxu0 0
        %1213 = vmatprep.subr.bf16.mxu0 0
        %1214 = vmatpush2.bf16.msra.mxu0 0
        %1215 = vmatprep.mubr.bf16.mxu0 0
        %1216 = vmatmul.mubr.bf16.gmra.mxu0 %v378
        %v1217 = vpop.f32.mrf.mxu0
        %v1218 = vadd.f32 0.0, %v1217
        %v1219 = vpop.f32.mrf.mxu0
        %v1220 = vpop.f32.mrf.mxu0
        %v1221 = vadd.f32 0.0, %v1220
        %v1222 = vpop.f32.mrf.mxu0
        %1223 = vdwg.mxu0
        %v1232 = vunpack.c.l.b16 %v932
        %v1233 = vunpack.c.l.b16 %v933
        %v1234 = vunpack.c.l.b16 %v934
        %v1235 = vunpack.c.l.b16 %v935
        %v1236 = vunpack.c.l.b16 %v936
        %v1237 = vunpack.c.l.b16 %v937
        %v1238 = vunpack.c.l.b16 %v938
        %v1239 = vunpack.c.l.b16 %v939
        %v1240 = vpack.c.b16 %v1233, %v1232
        %v1241 = vpack.c.b16 %v1235, %v1234
        %v1242 = vpack.c.b16 %v1237, %v1236
        %v1243 = vpack.c.b16 %v1239, %v1238
        %1248 = vmatprep.subr.bf16.mxu0 0
        %1249 = vmatpush1.bf16.msra.mxu0 0
        %1250 = vmatprep.subr.bf16.mxu0 0
        %1251 = vmatpush1.bf16.msra.mxu0 0
        %1252 = vmatprep.subr.bf16.mxu0 0
        %1253 = vmatpush1.bf16.msra.mxu0 0
        %1254 = vmatprep.subr.bf16.mxu0 0
        %1255 = vmatpush1.bf16.msra.mxu0 0
        %1256 = vmatprep.subr.bf16.mxu0 0
        %1257 = vmatpush1.bf16.msra.mxu0 %v1243
        %1258 = vmatprep.subr.bf16.mxu0 0
        %1259 = vmatpush1.bf16.msra.mxu0 %v1242
        %1260 = vmatprep.subr.bf16.mxu0 0
        %1261 = vmatpush1.bf16.msra.mxu0 %v1241
        %1262 = vmatprep.subr.bf16.mxu0 0
        %1263 = vmatpush1.bf16.msra.mxu0 %v1240
        %1264 = vmatprep.subr.bf16.mxu0 0
        %1265 = vmatpush2.bf16.msra.mxu0 0
        %1266 = vmatprep.subr.bf16.mxu0 0
        %1267 = vmatpush2.bf16.msra.mxu0 0
        %1268 = vmatprep.subr.bf16.mxu0 0
        %1269 = vmatpush2.bf16.msra.mxu0 0
        %1270 = vmatprep.subr.bf16.mxu0 0
        %1271 = vmatpush2.bf16.msra.mxu0 0
        %1272 = vmatprep.subr.bf16.mxu0 0
        %1273 = vmatpush2.bf16.msra.mxu0 0
        %1274 = vmatprep.subr.bf16.mxu0 0
        %1275 = vmatpush2.bf16.msra.mxu0 0
        %1276 = vmatprep.subr.bf16.mxu0 0
        %1277 = vmatpush2.bf16.msra.mxu0 0
        %1278 = vmatprep.subr.bf16.mxu0 0
        %1279 = vmatpush2.bf16.msra.mxu0 0
        %1280 = vmatprep.mubr.bf16.mxu0 0
        %1281 = vmatmul.mubr.bf16.gmra.mxu0 %v378
        %v1282 = vpop.f32.mrf.mxu0
        %v1283 = vadd.f32 0.0, %v1282
        %v1284 = vpop.f32.mrf.mxu0
        %v1285 = vpop.f32.mrf.mxu0
        %v1286 = vadd.f32 0.0, %v1285
        %v1287 = vpop.f32.mrf.mxu0
        %1288 = vdwg.mxu0
        %v1297 = vunpack.c.l.b16 %v940
        %v1298 = vunpack.c.l.b16 %v941
        %v1299 = vunpack.c.l.b16 %v942
        %v1300 = vunpack.c.l.b16 %v943
        %v1301 = vunpack.c.l.b16 %v944
        %v1302 = vunpack.c.l.b16 %v945
        %v1303 = vunpack.c.l.b16 %v946
        %v1304 = vunpack.c.l.b16 %v947
        %v1305 = vpack.c.b16 %v1298, %v1297
        %v1306 = vpack.c.b16 %v1300, %v1299
        %v1307 = vpack.c.b16 %v1302, %v1301
        %v1308 = vpack.c.b16 %v1304, %v1303
        %1313 = vmatprep.subr.bf16.mxu0 0
        %1314 = vmatpush1.bf16.msra.mxu0 0
        %1315 = vmatprep.subr.bf16.mxu0 0
        %1316 = vmatpush1.bf16.msra.mxu0 0
        %1317 = vmatprep.subr.bf16.mxu0 0
        %1318 = vmatpush1.bf16.msra.mxu0 0
        %1319 = vmatprep.subr.bf16.mxu0 0
        %1320 = vmatpush1.bf16.msra.mxu0 0
        %1321 = vmatprep.subr.bf16.mxu0 0
        %1322 = vmatpush1.bf16.msra.mxu0 %v1308
        %1323 = vmatprep.subr.bf16.mxu0 0
        %1324 = vmatpush1.bf16.msra.mxu0 %v1307
        %1325 = vmatprep.subr.bf16.mxu0 0
        %1326 = vmatpush1.bf16.msra.mxu0 %v1306
        %1327 = vmatprep.subr.bf16.mxu0 0
        %1328 = vmatpush1.bf16.msra.mxu0 %v1305
        %1329 = vmatprep.subr.bf16.mxu0 0
        %1330 = vmatpush2.bf16.msra.mxu0 0
        %1331 = vmatprep.subr.bf16.mxu0 0
        %1332 = vmatpush2.bf16.msra.mxu0 0
        %1333 = vmatprep.subr.bf16.mxu0 0
        %1334 = vmatpush2.bf16.msra.mxu0 0
        %1335 = vmatprep.subr.bf16.mxu0 0
        %1336 = vmatpush2.bf16.msra.mxu0 0
        %1337 = vmatprep.subr.bf16.mxu0 0
        %1338 = vmatpush2.bf16.msra.mxu0 0
        %1339 = vmatprep.subr.bf16.mxu0 0
        %1340 = vmatpush2.bf16.msra.mxu0 0
        %1341 = vmatprep.subr.bf16.mxu0 0
        %1342 = vmatpush2.bf16.msra.mxu0 0
        %1343 = vmatprep.subr.bf16.mxu0 0
        %1344 = vmatpush2.bf16.msra.mxu0 0
        %1345 = vmatprep.mubr.bf16.mxu0 0
        %1346 = vmatmul.mubr.bf16.gmra.mxu0 %v378
        %v1347 = vpop.f32.mrf.mxu0
        %v1348 = vadd.f32 0.0, %v1347
        %v1349 = vpop.f32.mrf.mxu0
        %v1350 = vpop.f32.mrf.mxu0
        %v1351 = vadd.f32 0.0, %v1350
        %v1352 = vpop.f32.mrf.mxu0
        %1353 = vdwg.mxu0
        %v1362 = vunpack.c.l.b16 %v948
        %v1363 = vunpack.c.l.b16 %v949
        %v1364 = vunpack.c.l.b16 %v950
        %v1365 = vunpack.c.l.b16 %v951
        %v1366 = vunpack.c.l.b16 %v952
        %v1367 = vunpack.c.l.b16 %v953
        %v1368 = vunpack.c.l.b16 %v954
        %v1369 = vunpack.c.l.b16 %v955
        %v1370 = vpack.c.b16 %v1363, %v1362
        %v1371 = vpack.c.b16 %v1365, %v1364
        %v1372 = vpack.c.b16 %v1367, %v1366
        %v1373 = vpack.c.b16 %v1369, %v1368
        %1378 = vmatprep.subr.bf16.mxu0 0
        %1379 = vmatpush1.bf16.msra.mxu0 0
        %1380 = vmatprep.subr.bf16.mxu0 0
        %1381 = vmatpush1.bf16.msra.mxu0 0
        %1382 = vmatprep.subr.bf16.mxu0 0
        %1383 = vmatpush1.bf16.msra.mxu0 0
        %1384 = vmatprep.subr.bf16.mxu0 0
        %1385 = vmatpush1.bf16.msra.mxu0 0
        %1386 = vmatprep.subr.bf16.mxu0 0
        %1387 = vmatpush1.bf16.msra.mxu0 %v1373
        %1388 = vmatprep.subr.bf16.mxu0 0
        %1389 = vmatpush1.bf16.msra.mxu0 %v1372
        %1390 = vmatprep.subr.bf16.mxu0 0
        %1391 = vmatpush1.bf16.msra.mxu0 %v1371
        %1392 = vmatprep.subr.bf16.mxu0 0
        %1393 = vmatpush1.bf16.msra.mxu0 %v1370
        %1394 = vmatprep.subr.bf16.mxu0 0
        %1395 = vmatpush2.bf16.msra.mxu0 0
        %1396 = vmatprep.subr.bf16.mxu0 0
        %1397 = vmatpush2.bf16.msra.mxu0 0
        %1398 = vmatprep.subr.bf16.mxu0 0
        %1399 = vmatpush2.bf16.msra.mxu0 0
        %1400 = vmatprep.subr.bf16.mxu0 0
        %1401 = vmatpush2.bf16.msra.mxu0 0
        %1402 = vmatprep.subr.bf16.mxu0 0
        %1403 = vmatpush2.bf16.msra.mxu0 0
        %1404 = vmatprep.subr.bf16.mxu0 0
        %1405 = vmatpush2.bf16.msra.mxu0 0
        %1406 = vmatprep.subr.bf16.mxu0 0
        %1407 = vmatpush2.bf16.msra.mxu0 0
        %1408 = vmatprep.subr.bf16.mxu0 0
        %1409 = vmatpush2.bf16.msra.mxu0 0
        %1410 = vmatprep.mubr.bf16.mxu0 0
        %1411 = vmatmul.mubr.bf16.gmra.mxu0 %v378
        %v1412 = vpop.f32.mrf.mxu0
        %v1413 = vadd.f32 0.0, %v1412
        %v1414 = vpop.f32.mrf.mxu0
        %v1415 = vpop.f32.mrf.mxu0
        %v1416 = vadd.f32 0.0, %v1415
        %v1417 = vpop.f32.mrf.mxu0
        %1418 = vdwg.mxu0
        %v1427 = vunpack.c.l.b16 %v956
        %v1428 = vunpack.c.l.b16 %v957
        %v1429 = vunpack.c.l.b16 %v958
        %v1430 = vunpack.c.l.b16 %v959
        %v1431 = vunpack.c.l.b16 %v960
        %v1432 = vunpack.c.l.b16 %v961
        %v1433 = vunpack.c.l.b16 %v962
        %v1434 = vunpack.c.l.b16 %v963
        %v1435 = vpack.c.b16 %v1428, %v1427
        %v1436 = vpack.c.b16 %v1430, %v1429
        %v1437 = vpack.c.b16 %v1432, %v1431
        %v1438 = vpack.c.b16 %v1434, %v1433
        %1443 = vmatprep.subr.bf16.mxu0 0
        %1444 = vmatpush1.bf16.msra.mxu0 0
        %1445 = vmatprep.subr.bf16.mxu0 0
        %1446 = vmatpush1.bf16.msra.mxu0 0
        %1447 = vmatprep.subr.bf16.mxu0 0
        %1448 = vmatpush1.bf16.msra.mxu0 0
        %1449 = vmatprep.subr.bf16.mxu0 0
        %1450 = vmatpush1.bf16.msra.mxu0 0
        %1451 = vmatprep.subr.bf16.mxu0 0
        %1452 = vmatpush1.bf16.msra.mxu0 %v1438
        %1453 = vmatprep.subr.bf16.mxu0 0
        %1454 = vmatpush1.bf16.msra.mxu0 %v1437
        %1455 = vmatprep.subr.bf16.mxu0 0
        %1456 = vmatpush1.bf16.msra.mxu0 %v1436
        %1457 = vmatprep.subr.bf16.mxu0 0
        %1458 = vmatpush1.bf16.msra.mxu0 %v1435
        %1459 = vmatprep.subr.bf16.mxu0 0
        %1460 = vmatpush2.bf16.msra.mxu0 0
        %1461 = vmatprep.subr.bf16.mxu0 0
        %1462 = vmatpush2.bf16.msra.mxu0 0
        %1463 = vmatprep.subr.bf16.mxu0 0
        %1464 = vmatpush2.bf16.msra.mxu0 0
        %1465 = vmatprep.subr.bf16.mxu0 0
        %1466 = vmatpush2.bf16.msra.mxu0 0
        %1467 = vmatprep.subr.bf16.mxu0 0
        %1468 = vmatpush2.bf16.msra.mxu0 0
        %1469 = vmatprep.subr.bf16.mxu0 0
        %1470 = vmatpush2.bf16.msra.mxu0 0
        %1471 = vmatprep.subr.bf16.mxu0 0
        %1472 = vmatpush2.bf16.msra.mxu0 0
        %1473 = vmatprep.subr.bf16.mxu0 0
        %1474 = vmatpush2.bf16.msra.mxu0 0
        %1475 = vmatprep.mubr.bf16.mxu0 0
        %1476 = vmatmul.mubr.bf16.gmra.mxu0 %v378
        %v1477 = vpop.f32.mrf.mxu0
        %v1478 = vadd.f32 0.0, %v1477
        %v1479 = vpop.f32.mrf.mxu0
        %v1480 = vpop.f32.mrf.mxu0
        %v1481 = vadd.f32 0.0, %v1480
        %v1482 = vpop.f32.mrf.mxu0
        %1483 = vdwg.mxu0
        %v1484 = vpack.c.bf16 %v1026, %v1023
        %v1485 = vpack.c.bf16 %v1091, %v1088
        %v1486 = vpack.c.bf16 %v1156, %v1153
        %v1487 = vpack.c.bf16 %v1221, %v1218
        %v1488 = vpack.c.bf16 %v1286, %v1283
        %v1489 = vpack.c.bf16 %v1351, %v1348
        %v1490 = vpack.c.bf16 %v1416, %v1413
        %v1491 = vpack.c.bf16 %v1481, %v1478
        %v1492 = vld [vmem:[%s4] sm:$0xf]
        %v1493 = vld [vmem:[%s4 + $0x4] sm:$0xf]
        %v1494 = vld [vmem:[%s4 + $0x8] sm:$0xf]
        %v1495 = vld [vmem:[%s4 + $0xc] sm:$0xf]
        %v1496 = vld [vmem:[%s4 + $0x10] sm:$0xf]
        %v1497 = vld [vmem:[%s4 + $0x14] sm:$0xf]
        %v1498 = vld [vmem:[%s4 + $0x18] sm:$0xf]
        %v1499 = vld [vmem:[%s4 + $0x1c] sm:$0xf]
        %v1500 = vld [vmem:[%s4 + $0x20] sm:$0xf]
        %v1501 = vld [vmem:[%s4 + $0x24] sm:$0xf]
        %v1502 = vld [vmem:[%s4 + $0x28] sm:$0xf]
        %v1503 = vld [vmem:[%s4 + $0x2c] sm:$0xf]
        %v1504 = vld [vmem:[%s4 + $0x30] sm:$0xf]
        %v1505 = vld [vmem:[%s4 + $0x34] sm:$0xf]
        %v1506 = vld [vmem:[%s4 + $0x38] sm:$0xf]
        %v1507 = vld [vmem:[%s4 + $0x3c] sm:$0xf]
        %v1508 = vld [vmem:[%s4 + $0x40] sm:$0xf]
        %v1509 = vld [vmem:[%s4 + $0x44] sm:$0xf]
        %v1510 = vld [vmem:[%s4 + $0x48] sm:$0xf]
        %v1511 = vld [vmem:[%s4 + $0x4c] sm:$0xf]
        %v1512 = vld [vmem:[%s4 + $0x50] sm:$0xf]
        %v1513 = vld [vmem:[%s4 + $0x54] sm:$0xf]
        %v1514 = vld [vmem:[%s4 + $0x58] sm:$0xf]
        %v1515 = vld [vmem:[%s4 + $0x5c] sm:$0xf]
        %v1516 = vld [vmem:[%s4 + $0x60] sm:$0xf]
        %v1517 = vld [vmem:[%s4 + $0x64] sm:$0xf]
        %v1518 = vld [vmem:[%s4 + $0x68] sm:$0xf]
        %v1519 = vld [vmem:[%s4 + $0x6c] sm:$0xf]
        %v1520 = vld [vmem:[%s4 + $0x70] sm:$0xf]
        %v1521 = vld [vmem:[%s4 + $0x74] sm:$0xf]
        %v1522 = vld [vmem:[%s4 + $0x78] sm:$0xf]
        %v1523 = vld [vmem:[%s4 + $0x7c] sm:$0xf]
        %v1524 = vld [vmem:[%s4 + $0x80] sm:$0xf]
        %v1525 = vld [vmem:[%s4 + $0x84] sm:$0xf]
        %v1526 = vld [vmem:[%s4 + $0x88] sm:$0xf]
        %v1527 = vld [vmem:[%s4 + $0x8c] sm:$0xf]
        %v1528 = vld [vmem:[%s4 + $0x90] sm:$0xf]
        %v1529 = vld [vmem:[%s4 + $0x94] sm:$0xf]
        %v1530 = vld [vmem:[%s4 + $0x98] sm:$0xf]
        %v1531 = vld [vmem:[%s4 + $0x9c] sm:$0xf]
        %v1532 = vld [vmem:[%s4 + $0xa0] sm:$0xf]
        %v1533 = vld [vmem:[%s4 + $0xa4] sm:$0xf]
        %v1534 = vld [vmem:[%s4 + $0xa8] sm:$0xf]
        %v1535 = vld [vmem:[%s4 + $0xac] sm:$0xf]
        %v1536 = vld [vmem:[%s4 + $0xb0] sm:$0xf]
        %v1537 = vld [vmem:[%s4 + $0xb4] sm:$0xf]
        %v1538 = vld [vmem:[%s4 + $0xb8] sm:$0xf]
        %v1539 = vld [vmem:[%s4 + $0xbc] sm:$0xf]
        %v1540 = vld [vmem:[%s4 + $0xc0] sm:$0xf]
        %v1541 = vld [vmem:[%s4 + $0xc4] sm:$0xf]
        %v1542 = vld [vmem:[%s4 + $0xc8] sm:$0xf]
        %v1543 = vld [vmem:[%s4 + $0xcc] sm:$0xf]
        %v1544 = vld [vmem:[%s4 + $0xd0] sm:$0xf]
        %v1545 = vld [vmem:[%s4 + $0xd4] sm:$0xf]
        %v1546 = vld [vmem:[%s4 + $0xd8] sm:$0xf]
        %v1547 = vld [vmem:[%s4 + $0xdc] sm:$0xf]
        %v1548 = vld [vmem:[%s4 + $0xe0] sm:$0xf]
        %v1549 = vld [vmem:[%s4 + $0xe4] sm:$0xf]
        %v1550 = vld [vmem:[%s4 + $0xe8] sm:$0xf]
        %v1551 = vld [vmem:[%s4 + $0xec] sm:$0xf]
        %v1552 = vld [vmem:[%s4 + $0xf0] sm:$0xf]
        %v1553 = vld [vmem:[%s4 + $0xf4] sm:$0xf]
        %v1554 = vld [vmem:[%s4 + $0xf8] sm:$0xf]
        %v1555 = vld [vmem:[%s4 + $0xfc] sm:$0xf]
        %v1564 = vunpack.c.l.b16 %v1492
        %v1565 = vunpack.c.l.b16 %v1493
        %v1566 = vunpack.c.l.b16 %v1494
        %v1567 = vunpack.c.l.b16 %v1495
        %v1568 = vunpack.c.l.b16 %v1496
        %v1569 = vunpack.c.l.b16 %v1497
        %v1570 = vunpack.c.l.b16 %v1498
        %v1571 = vunpack.c.l.b16 %v1499
        %v1572 = vpack.c.b16 %v1565, %v1564
        %v1573 = vpack.c.b16 %v1567, %v1566
        %v1574 = vpack.c.b16 %v1569, %v1568
        %v1575 = vpack.c.b16 %v1571, %v1570
        %1580 = vmatprep.subr.bf16.mxu0 0
        %1581 = vmatpush1.bf16.msra.mxu0 0
        %1582 = vmatprep.subr.bf16.mxu0 0
        %1583 = vmatpush1.bf16.msra.mxu0 0
        %1584 = vmatprep.subr.bf16.mxu0 0
        %1585 = vmatpush1.bf16.msra.mxu0 0
        %1586 = vmatprep.subr.bf16.mxu0 0
        %1587 = vmatpush1.bf16.msra.mxu0 0
        %1588 = vmatprep.subr.bf16.mxu0 0
        %1589 = vmatpush1.bf16.msra.mxu0 %v1575
        %1590 = vmatprep.subr.bf16.mxu0 0
        %1591 = vmatpush1.bf16.msra.mxu0 %v1574
        %1592 = vmatprep.subr.bf16.mxu0 0
        %1593 = vmatpush1.bf16.msra.mxu0 %v1573
        %1594 = vmatprep.subr.bf16.mxu0 0
        %1595 = vmatpush1.bf16.msra.mxu0 %v1572
        %1596 = vmatprep.subr.bf16.mxu0 0
        %1597 = vmatpush2.bf16.msra.mxu0 0
        %1598 = vmatprep.subr.bf16.mxu0 0
        %1599 = vmatpush2.bf16.msra.mxu0 0
        %1600 = vmatprep.subr.bf16.mxu0 0
        %1601 = vmatpush2.bf16.msra.mxu0 0
        %1602 = vmatprep.subr.bf16.mxu0 0
        %1603 = vmatpush2.bf16.msra.mxu0 0
        %1604 = vmatprep.subr.bf16.mxu0 0
        %1605 = vmatpush2.bf16.msra.mxu0 0
        %1606 = vmatprep.subr.bf16.mxu0 0
        %1607 = vmatpush2.bf16.msra.mxu0 0
        %1608 = vmatprep.subr.bf16.mxu0 0
        %1609 = vmatpush2.bf16.msra.mxu0 0
        %1610 = vmatprep.subr.bf16.mxu0 0
        %1611 = vmatpush2.bf16.msra.mxu0 0
        %1612 = vmatprep.mubr.bf16.mxu0 0
        %1613 = vmatmul.mubr.bf16.gmra.mxu0 %v378
        %v1614 = vpop.f32.mrf.mxu0
        %v1615 = vadd.f32 0.0, %v1614
        %v1616 = vpop.f32.mrf.mxu0
        %v1617 = vpop.f32.mrf.mxu0
        %v1618 = vadd.f32 0.0, %v1617
        %v1619 = vpop.f32.mrf.mxu0
        %1620 = vdwg.mxu0
        %v1629 = vunpack.c.l.b16 %v1500
        %v1630 = vunpack.c.l.b16 %v1501
        %v1631 = vunpack.c.l.b16 %v1502
        %v1632 = vunpack.c.l.b16 %v1503
        %v1633 = vunpack.c.l.b16 %v1504
        %v1634 = vunpack.c.l.b16 %v1505
        %v1635 = vunpack.c.l.b16 %v1506
        %v1636 = vunpack.c.l.b16 %v1507
        %v1637 = vpack.c.b16 %v1630, %v1629
        %v1638 = vpack.c.b16 %v1632, %v1631
        %v1639 = vpack.c.b16 %v1634, %v1633
        %v1640 = vpack.c.b16 %v1636, %v1635
        %1645 = vmatprep.subr.bf16.mxu0 0
        %1646 = vmatpush1.bf16.msra.mxu0 0
        %1647 = vmatprep.subr.bf16.mxu0 0
        %1648 = vmatpush1.bf16.msra.mxu0 0
        %1649 = vmatprep.subr.bf16.mxu0 0
        %1650 = vmatpush1.bf16.msra.mxu0 0
        %1651 = vmatprep.subr.bf16.mxu0 0
        %1652 = vmatpush1.bf16.msra.mxu0 0
        %1653 = vmatprep.subr.bf16.mxu0 0
        %1654 = vmatpush1.bf16.msra.mxu0 %v1640
        %1655 = vmatprep.subr.bf16.mxu0 0
        %1656 = vmatpush1.bf16.msra.mxu0 %v1639
        %1657 = vmatprep.subr.bf16.mxu0 0
        %1658 = vmatpush1.bf16.msra.mxu0 %v1638
        %1659 = vmatprep.subr.bf16.mxu0 0
        %1660 = vmatpush1.bf16.msra.mxu0 %v1637
        %1661 = vmatprep.subr.bf16.mxu0 0
        %1662 = vmatpush2.bf16.msra.mxu0 0
        %1663 = vmatprep.subr.bf16.mxu0 0
        %1664 = vmatpush2.bf16.msra.mxu0 0
        %1665 = vmatprep.subr.bf16.mxu0 0
        %1666 = vmatpush2.bf16.msra.mxu0 0
        %1667 = vmatprep.subr.bf16.mxu0 0
        %1668 = vmatpush2.bf16.msra.mxu0 0
        %1669 = vmatprep.subr.bf16.mxu0 0
        %1670 = vmatpush2.bf16.msra.mxu0 0
        %1671 = vmatprep.subr.bf16.mxu0 0
        %1672 = vmatpush2.bf16.msra.mxu0 0
        %1673 = vmatprep.subr.bf16.mxu0 0
        %1674 = vmatpush2.bf16.msra.mxu0 0
        %1675 = vmatprep.subr.bf16.mxu0 0
        %1676 = vmatpush2.bf16.msra.mxu0 0
        %1677 = vmatprep.mubr.bf16.mxu0 0
        %1678 = vmatmul.mubr.bf16.gmra.mxu0 %v378
        %v1679 = vpop.f32.mrf.mxu0
        %v1680 = vadd.f32 0.0, %v1679
        %v1681 = vpop.f32.mrf.mxu0
        %v1682 = vpop.f32.mrf.mxu0
        %v1683 = vadd.f32 0.0, %v1682
        %v1684 = vpop.f32.mrf.mxu0
        %1685 = vdwg.mxu0
        %v1694 = vunpack.c.l.b16 %v1508
        %v1695 = vunpack.c.l.b16 %v1509
        %v1696 = vunpack.c.l.b16 %v1510
        %v1697 = vunpack.c.l.b16 %v1511
        %v1698 = vunpack.c.l.b16 %v1512
        %v1699 = vunpack.c.l.b16 %v1513
        %v1700 = vunpack.c.l.b16 %v1514
        %v1701 = vunpack.c.l.b16 %v1515
        %v1702 = vpack.c.b16 %v1695, %v1694
        %v1703 = vpack.c.b16 %v1697, %v1696
        %v1704 = vpack.c.b16 %v1699, %v1698
        %v1705 = vpack.c.b16 %v1701, %v1700
        %1710 = vmatprep.subr.bf16.mxu0 0
        %1711 = vmatpush1.bf16.msra.mxu0 0
        %1712 = vmatprep.subr.bf16.mxu0 0
        %1713 = vmatpush1.bf16.msra.mxu0 0
        %1714 = vmatprep.subr.bf16.mxu0 0
        %1715 = vmatpush1.bf16.msra.mxu0 0
        %1716 = vmatprep.subr.bf16.mxu0 0
        %1717 = vmatpush1.bf16.msra.mxu0 0
        %1718 = vmatprep.subr.bf16.mxu0 0
        %1719 = vmatpush1.bf16.msra.mxu0 %v1705
        %1720 = vmatprep.subr.bf16.mxu0 0
        %1721 = vmatpush1.bf16.msra.mxu0 %v1704
        %1722 = vmatprep.subr.bf16.mxu0 0
        %1723 = vmatpush1.bf16.msra.mxu0 %v1703
        %1724 = vmatprep.subr.bf16.mxu0 0
        %1725 = vmatpush1.bf16.msra.mxu0 %v1702
        %1726 = vmatprep.subr.bf16.mxu0 0
        %1727 = vmatpush2.bf16.msra.mxu0 0
        %1728 = vmatprep.subr.bf16.mxu0 0
        %1729 = vmatpush2.bf16.msra.mxu0 0
        %1730 = vmatprep.subr.bf16.mxu0 0
        %1731 = vmatpush2.bf16.msra.mxu0 0
        %1732 = vmatprep.subr.bf16.mxu0 0
        %1733 = vmatpush2.bf16.msra.mxu0 0
        %1734 = vmatprep.subr.bf16.mxu0 0
        %1735 = vmatpush2.bf16.msra.mxu0 0
        %1736 = vmatprep.subr.bf16.mxu0 0
        %1737 = vmatpush2.bf16.msra.mxu0 0
        %1738 = vmatprep.subr.bf16.mxu0 0
        %1739 = vmatpush2.bf16.msra.mxu0 0
        %1740 = vmatprep.subr.bf16.mxu0 0
        %1741 = vmatpush2.bf16.msra.mxu0 0
        %1742 = vmatprep.mubr.bf16.mxu0 0
        %1743 = vmatmul.mubr.bf16.gmra.mxu0 %v378
        %v1744 = vpop.f32.mrf.mxu0
        %v1745 = vadd.f32 0.0, %v1744
        %v1746 = vpop.f32.mrf.mxu0
        %v1747 = vpop.f32.mrf.mxu0
        %v1748 = vadd.f32 0.0, %v1747
        %v1749 = vpop.f32.mrf.mxu0
        %1750 = vdwg.mxu0
        %v1759 = vunpack.c.l.b16 %v1516
        %v1760 = vunpack.c.l.b16 %v1517
        %v1761 = vunpack.c.l.b16 %v1518
        %v1762 = vunpack.c.l.b16 %v1519
        %v1763 = vunpack.c.l.b16 %v1520
        %v1764 = vunpack.c.l.b16 %v1521
        %v1765 = vunpack.c.l.b16 %v1522
        %v1766 = vunpack.c.l.b16 %v1523
        %v1767 = vpack.c.b16 %v1760, %v1759
        %v1768 = vpack.c.b16 %v1762, %v1761
        %v1769 = vpack.c.b16 %v1764, %v1763
        %v1770 = vpack.c.b16 %v1766, %v1765
        %1775 = vmatprep.subr.bf16.mxu0 0
        %1776 = vmatpush1.bf16.msra.mxu0 0
        %1777 = vmatprep.subr.bf16.mxu0 0
        %1778 = vmatpush1.bf16.msra.mxu0 0
        %1779 = vmatprep.subr.bf16.mxu0 0
        %1780 = vmatpush1.bf16.msra.mxu0 0
        %1781 = vmatprep.subr.bf16.mxu0 0
        %1782 = vmatpush1.bf16.msra.mxu0 0
        %1783 = vmatprep.subr.bf16.mxu0 0
        %1784 = vmatpush1.bf16.msra.mxu0 %v1770
        %1785 = vmatprep.subr.bf16.mxu0 0
        %1786 = vmatpush1.bf16.msra.mxu0 %v1769
        %1787 = vmatprep.subr.bf16.mxu0 0
        %1788 = vmatpush1.bf16.msra.mxu0 %v1768
        %1789 = vmatprep.subr.bf16.mxu0 0
        %1790 = vmatpush1.bf16.msra.mxu0 %v1767
        %1791 = vmatprep.subr.bf16.mxu0 0
        %1792 = vmatpush2.bf16.msra.mxu0 0
        %1793 = vmatprep.subr.bf16.mxu0 0
        %1794 = vmatpush2.bf16.msra.mxu0 0
        %1795 = vmatprep.subr.bf16.mxu0 0
        %1796 = vmatpush2.bf16.msra.mxu0 0
        %1797 = vmatprep.subr.bf16.mxu0 0
        %1798 = vmatpush2.bf16.msra.mxu0 0
        %1799 = vmatprep.subr.bf16.mxu0 0
        %1800 = vmatpush2.bf16.msra.mxu0 0
        %1801 = vmatprep.subr.bf16.mxu0 0
        %1802 = vmatpush2.bf16.msra.mxu0 0
        %1803 = vmatprep.subr.bf16.mxu0 0
        %1804 = vmatpush2.bf16.msra.mxu0 0
        %1805 = vmatprep.subr.bf16.mxu0 0
        %1806 = vmatpush2.bf16.msra.mxu0 0
        %1807 = vmatprep.mubr.bf16.mxu0 0
        %1808 = vmatmul.mubr.bf16.gmra.mxu0 %v378
        %v1809 = vpop.f32.mrf.mxu0
        %v1810 = vadd.f32 0.0, %v1809
        %v1811 = vpop.f32.mrf.mxu0
        %v1812 = vpop.f32.mrf.mxu0
        %v1813 = vadd.f32 0.0, %v1812
        %v1814 = vpop.f32.mrf.mxu0
        %1815 = vdwg.mxu0
        %v1824 = vunpack.c.l.b16 %v1524
        %v1825 = vunpack.c.l.b16 %v1525
        %v1826 = vunpack.c.l.b16 %v1526
        %v1827 = vunpack.c.l.b16 %v1527
        %v1828 = vunpack.c.l.b16 %v1528
        %v1829 = vunpack.c.l.b16 %v1529
        %v1830 = vunpack.c.l.b16 %v1530
        %v1831 = vunpack.c.l.b16 %v1531
        %v1832 = vpack.c.b16 %v1825, %v1824
        %v1833 = vpack.c.b16 %v1827, %v1826
        %v1834 = vpack.c.b16 %v1829, %v1828
        %v1835 = vpack.c.b16 %v1831, %v1830
        %1840 = vmatprep.subr.bf16.mxu0 0
        %1841 = vmatpush1.bf16.msra.mxu0 0
        %1842 = vmatprep.subr.bf16.mxu0 0
        %1843 = vmatpush1.bf16.msra.mxu0 0
        %1844 = vmatprep.subr.bf16.mxu0 0
        %1845 = vmatpush1.bf16.msra.mxu0 0
        %1846 = vmatprep.subr.bf16.mxu0 0
        %1847 = vmatpush1.bf16.msra.mxu0 0
        %1848 = vmatprep.subr.bf16.mxu0 0
        %1849 = vmatpush1.bf16.msra.mxu0 %v1835
        %1850 = vmatprep.subr.bf16.mxu0 0
        %1851 = vmatpush1.bf16.msra.mxu0 %v1834
        %1852 = vmatprep.subr.bf16.mxu0 0
        %1853 = vmatpush1.bf16.msra.mxu0 %v1833
        %1854 = vmatprep.subr.bf16.mxu0 0
        %1855 = vmatpush1.bf16.msra.mxu0 %v1832
        %1856 = vmatprep.subr.bf16.mxu0 0
        %1857 = vmatpush2.bf16.msra.mxu0 0
        %1858 = vmatprep.subr.bf16.mxu0 0
        %1859 = vmatpush2.bf16.msra.mxu0 0
        %1860 = vmatprep.subr.bf16.mxu0 0
        %1861 = vmatpush2.bf16.msra.mxu0 0
        %1862 = vmatprep.subr.bf16.mxu0 0
        %1863 = vmatpush2.bf16.msra.mxu0 0
        %1864 = vmatprep.subr.bf16.mxu0 0
        %1865 = vmatpush2.bf16.msra.mxu0 0
        %1866 = vmatprep.subr.bf16.mxu0 0
        %1867 = vmatpush2.bf16.msra.mxu0 0
        %1868 = vmatprep.subr.bf16.mxu0 0
        %1869 = vmatpush2.bf16.msra.mxu0 0
        %1870 = vmatprep.subr.bf16.mxu0 0
        %1871 = vmatpush2.bf16.msra.mxu0 0
        %1872 = vmatprep.mubr.bf16.mxu0 0
        %1873 = vmatmul.mubr.bf16.gmra.mxu0 %v378
        %v1874 = vpop.f32.mrf.mxu0
        %v1875 = vadd.f32 0.0, %v1874
        %v1876 = vpop.f32.mrf.mxu0
        %v1877 = vpop.f32.mrf.mxu0
        %v1878 = vadd.f32 0.0, %v1877
        %v1879 = vpop.f32.mrf.mxu0
        %1880 = vdwg.mxu0
        %v1889 = vunpack.c.l.b16 %v1532
        %v1890 = vunpack.c.l.b16 %v1533
        %v1891 = vunpack.c.l.b16 %v1534
        %v1892 = vunpack.c.l.b16 %v1535
        %v1893 = vunpack.c.l.b16 %v1536
        %v1894 = vunpack.c.l.b16 %v1537
        %v1895 = vunpack.c.l.b16 %v1538
        %v1896 = vunpack.c.l.b16 %v1539
        %v1897 = vpack.c.b16 %v1890, %v1889
        %v1898 = vpack.c.b16 %v1892, %v1891
        %v1899 = vpack.c.b16 %v1894, %v1893
        %v1900 = vpack.c.b16 %v1896, %v1895
        %1905 = vmatprep.subr.bf16.mxu0 0
        %1906 = vmatpush1.bf16.msra.mxu0 0
        %1907 = vmatprep.subr.bf16.mxu0 0
        %1908 = vmatpush1.bf16.msra.mxu0 0
        %1909 = vmatprep.subr.bf16.mxu0 0
        %1910 = vmatpush1.bf16.msra.mxu0 0
        %1911 = vmatprep.subr.bf16.mxu0 0
        %1912 = vmatpush1.bf16.msra.mxu0 0
        %1913 = vmatprep.subr.bf16.mxu0 0
        %1914 = vmatpush1.bf16.msra.mxu0 %v1900
        %1915 = vmatprep.subr.bf16.mxu0 0
        %1916 = vmatpush1.bf16.msra.mxu0 %v1899
        %1917 = vmatprep.subr.bf16.mxu0 0
        %1918 = vmatpush1.bf16.msra.mxu0 %v1898
        %1919 = vmatprep.subr.bf16.mxu0 0
        %1920 = vmatpush1.bf16.msra.mxu0 %v1897
        %1921 = vmatprep.subr.bf16.mxu0 0
        %1922 = vmatpush2.bf16.msra.mxu0 0
        %1923 = vmatprep.subr.bf16.mxu0 0
        %1924 = vmatpush2.bf16.msra.mxu0 0
        %1925 = vmatprep.subr.bf16.mxu0 0
        %1926 = vmatpush2.bf16.msra.mxu0 0
        %1927 = vmatprep.subr.bf16.mxu0 0
        %1928 = vmatpush2.bf16.msra.mxu0 0
        %1929 = vmatprep.subr.bf16.mxu0 0
        %1930 = vmatpush2.bf16.msra.mxu0 0
        %1931 = vmatprep.subr.bf16.mxu0 0
        %1932 = vmatpush2.bf16.msra.mxu0 0
        %1933 = vmatprep.subr.bf16.mxu0 0
        %1934 = vmatpush2.bf16.msra.mxu0 0
        %1935 = vmatprep.subr.bf16.mxu0 0
        %1936 = vmatpush2.bf16.msra.mxu0 0
        %1937 = vmatprep.mubr.bf16.mxu0 0
        %1938 = vmatmul.mubr.bf16.gmra.mxu0 %v378
        %v1939 = vpop.f32.mrf.mxu0
        %v1940 = vadd.f32 0.0, %v1939
        %v1941 = vpop.f32.mrf.mxu0
        %v1942 = vpop.f32.mrf.mxu0
        %v1943 = vadd.f32 0.0, %v1942
        %v1944 = vpop.f32.mrf.mxu0
        %1945 = vdwg.mxu0
        %v1954 = vunpack.c.l.b16 %v1540
        %v1955 = vunpack.c.l.b16 %v1541
        %v1956 = vunpack.c.l.b16 %v1542
        %v1957 = vunpack.c.l.b16 %v1543
        %v1958 = vunpack.c.l.b16 %v1544
        %v1959 = vunpack.c.l.b16 %v1545
        %v1960 = vunpack.c.l.b16 %v1546
        %v1961 = vunpack.c.l.b16 %v1547
        %v1962 = vpack.c.b16 %v1955, %v1954
        %v1963 = vpack.c.b16 %v1957, %v1956
        %v1964 = vpack.c.b16 %v1959, %v1958
        %v1965 = vpack.c.b16 %v1961, %v1960
        %1970 = vmatprep.subr.bf16.mxu0 0
        %1971 = vmatpush1.bf16.msra.mxu0 0
        %1972 = vmatprep.subr.bf16.mxu0 0
        %1973 = vmatpush1.bf16.msra.mxu0 0
        %1974 = vmatprep.subr.bf16.mxu0 0
        %1975 = vmatpush1.bf16.msra.mxu0 0
        %1976 = vmatprep.subr.bf16.mxu0 0
        %1977 = vmatpush1.bf16.msra.mxu0 0
        %1978 = vmatprep.subr.bf16.mxu0 0
        %1979 = vmatpush1.bf16.msra.mxu0 %v1965
        %1980 = vmatprep.subr.bf16.mxu0 0
        %1981 = vmatpush1.bf16.msra.mxu0 %v1964
        %1982 = vmatprep.subr.bf16.mxu0 0
        %1983 = vmatpush1.bf16.msra.mxu0 %v1963
        %1984 = vmatprep.subr.bf16.mxu0 0
        %1985 = vmatpush1.bf16.msra.mxu0 %v1962
        %1986 = vmatprep.subr.bf16.mxu0 0
        %1987 = vmatpush2.bf16.msra.mxu0 0
        %1988 = vmatprep.subr.bf16.mxu0 0
        %1989 = vmatpush2.bf16.msra.mxu0 0
        %1990 = vmatprep.subr.bf16.mxu0 0
        %1991 = vmatpush2.bf16.msra.mxu0 0
        %1992 = vmatprep.subr.bf16.mxu0 0
        %1993 = vmatpush2.bf16.msra.mxu0 0
        %1994 = vmatprep.subr.bf16.mxu0 0
        %1995 = vmatpush2.bf16.msra.mxu0 0
        %1996 = vmatprep.subr.bf16.mxu0 0
        %1997 = vmatpush2.bf16.msra.mxu0 0
        %1998 = vmatprep.subr.bf16.mxu0 0
        %1999 = vmatpush2.bf16.msra.mxu0 0
        %2000 = vmatprep.subr.bf16.mxu0 0
        %2001 = vmatpush2.bf16.msra.mxu0 0
        %2002 = vmatprep.mubr.bf16.mxu0 0
        %2003 = vmatmul.mubr.bf16.gmra.mxu0 %v378
        %v2004 = vpop.f32.mrf.mxu0
        %v2005 = vadd.f32 0.0, %v2004
        %v2006 = vpop.f32.mrf.mxu0
        %v2007 = vpop.f32.mrf.mxu0
        %v2008 = vadd.f32 0.0, %v2007
        %v2009 = vpop.f32.mrf.mxu0
        %2010 = vdwg.mxu0
        %v2019 = vunpack.c.l.b16 %v1548
        %v2020 = vunpack.c.l.b16 %v1549
        %v2021 = vunpack.c.l.b16 %v1550
        %v2022 = vunpack.c.l.b16 %v1551
        %v2023 = vunpack.c.l.b16 %v1552
        %v2024 = vunpack.c.l.b16 %v1553
        %v2025 = vunpack.c.l.b16 %v1554
        %v2026 = vunpack.c.l.b16 %v1555
        %v2027 = vpack.c.b16 %v2020, %v2019
        %v2028 = vpack.c.b16 %v2022, %v2021
        %v2029 = vpack.c.b16 %v2024, %v2023
        %v2030 = vpack.c.b16 %v2026, %v2025
        %2035 = vmatprep.subr.bf16.mxu0 0
        %2036 = vmatpush1.bf16.msra.mxu0 0
        %2037 = vmatprep.subr.bf16.mxu0 0
        %2038 = vmatpush1.bf16.msra.mxu0 0
        %2039 = vmatprep.subr.bf16.mxu0 0
        %2040 = vmatpush1.bf16.msra.mxu0 0
        %2041 = vmatprep.subr.bf16.mxu0 0
        %2042 = vmatpush1.bf16.msra.mxu0 0
        %2043 = vmatprep.subr.bf16.mxu0 0
        %2044 = vmatpush1.bf16.msra.mxu0 %v2030
        %2045 = vmatprep.subr.bf16.mxu0 0
        %2046 = vmatpush1.bf16.msra.mxu0 %v2029
        %2047 = vmatprep.subr.bf16.mxu0 0
        %2048 = vmatpush1.bf16.msra.mxu0 %v2028
        %2049 = vmatprep.subr.bf16.mxu0 0
        %2050 = vmatpush1.bf16.msra.mxu0 %v2027
        %2051 = vmatprep.subr.bf16.mxu0 0
        %2052 = vmatpush2.bf16.msra.mxu0 0
        %2053 = vmatprep.subr.bf16.mxu0 0
        %2054 = vmatpush2.bf16.msra.mxu0 0
        %2055 = vmatprep.subr.bf16.mxu0 0
        %2056 = vmatpush2.bf16.msra.mxu0 0
        %2057 = vmatprep.subr.bf16.mxu0 0
        %2058 = vmatpush2.bf16.msra.mxu0 0
        %2059 = vmatprep.subr.bf16.mxu0 0
        %2060 = vmatpush2.bf16.msra.mxu0 0
        %2061 = vmatprep.subr.bf16.mxu0 0
        %2062 = vmatpush2.bf16.msra.mxu0 0
        %2063 = vmatprep.subr.bf16.mxu0 0
        %2064 = vmatpush2.bf16.msra.mxu0 0
        %2065 = vmatprep.subr.bf16.mxu0 0
        %2066 = vmatpush2.bf16.msra.mxu0 0
        %2067 = vmatprep.mubr.bf16.mxu0 0
        %2068 = vmatmul.mubr.bf16.gmra.mxu0 %v378
        %v2069 = vpop.f32.mrf.mxu0
        %v2070 = vadd.f32 0.0, %v2069
        %v2071 = vpop.f32.mrf.mxu0
        %v2072 = vpop.f32.mrf.mxu0
        %v2073 = vadd.f32 0.0, %v2072
        %v2074 = vpop.f32.mrf.mxu0
        %2075 = vdwg.mxu0
        %v2076 = vpack.c.bf16 %v1618, %v1615
        %v2077 = vpack.c.bf16 %v1683, %v1680
        %v2078 = vpack.c.bf16 %v1748, %v1745
        %v2079 = vpack.c.bf16 %v1813, %v1810
        %v2080 = vpack.c.bf16 %v1878, %v1875
        %v2081 = vpack.c.bf16 %v1943, %v1940
        %v2082 = vpack.c.bf16 %v2008, %v2005
        %v2083 = vpack.c.bf16 %v2073, %v2070
        %v2084 = vld [vmem:[%s1] sm:$0xff]
        %v2085 = vld [vmem:[%s1 + $0x8] sm:$0xff]
        %vm2086 = vcmask 64512
        %v2088 = vsel %vm2086, %v892, 0
        %v2091 = vsel %vm2086, %v1484, 0
        %2093 = vmatprep.subr.bf16.mxu0 0
        %2094 = vmatpush1.bf16.xpose.msra.mxu0 0
        %2095 = vmatprep.subr.bf16.mxu0 0
        %2096 = vmatpush1.bf16.xpose.msra.mxu0 0
        %2097 = vmatprep.subr.bf16.mxu0 0
        %2098 = vmatpush1.bf16.xpose.msra.mxu0 0
        %2099 = vmatprep.subr.bf16.mxu0 0
        %2100 = vmatpush1.bf16.xpose.msra.mxu0 0
        %2101 = vmatprep.subr.bf16.mxu0 0
        %2102 = vmatpush1.bf16.xpose.msra.mxu0 0
        %2103 = vmatprep.subr.bf16.mxu0 0
        %2104 = vmatpush1.bf16.xpose.msra.mxu0 0
        %2105 = vmatprep.subr.bf16.mxu0 0
        %2106 = vmatpush1.bf16.xpose.msra.mxu0 0
        %2107 = vmatprep.subr.bf16.mxu0 0
        %2108 = vmatpush1.bf16.xpose.msra.mxu0 %v2091
        %2109 = vmatprep.subr.bf16.mxu0 0
        %2110 = vmatpush2.bf16.xpose.msra.mxu0 0
        %2111 = vmatprep.subr.bf16.mxu0 0
        %2112 = vmatpush2.bf16.xpose.msra.mxu0 0
        %2113 = vmatprep.subr.bf16.mxu0 0
        %2114 = vmatpush2.bf16.xpose.msra.mxu0 0
        %2115 = vmatprep.subr.bf16.mxu0 0
        %2116 = vmatpush2.bf16.xpose.msra.mxu0 0
        %2117 = vmatprep.subr.bf16.mxu0 0
        %2118 = vmatpush2.bf16.xpose.msra.mxu0 0
        %2119 = vmatprep.subr.bf16.mxu0 0
        %2120 = vmatpush2.bf16.xpose.msra.mxu0 0
        %2121 = vmatprep.subr.bf16.mxu0 0
        %2122 = vmatpush2.bf16.xpose.msra.mxu0 0
        %2123 = vmatprep.subr.bf16.mxu0 0
        %2124 = vmatpush2.bf16.xpose.msra.mxu0 0
        %2125 = vmatprep.mubr.bf16.mxu0 0
        %2126 = vmatmul.mubr.bf16.gmra.mxu0 %v2088
        %v2127 = vpop.f32.mrf.mxu0
        %v2128 = vadd.f32 %v2084, %v2127
        %v2129 = vpop.f32.mrf.mxu0
        %v2130 = vpop.f32.mrf.mxu0
        %v2131 = vadd.f32 %v2085, %v2130
        %v2132 = vpop.f32.mrf.mxu0
        %2133 = vdwg.mxu0
        %v2135 = vsel %vm2086, %v893, 0
        %v2138 = vsel %vm2086, %v1485, 0
        %2140 = vmatprep.subr.bf16.mxu0 0
        %2141 = vmatpush1.bf16.xpose.msra.mxu0 0
        %2142 = vmatprep.subr.bf16.mxu0 0
        %2143 = vmatpush1.bf16.xpose.msra.mxu0 0
        %2144 = vmatprep.subr.bf16.mxu0 0
        %2145 = vmatpush1.bf16.xpose.msra.mxu0 0
        %2146 = vmatprep.subr.bf16.mxu0 0
        %2147 = vmatpush1.bf16.xpose.msra.mxu0 0
        %2148 = vmatprep.subr.bf16.mxu0 0
        %2149 = vmatpush1.bf16.xpose.msra.mxu0 0
        %2150 = vmatprep.subr.bf16.mxu0 0
        %2151 = vmatpush1.bf16.xpose.msra.mxu0 0
        %2152 = vmatprep.subr.bf16.mxu0 0
        %2153 = vmatpush1.bf16.xpose.msra.mxu0 0
        %2154 = vmatprep.subr.bf16.mxu0 0
        %2155 = vmatpush1.bf16.xpose.msra.mxu0 %v2138
        %2156 = vmatprep.subr.bf16.mxu0 0
        %2157 = vmatpush2.bf16.xpose.msra.mxu0 0
        %2158 = vmatprep.subr.bf16.mxu0 0
        %2159 = vmatpush2.bf16.xpose.msra.mxu0 0
        %2160 = vmatprep.subr.bf16.mxu0 0
        %2161 = vmatpush2.bf16.xpose.msra.mxu0 0
        %2162 = vmatprep.subr.bf16.mxu0 0
        %2163 = vmatpush2.bf16.xpose.msra.mxu0 0
        %2164 = vmatprep.subr.bf16.mxu0 0
        %2165 = vmatpush2.bf16.xpose.msra.mxu0 0
        %2166 = vmatprep.subr.bf16.mxu0 0
        %2167 = vmatpush2.bf16.xpose.msra.mxu0 0
        %2168 = vmatprep.subr.bf16.mxu0 0
        %2169 = vmatpush2.bf16.xpose.msra.mxu0 0
        %2170 = vmatprep.subr.bf16.mxu0 0
        %2171 = vmatpush2.bf16.xpose.msra.mxu0 0
        %2172 = vmatprep.mubr.bf16.mxu0 0
        %2173 = vmatmul.mubr.bf16.gmra.mxu0 %v2135
        %v2174 = vpop.f32.mrf.mxu0
        %v2175 = vadd.f32 %v2084, %v2174
        %v2176 = vpop.f32.mrf.mxu0
        %v2177 = vpop.f32.mrf.mxu0
        %v2178 = vadd.f32 %v2085, %v2177
        %v2179 = vpop.f32.mrf.mxu0
        %2180 = vdwg.mxu0
        %v2182 = vsel %vm2086, %v894, 0
        %v2185 = vsel %vm2086, %v1486, 0
        %2187 = vmatprep.subr.bf16.mxu0 0
        %2188 = vmatpush1.bf16.xpose.msra.mxu0 0
        %2189 = vmatprep.subr.bf16.mxu0 0
        %2190 = vmatpush1.bf16.xpose.msra.mxu0 0
        %2191 = vmatprep.subr.bf16.mxu0 0
        %2192 = vmatpush1.bf16.xpose.msra.mxu0 0
        %2193 = vmatprep.subr.bf16.mxu0 0
        %2194 = vmatpush1.bf16.xpose.msra.mxu0 0
        %2195 = vmatprep.subr.bf16.mxu0 0
        %2196 = vmatpush1.bf16.xpose.msra.mxu0 0
        %2197 = vmatprep.subr.bf16.mxu0 0
        %2198 = vmatpush1.bf16.xpose.msra.mxu0 0
        %2199 = vmatprep.subr.bf16.mxu0 0
        %2200 = vmatpush1.bf16.xpose.msra.mxu0 0
        %2201 = vmatprep.subr.bf16.mxu0 0
        %2202 = vmatpush1.bf16.xpose.msra.mxu0 %v2185
        %2203 = vmatprep.subr.bf16.mxu0 0
        %2204 = vmatpush2.bf16.xpose.msra.mxu0 0
        %2205 = vmatprep.subr.bf16.mxu0 0
        %2206 = vmatpush2.bf16.xpose.msra.mxu0 0
        %2207 = vmatprep.subr.bf16.mxu0 0
        %2208 = vmatpush2.bf16.xpose.msra.mxu0 0
        %2209 = vmatprep.subr.bf16.mxu0 0
        %2210 = vmatpush2.bf16.xpose.msra.mxu0 0
        %2211 = vmatprep.subr.bf16.mxu0 0
        %2212 = vmatpush2.bf16.xpose.msra.mxu0 0
        %2213 = vmatprep.subr.bf16.mxu0 0
        %2214 = vmatpush2.bf16.xpose.msra.mxu0 0
        %2215 = vmatprep.subr.bf16.mxu0 0
        %2216 = vmatpush2.bf16.xpose.msra.mxu0 0
        %2217 = vmatprep.subr.bf16.mxu0 0
        %2218 = vmatpush2.bf16.xpose.msra.mxu0 0
        %2219 = vmatprep.mubr.bf16.mxu0 0
        %2220 = vmatmul.mubr.bf16.gmra.mxu0 %v2182
        %v2221 = vpop.f32.mrf.mxu0
        %v2222 = vadd.f32 %v2084, %v2221
        %v2223 = vpop.f32.mrf.mxu0
        %v2224 = vpop.f32.mrf.mxu0
        %v2225 = vadd.f32 %v2085, %v2224
        %v2226 = vpop.f32.mrf.mxu0
        %2227 = vdwg.mxu0
        %v2229 = vsel %vm2086, %v895, 0
        %v2232 = vsel %vm2086, %v1487, 0
        %2234 = vmatprep.subr.bf16.mxu0 0
        %2235 = vmatpush1.bf16.xpose.msra.mxu0 0
        %2236 = vmatprep.subr.bf16.mxu0 0
        %2237 = vmatpush1.bf16.xpose.msra.mxu0 0
        %2238 = vmatprep.subr.bf16.mxu0 0
        %2239 = vmatpush1.bf16.xpose.msra.mxu0 0
        %2240 = vmatprep.subr.bf16.mxu0 0
        %2241 = vmatpush1.bf16.xpose.msra.mxu0 0
        %2242 = vmatprep.subr.bf16.mxu0 0
        %2243 = vmatpush1.bf16.xpose.msra.mxu0 0
        %2244 = vmatprep.subr.bf16.mxu0 0
        %2245 = vmatpush1.bf16.xpose.msra.mxu0 0
        %2246 = vmatprep.subr.bf16.mxu0 0
        %2247 = vmatpush1.bf16.xpose.msra.mxu0 0
        %2248 = vmatprep.subr.bf16.mxu0 0
        %2249 = vmatpush1.bf16.xpose.msra.mxu0 %v2232
        %2250 = vmatprep.subr.bf16.mxu0 0
        %2251 = vmatpush2.bf16.xpose.msra.mxu0 0
        %2252 = vmatprep.subr.bf16.mxu0 0
        %2253 = vmatpush2.bf16.xpose.msra.mxu0 0
        %2254 = vmatprep.subr.bf16.mxu0 0
        %2255 = vmatpush2.bf16.xpose.msra.mxu0 0
        %2256 = vmatprep.subr.bf16.mxu0 0
        %2257 = vmatpush2.bf16.xpose.msra.mxu0 0
        %2258 = vmatprep.subr.bf16.mxu0 0
        %2259 = vmatpush2.bf16.xpose.msra.mxu0 0
        %2260 = vmatprep.subr.bf16.mxu0 0
        %2261 = vmatpush2.bf16.xpose.msra.mxu0 0
        %2262 = vmatprep.subr.bf16.mxu0 0
        %2263 = vmatpush2.bf16.xpose.msra.mxu0 0
        %2264 = vmatprep.subr.bf16.mxu0 0
        %2265 = vmatpush2.bf16.xpose.msra.mxu0 0
        %2266 = vmatprep.mubr.bf16.mxu0 0
        %2267 = vmatmul.mubr.bf16.gmra.mxu0 %v2229
        %v2268 = vpop.f32.mrf.mxu0
        %v2269 = vadd.f32 %v2084, %v2268
        %v2270 = vpop.f32.mrf.mxu0
        %v2271 = vpop.f32.mrf.mxu0
        %v2272 = vadd.f32 %v2085, %v2271
        %v2273 = vpop.f32.mrf.mxu0
        %2274 = vdwg.mxu0
        %v2276 = vsel %vm2086, %v896, 0
        %v2279 = vsel %vm2086, %v1488, 0
        %2281 = vmatprep.subr.bf16.mxu0 0
        %2282 = vmatpush1.bf16.xpose.msra.mxu0 0
        %2283 = vmatprep.subr.bf16.mxu0 0
        %2284 = vmatpush1.bf16.xpose.msra.mxu0 0
        %2285 = vmatprep.subr.bf16.mxu0 0
        %2286 = vmatpush1.bf16.xpose.msra.mxu0 0
        %2287 = vmatprep.subr.bf16.mxu0 0
        %2288 = vmatpush1.bf16.xpose.msra.mxu0 0
        %2289 = vmatprep.subr.bf16.mxu0 0
        %2290 = vmatpush1.bf16.xpose.msra.mxu0 0
        %2291 = vmatprep.subr.bf16.mxu0 0
        %2292 = vmatpush1.bf16.xpose.msra.mxu0 0
        %2293 = vmatprep.subr.bf16.mxu0 0
        %2294 = vmatpush1.bf16.xpose.msra.mxu0 0
        %2295 = vmatprep.subr.bf16.mxu0 0
        %2296 = vmatpush1.bf16.xpose.msra.mxu0 %v2279
        %2297 = vmatprep.subr.bf16.mxu0 0
        %2298 = vmatpush2.bf16.xpose.msra.mxu0 0
        %2299 = vmatprep.subr.bf16.mxu0 0
        %2300 = vmatpush2.bf16.xpose.msra.mxu0 0
        %2301 = vmatprep.subr.bf16.mxu0 0
        %2302 = vmatpush2.bf16.xpose.msra.mxu0 0
        %2303 = vmatprep.subr.bf16.mxu0 0
        %2304 = vmatpush2.bf16.xpose.msra.mxu0 0
        %2305 = vmatprep.subr.bf16.mxu0 0
        %2306 = vmatpush2.bf16.xpose.msra.mxu0 0
        %2307 = vmatprep.subr.bf16.mxu0 0
        %2308 = vmatpush2.bf16.xpose.msra.mxu0 0
        %2309 = vmatprep.subr.bf16.mxu0 0
        %2310 = vmatpush2.bf16.xpose.msra.mxu0 0
        %2311 = vmatprep.subr.bf16.mxu0 0
        %2312 = vmatpush2.bf16.xpose.msra.mxu0 0
        %2313 = vmatprep.mubr.bf16.mxu0 0
        %2314 = vmatmul.mubr.bf16.gmra.mxu0 %v2276
        %v2315 = vpop.f32.mrf.mxu0
        %v2316 = vadd.f32 %v2084, %v2315
        %v2317 = vpop.f32.mrf.mxu0
        %v2318 = vpop.f32.mrf.mxu0
        %v2319 = vadd.f32 %v2085, %v2318
        %v2320 = vpop.f32.mrf.mxu0
        %2321 = vdwg.mxu0
        %v2323 = vsel %vm2086, %v897, 0
        %v2326 = vsel %vm2086, %v1489, 0
        %2328 = vmatprep.subr.bf16.mxu0 0
        %2329 = vmatpush1.bf16.xpose.msra.mxu0 0
        %2330 = vmatprep.subr.bf16.mxu0 0
        %2331 = vmatpush1.bf16.xpose.msra.mxu0 0
        %2332 = vmatprep.subr.bf16.mxu0 0
        %2333 = vmatpush1.bf16.xpose.msra.mxu0 0
        %2334 = vmatprep.subr.bf16.mxu0 0
        %2335 = vmatpush1.bf16.xpose.msra.mxu0 0
        %2336 = vmatprep.subr.bf16.mxu0 0
        %2337 = vmatpush1.bf16.xpose.msra.mxu0 0
        %2338 = vmatprep.subr.bf16.mxu0 0
        %2339 = vmatpush1.bf16.xpose.msra.mxu0 0
        %2340 = vmatprep.subr.bf16.mxu0 0
        %2341 = vmatpush1.bf16.xpose.msra.mxu0 0
        %2342 = vmatprep.subr.bf16.mxu0 0
        %2343 = vmatpush1.bf16.xpose.msra.mxu0 %v2326
        %2344 = vmatprep.subr.bf16.mxu0 0
        %2345 = vmatpush2.bf16.xpose.msra.mxu0 0
        %2346 = vmatprep.subr.bf16.mxu0 0
        %2347 = vmatpush2.bf16.xpose.msra.mxu0 0
        %2348 = vmatprep.subr.bf16.mxu0 0
        %2349 = vmatpush2.bf16.xpose.msra.mxu0 0
        %2350 = vmatprep.subr.bf16.mxu0 0
        %2351 = vmatpush2.bf16.xpose.msra.mxu0 0
        %2352 = vmatprep.subr.bf16.mxu0 0
        %2353 = vmatpush2.bf16.xpose.msra.mxu0 0
        %2354 = vmatprep.subr.bf16.mxu0 0
        %2355 = vmatpush2.bf16.xpose.msra.mxu0 0
        %2356 = vmatprep.subr.bf16.mxu0 0
        %2357 = vmatpush2.bf16.xpose.msra.mxu0 0
        %2358 = vmatprep.subr.bf16.mxu0 0
        %2359 = vmatpush2.bf16.xpose.msra.mxu0 0
        %2360 = vmatprep.mubr.bf16.mxu0 0
        %2361 = vmatmul.mubr.bf16.gmra.mxu0 %v2323
        %v2362 = vpop.f32.mrf.mxu0
        %v2363 = vadd.f32 %v2084, %v2362
        %v2364 = vpop.f32.mrf.mxu0
        %v2365 = vpop.f32.mrf.mxu0
        %v2366 = vadd.f32 %v2085, %v2365
        %v2367 = vpop.f32.mrf.mxu0
        %2368 = vdwg.mxu0
        %v2370 = vsel %vm2086, %v898, 0
        %v2373 = vsel %vm2086, %v1490, 0
        %2375 = vmatprep.subr.bf16.mxu0 0
        %2376 = vmatpush1.bf16.xpose.msra.mxu0 0
        %2377 = vmatprep.subr.bf16.mxu0 0
        %2378 = vmatpush1.bf16.xpose.msra.mxu0 0
        %2379 = vmatprep.subr.bf16.mxu0 0
        %2380 = vmatpush1.bf16.xpose.msra.mxu0 0
        %2381 = vmatprep.subr.bf16.mxu0 0
        %2382 = vmatpush1.bf16.xpose.msra.mxu0 0
        %2383 = vmatprep.subr.bf16.mxu0 0
        %2384 = vmatpush1.bf16.xpose.msra.mxu0 0
        %2385 = vmatprep.subr.bf16.mxu0 0
        %2386 = vmatpush1.bf16.xpose.msra.mxu0 0
        %2387 = vmatprep.subr.bf16.mxu0 0
        %2388 = vmatpush1.bf16.xpose.msra.mxu0 0
        %2389 = vmatprep.subr.bf16.mxu0 0
        %2390 = vmatpush1.bf16.xpose.msra.mxu0 %v2373
        %2391 = vmatprep.subr.bf16.mxu0 0
        %2392 = vmatpush2.bf16.xpose.msra.mxu0 0
        %2393 = vmatprep.subr.bf16.mxu0 0
        %2394 = vmatpush2.bf16.xpose.msra.mxu0 0
        %2395 = vmatprep.subr.bf16.mxu0 0
        %2396 = vmatpush2.bf16.xpose.msra.mxu0 0
        %2397 = vmatprep.subr.bf16.mxu0 0
        %2398 = vmatpush2.bf16.xpose.msra.mxu0 0
        %2399 = vmatprep.subr.bf16.mxu0 0
        %2400 = vmatpush2.bf16.xpose.msra.mxu0 0
        %2401 = vmatprep.subr.bf16.mxu0 0
        %2402 = vmatpush2.bf16.xpose.msra.mxu0 0
        %2403 = vmatprep.subr.bf16.mxu0 0
        %2404 = vmatpush2.bf16.xpose.msra.mxu0 0
        %2405 = vmatprep.subr.bf16.mxu0 0
        %2406 = vmatpush2.bf16.xpose.msra.mxu0 0
        %2407 = vmatprep.mubr.bf16.mxu0 0
        %2408 = vmatmul.mubr.bf16.gmra.mxu0 %v2370
        %v2409 = vpop.f32.mrf.mxu0
        %v2410 = vadd.f32 %v2084, %v2409
        %v2411 = vpop.f32.mrf.mxu0
        %v2412 = vpop.f32.mrf.mxu0
        %v2413 = vadd.f32 %v2085, %v2412
        %v2414 = vpop.f32.mrf.mxu0
        %2415 = vdwg.mxu0
        %v2417 = vsel %vm2086, %v899, 0
        %v2420 = vsel %vm2086, %v1491, 0
        %2422 = vmatprep.subr.bf16.mxu0 0
        %2423 = vmatpush1.bf16.xpose.msra.mxu0 0
        %2424 = vmatprep.subr.bf16.mxu0 0
        %2425 = vmatpush1.bf16.xpose.msra.mxu0 0
        %2426 = vmatprep.subr.bf16.mxu0 0
        %2427 = vmatpush1.bf16.xpose.msra.mxu0 0
        %2428 = vmatprep.subr.bf16.mxu0 0
        %2429 = vmatpush1.bf16.xpose.msra.mxu0 0
        %2430 = vmatprep.subr.bf16.mxu0 0
        %2431 = vmatpush1.bf16.xpose.msra.mxu0 0
        %2432 = vmatprep.subr.bf16.mxu0 0
        %2433 = vmatpush1.bf16.xpose.msra.mxu0 0
        %2434 = vmatprep.subr.bf16.mxu0 0
        %2435 = vmatpush1.bf16.xpose.msra.mxu0 0
        %2436 = vmatprep.subr.bf16.mxu0 0
        %2437 = vmatpush1.bf16.xpose.msra.mxu0 %v2420
        %2438 = vmatprep.subr.bf16.mxu0 0
        %2439 = vmatpush2.bf16.xpose.msra.mxu0 0
        %2440 = vmatprep.subr.bf16.mxu0 0
        %2441 = vmatpush2.bf16.xpose.msra.mxu0 0
        %2442 = vmatprep.subr.bf16.mxu0 0
        %2443 = vmatpush2.bf16.xpose.msra.mxu0 0
        %2444 = vmatprep.subr.bf16.mxu0 0
        %2445 = vmatpush2.bf16.xpose.msra.mxu0 0
        %2446 = vmatprep.subr.bf16.mxu0 0
        %2447 = vmatpush2.bf16.xpose.msra.mxu0 0
        %2448 = vmatprep.subr.bf16.mxu0 0
        %2449 = vmatpush2.bf16.xpose.msra.mxu0 0
        %2450 = vmatprep.subr.bf16.mxu0 0
        %2451 = vmatpush2.bf16.xpose.msra.mxu0 0
        %2452 = vmatprep.subr.bf16.mxu0 0
        %2453 = vmatpush2.bf16.xpose.msra.mxu0 0
        %2454 = vmatprep.mubr.bf16.mxu0 0
        %2455 = vmatmul.mubr.bf16.gmra.mxu0 %v2417
        %v2456 = vpop.f32.mrf.mxu0
        %v2457 = vadd.f32 %v2084, %v2456
        %v2458 = vpop.f32.mrf.mxu0
        %v2459 = vpop.f32.mrf.mxu0
        %v2460 = vadd.f32 %v2085, %v2459
        %v2461 = vpop.f32.mrf.mxu0
        %2462 = vdwg.mxu0
        %vm2463 = vcmask 130048
        %v2464 = vsel %vm2463, %v2128, -inf
        %2465 = vmax.xlane.f32.xlu0 %v2464
        %v2466 = vpop.xlane.xlu0 %2465
        %v2467 = vsel %vm2463, %v2131, -inf
        %2468 = vmax.xlane.f32.xlu0 %v2467
        %v2469 = vpop.xlane.xlu0 %2468
        %v2470 = vsel %vm2463, %v2175, -inf
        %2471 = vmax.xlane.f32.xlu0 %v2470
        %v2472 = vpop.xlane.xlu0 %2471
        %v2473 = vsel %vm2463, %v2178, -inf
        %2474 = vmax.xlane.f32.xlu0 %v2473
        %v2475 = vpop.xlane.xlu0 %2474
        %v2476 = vsel %vm2463, %v2222, -inf
        %2477 = vmax.xlane.f32.xlu0 %v2476
        %v2478 = vpop.xlane.xlu0 %2477
        %v2479 = vsel %vm2463, %v2225, -inf
        %2480 = vmax.xlane.f32.xlu0 %v2479
        %v2481 = vpop.xlane.xlu0 %2480
        %v2482 = vsel %vm2463, %v2269, -inf
        %2483 = vmax.xlane.f32.xlu0 %v2482
        %v2484 = vpop.xlane.xlu0 %2483
        %v2485 = vsel %vm2463, %v2272, -inf
        %2486 = vmax.xlane.f32.xlu0 %v2485
        %v2487 = vpop.xlane.xlu0 %2486
        %v2488 = vsel %vm2463, %v2316, -inf
        %2489 = vmax.xlane.f32.xlu0 %v2488
        %v2490 = vpop.xlane.xlu0 %2489
        %v2491 = vsel %vm2463, %v2319, -inf
        %2492 = vmax.xlane.f32.xlu0 %v2491
        %v2493 = vpop.xlane.xlu0 %2492
        %v2494 = vsel %vm2463, %v2363, -inf
        %2495 = vmax.xlane.f32.xlu0 %v2494
        %v2496 = vpop.xlane.xlu0 %2495
        %v2497 = vsel %vm2463, %v2366, -inf
        %2498 = vmax.xlane.f32.xlu0 %v2497
        %v2499 = vpop.xlane.xlu0 %2498
        %v2500 = vsel %vm2463, %v2410, -inf
        %2501 = vmax.xlane.f32.xlu0 %v2500
        %v2502 = vpop.xlane.xlu0 %2501
        %v2503 = vsel %vm2463, %v2413, -inf
        %2504 = vmax.xlane.f32.xlu0 %v2503
        %v2505 = vpop.xlane.xlu0 %2504
        %v2506 = vsel %vm2463, %v2457, -inf
        %2507 = vmax.xlane.f32.xlu0 %v2506
        %v2508 = vpop.xlane.xlu0 %2507
        %v2509 = vsel %vm2463, %v2460, -inf
        %2510 = vmax.xlane.f32.xlu0 %v2509
        %v2511 = vpop.xlane.xlu0 %2510
        %v2512 = vsub.f32 %v2128, %v2466
        %v2513 = vsub.f32 %v2131, %v2469
        %v2514 = vsub.f32 %v2175, %v2472
        %v2515 = vsub.f32 %v2178, %v2475
        %v2516 = vsub.f32 %v2222, %v2478
        %v2517 = vsub.f32 %v2225, %v2481
        %v2518 = vsub.f32 %v2269, %v2484
        %v2519 = vsub.f32 %v2272, %v2487
        %v2520 = vsub.f32 %v2316, %v2490
        %v2521 = vsub.f32 %v2319, %v2493
        %v2522 = vsub.f32 %v2363, %v2496
        %v2523 = vsub.f32 %v2366, %v2499
        %v2524 = vsub.f32 %v2410, %v2502
        %v2525 = vsub.f32 %v2413, %v2505
        %v2526 = vsub.f32 %v2457, %v2508
        %v2527 = vsub.f32 %v2460, %v2511
        %v2528 = vmul.f32 %v2512, 1.442695
        %v2529 = vpow.pop %v2528
        %v2530 = vmul.f32 %v2513, 1.442695
        %v2531 = vpow.pop %v2530
        %v2532 = vmul.f32 %v2514, 1.442695
        %v2533 = vpow.pop %v2532
        %v2534 = vmul.f32 %v2515, 1.442695
        %v2535 = vpow.pop %v2534
        %v2536 = vmul.f32 %v2516, 1.442695
        %v2537 = vpow.pop %v2536
        %v2538 = vmul.f32 %v2517, 1.442695
        %v2539 = vpow.pop %v2538
        %v2540 = vmul.f32 %v2518, 1.442695
        %v2541 = vpow.pop %v2540
        %v2542 = vmul.f32 %v2519, 1.442695
        %v2543 = vpow.pop %v2542
        %v2544 = vmul.f32 %v2520, 1.442695
        %v2545 = vpow.pop %v2544
        %v2546 = vmul.f32 %v2521, 1.442695
        %v2547 = vpow.pop %v2546
        %v2548 = vmul.f32 %v2522, 1.442695
        %v2549 = vpow.pop %v2548
        %v2550 = vmul.f32 %v2523, 1.442695
        %v2551 = vpow.pop %v2550
        %v2552 = vmul.f32 %v2524, 1.442695
        %v2553 = vpow.pop %v2552
        %v2554 = vmul.f32 %v2525, 1.442695
        %v2555 = vpow.pop %v2554
        %v2556 = vmul.f32 %v2526, 1.442695
        %v2557 = vpow.pop %v2556
        %v2558 = vmul.f32 %v2527, 1.442695
        %v2559 = vpow.pop %v2558
        %v2560 = vsel %vm2463, %v2529, 0.0
        %2561 = vadd.xlane.f32.xlu0 %v2560
        %v2562 = vpop.xlane.xlu0 %2561
        %v2563 = vsel %vm2463, %v2531, 0.0
        %2564 = vadd.xlane.f32.xlu0 %v2563
        %v2565 = vpop.xlane.xlu0 %2564
        %v2566 = vsel %vm2463, %v2533, 0.0
        %2567 = vadd.xlane.f32.xlu0 %v2566
        %v2568 = vpop.xlane.xlu0 %2567
        %v2569 = vsel %vm2463, %v2535, 0.0
        %2570 = vadd.xlane.f32.xlu0 %v2569
        %v2571 = vpop.xlane.xlu0 %2570
        %v2572 = vsel %vm2463, %v2537, 0.0
        %2573 = vadd.xlane.f32.xlu0 %v2572
        %v2574 = vpop.xlane.xlu0 %2573
        %v2575 = vsel %vm2463, %v2539, 0.0
        %2576 = vadd.xlane.f32.xlu0 %v2575
        %v2577 = vpop.xlane.xlu0 %2576
        %v2578 = vsel %vm2463, %v2541, 0.0
        %2579 = vadd.xlane.f32.xlu0 %v2578
        %v2580 = vpop.xlane.xlu0 %2579
        %v2581 = vsel %vm2463, %v2543, 0.0
        %2582 = vadd.xlane.f32.xlu0 %v2581
        %v2583 = vpop.xlane.xlu0 %2582
        %v2584 = vsel %vm2463, %v2545, 0.0
        %2585 = vadd.xlane.f32.xlu0 %v2584
        %v2586 = vpop.xlane.xlu0 %2585
        %v2587 = vsel %vm2463, %v2547, 0.0
        %2588 = vadd.xlane.f32.xlu0 %v2587
        %v2589 = vpop.xlane.xlu0 %2588
        %v2590 = vsel %vm2463, %v2549, 0.0
        %2591 = vadd.xlane.f32.xlu0 %v2590
        %v2592 = vpop.xlane.xlu0 %2591
        %v2593 = vsel %vm2463, %v2551, 0.0
        %2594 = vadd.xlane.f32.xlu0 %v2593
        %v2595 = vpop.xlane.xlu0 %2594
        %v2596 = vsel %vm2463, %v2553, 0.0
        %2597 = vadd.xlane.f32.xlu0 %v2596
        %v2598 = vpop.xlane.xlu0 %2597
        %v2599 = vsel %vm2463, %v2555, 0.0
        %2600 = vadd.xlane.f32.xlu0 %v2599
        %v2601 = vpop.xlane.xlu0 %2600
        %v2602 = vsel %vm2463, %v2557, 0.0
        %2603 = vadd.xlane.f32.xlu0 %v2602
        %v2604 = vpop.xlane.xlu0 %2603
        %v2605 = vsel %vm2463, %v2559, 0.0
        %2606 = vadd.xlane.f32.xlu0 %v2605
        %v2607 = vpop.xlane.xlu0 %2606
        %v2608 = vpack.c.bf16 %v2531, %v2529
        %v2609 = vpack.c.bf16 %v2535, %v2533
        %v2610 = vpack.c.bf16 %v2539, %v2537
        %v2611 = vpack.c.bf16 %v2543, %v2541
        %v2612 = vpack.c.bf16 %v2547, %v2545
        %v2613 = vpack.c.bf16 %v2551, %v2549
        %v2614 = vpack.c.bf16 %v2555, %v2553
        %v2615 = vpack.c.bf16 %v2559, %v2557
        %v2617 = vsel %vm2463, %v2608, 0
        %2619 = vmatprep.subr.bf16.mxu0 0
        %2620 = vmatpush1.bf16.msra.mxu0 0
        %2621 = vmatprep.subr.bf16.mxu0 0
        %2622 = vmatpush1.bf16.msra.mxu0 0
        %2623 = vmatprep.subr.bf16.mxu0 0
        %2624 = vmatpush1.bf16.msra.mxu0 0
        %2625 = vmatprep.subr.bf16.mxu0 0
        %2626 = vmatpush1.bf16.msra.mxu0 0
        %2627 = vmatprep.subr.bf16.mxu0 0
        %2628 = vmatpush1.bf16.msra.mxu0 0
        %2629 = vmatprep.subr.bf16.mxu0 0
        %2630 = vmatpush1.bf16.msra.mxu0 0
        %2631 = vmatprep.subr.bf16.mxu0 0
        %2632 = vmatpush1.bf16.msra.mxu0 0
        %2633 = vmatprep.subr.bf16.mxu0 0
        %2634 = vmatpush1.bf16.msra.mxu0 %v2076
        %2635 = vmatprep.subr.bf16.mxu0 0
        %2636 = vmatpush2.bf16.msra.mxu0 0
        %2637 = vmatprep.subr.bf16.mxu0 0
        %2638 = vmatpush2.bf16.msra.mxu0 0
        %2639 = vmatprep.subr.bf16.mxu0 0
        %2640 = vmatpush2.bf16.msra.mxu0 0
        %2641 = vmatprep.subr.bf16.mxu0 0
        %2642 = vmatpush2.bf16.msra.mxu0 0
        %2643 = vmatprep.subr.bf16.mxu0 0
        %2644 = vmatpush2.bf16.msra.mxu0 0
        %2645 = vmatprep.subr.bf16.mxu0 0
        %2646 = vmatpush2.bf16.msra.mxu0 0
        %2647 = vmatprep.subr.bf16.mxu0 0
        %2648 = vmatpush2.bf16.msra.mxu0 0
        %2649 = vmatprep.subr.bf16.mxu0 0
        %2650 = vmatpush2.bf16.msra.mxu0 0
        %2651 = vmatprep.mubr.bf16.mxu0 0
        %2652 = vmatmul.mubr.bf16.gmra.mxu0 %v2617
        %v2653 = vpop.f32.mrf.mxu0
        %v2654 = vadd.f32 0.0, %v2653
        %v2655 = vpop.f32.mrf.mxu0
        %v2656 = vpop.f32.mrf.mxu0
        %v2657 = vadd.f32 0.0, %v2656
        %v2658 = vpop.f32.mrf.mxu0
        %2659 = vdwg.mxu0
        %v2661 = vsel %vm2463, %v2609, 0
        %2663 = vmatprep.subr.bf16.mxu0 0
        %2664 = vmatpush1.bf16.msra.mxu0 0
        %2665 = vmatprep.subr.bf16.mxu0 0
        %2666 = vmatpush1.bf16.msra.mxu0 0
        %2667 = vmatprep.subr.bf16.mxu0 0
        %2668 = vmatpush1.bf16.msra.mxu0 0
        %2669 = vmatprep.subr.bf16.mxu0 0
        %2670 = vmatpush1.bf16.msra.mxu0 0
        %2671 = vmatprep.subr.bf16.mxu0 0
        %2672 = vmatpush1.bf16.msra.mxu0 0
        %2673 = vmatprep.subr.bf16.mxu0 0
        %2674 = vmatpush1.bf16.msra.mxu0 0
        %2675 = vmatprep.subr.bf16.mxu0 0
        %2676 = vmatpush1.bf16.msra.mxu0 0
        %2677 = vmatprep.subr.bf16.mxu0 0
        %2678 = vmatpush1.bf16.msra.mxu0 %v2077
        %2679 = vmatprep.subr.bf16.mxu0 0
        %2680 = vmatpush2.bf16.msra.mxu0 0
        %2681 = vmatprep.subr.bf16.mxu0 0
        %2682 = vmatpush2.bf16.msra.mxu0 0
        %2683 = vmatprep.subr.bf16.mxu0 0
        %2684 = vmatpush2.bf16.msra.mxu0 0
        %2685 = vmatprep.subr.bf16.mxu0 0
        %2686 = vmatpush2.bf16.msra.mxu0 0
        %2687 = vmatprep.subr.bf16.mxu0 0
        %2688 = vmatpush2.bf16.msra.mxu0 0
        %2689 = vmatprep.subr.bf16.mxu0 0
        %2690 = vmatpush2.bf16.msra.mxu0 0
        %2691 = vmatprep.subr.bf16.mxu0 0
        %2692 = vmatpush2.bf16.msra.mxu0 0
        %2693 = vmatprep.subr.bf16.mxu0 0
        %2694 = vmatpush2.bf16.msra.mxu0 0
        %2695 = vmatprep.mubr.bf16.mxu0 0
        %2696 = vmatmul.mubr.bf16.gmra.mxu0 %v2661
        %v2697 = vpop.f32.mrf.mxu0
        %v2698 = vadd.f32 0.0, %v2697
        %v2699 = vpop.f32.mrf.mxu0
        %v2700 = vpop.f32.mrf.mxu0
        %v2701 = vadd.f32 0.0, %v2700
        %v2702 = vpop.f32.mrf.mxu0
        %2703 = vdwg.mxu0
        %v2705 = vsel %vm2463, %v2610, 0
        %2707 = vmatprep.subr.bf16.mxu0 0
        %2708 = vmatpush1.bf16.msra.mxu0 0
        %2709 = vmatprep.subr.bf16.mxu0 0
        %2710 = vmatpush1.bf16.msra.mxu0 0
        %2711 = vmatprep.subr.bf16.mxu0 0
        %2712 = vmatpush1.bf16.msra.mxu0 0
        %2713 = vmatprep.subr.bf16.mxu0 0
        %2714 = vmatpush1.bf16.msra.mxu0 0
        %2715 = vmatprep.subr.bf16.mxu0 0
        %2716 = vmatpush1.bf16.msra.mxu0 0
        %2717 = vmatprep.subr.bf16.mxu0 0
        %2718 = vmatpush1.bf16.msra.mxu0 0
        %2719 = vmatprep.subr.bf16.mxu0 0
        %2720 = vmatpush1.bf16.msra.mxu0 0
        %2721 = vmatprep.subr.bf16.mxu0 0
        %2722 = vmatpush1.bf16.msra.mxu0 %v2078
        %2723 = vmatprep.subr.bf16.mxu0 0
        %2724 = vmatpush2.bf16.msra.mxu0 0
        %2725 = vmatprep.subr.bf16.mxu0 0
        %2726 = vmatpush2.bf16.msra.mxu0 0
        %2727 = vmatprep.subr.bf16.mxu0 0
        %2728 = vmatpush2.bf16.msra.mxu0 0
        %2729 = vmatprep.subr.bf16.mxu0 0
        %2730 = vmatpush2.bf16.msra.mxu0 0
        %2731 = vmatprep.subr.bf16.mxu0 0
        %2732 = vmatpush2.bf16.msra.mxu0 0
        %2733 = vmatprep.subr.bf16.mxu0 0
        %2734 = vmatpush2.bf16.msra.mxu0 0
        %2735 = vmatprep.subr.bf16.mxu0 0
        %2736 = vmatpush2.bf16.msra.mxu0 0
        %2737 = vmatprep.subr.bf16.mxu0 0
        %2738 = vmatpush2.bf16.msra.mxu0 0
        %2739 = vmatprep.mubr.bf16.mxu0 0
        %2740 = vmatmul.mubr.bf16.gmra.mxu0 %v2705
        %v2741 = vpop.f32.mrf.mxu0
        %v2742 = vadd.f32 0.0, %v2741
        %v2743 = vpop.f32.mrf.mxu0
        %v2744 = vpop.f32.mrf.mxu0
        %v2745 = vadd.f32 0.0, %v2744
        %v2746 = vpop.f32.mrf.mxu0
        %2747 = vdwg.mxu0
        %v2749 = vsel %vm2463, %v2611, 0
        %2751 = vmatprep.subr.bf16.mxu0 0
        %2752 = vmatpush1.bf16.msra.mxu0 0
        %2753 = vmatprep.subr.bf16.mxu0 0
        %2754 = vmatpush1.bf16.msra.mxu0 0
        %2755 = vmatprep.subr.bf16.mxu0 0
        %2756 = vmatpush1.bf16.msra.mxu0 0
        %2757 = vmatprep.subr.bf16.mxu0 0
        %2758 = vmatpush1.bf16.msra.mxu0 0
        %2759 = vmatprep.subr.bf16.mxu0 0
        %2760 = vmatpush1.bf16.msra.mxu0 0
        %2761 = vmatprep.subr.bf16.mxu0 0
        %2762 = vmatpush1.bf16.msra.mxu0 0
        %2763 = vmatprep.subr.bf16.mxu0 0
        %2764 = vmatpush1.bf16.msra.mxu0 0
        %2765 = vmatprep.subr.bf16.mxu0 0
        %2766 = vmatpush1.bf16.msra.mxu0 %v2079
        %2767 = vmatprep.subr.bf16.mxu0 0
        %2768 = vmatpush2.bf16.msra.mxu0 0
        %2769 = vmatprep.subr.bf16.mxu0 0
        %2770 = vmatpush2.bf16.msra.mxu0 0
        %2771 = vmatprep.subr.bf16.mxu0 0
        %2772 = vmatpush2.bf16.msra.mxu0 0
        %2773 = vmatprep.subr.bf16.mxu0 0
        %2774 = vmatpush2.bf16.msra.mxu0 0
        %2775 = vmatprep.subr.bf16.mxu0 0
        %2776 = vmatpush2.bf16.msra.mxu0 0
        %2777 = vmatprep.subr.bf16.mxu0 0
        %2778 = vmatpush2.bf16.msra.mxu0 0
        %2779 = vmatprep.subr.bf16.mxu0 0
        %2780 = vmatpush2.bf16.msra.mxu0 0
        %2781 = vmatprep.subr.bf16.mxu0 0
        %2782 = vmatpush2.bf16.msra.mxu0 0
        %2783 = vmatprep.mubr.bf16.mxu0 0
        %2784 = vmatmul.mubr.bf16.gmra.mxu0 %v2749
        %v2785 = vpop.f32.mrf.mxu0
        %v2786 = vadd.f32 0.0, %v2785
        %v2787 = vpop.f32.mrf.mxu0
        %v2788 = vpop.f32.mrf.mxu0
        %v2789 = vadd.f32 0.0, %v2788
        %v2790 = vpop.f32.mrf.mxu0
        %2791 = vdwg.mxu0
        %v2793 = vsel %vm2463, %v2612, 0
        %2795 = vmatprep.subr.bf16.mxu0 0
        %2796 = vmatpush1.bf16.msra.mxu0 0
        %2797 = vmatprep.subr.bf16.mxu0 0
        %2798 = vmatpush1.bf16.msra.mxu0 0
        %2799 = vmatprep.subr.bf16.mxu0 0
        %2800 = vmatpush1.bf16.msra.mxu0 0
        %2801 = vmatprep.subr.bf16.mxu0 0
        %2802 = vmatpush1.bf16.msra.mxu0 0
        %2803 = vmatprep.subr.bf16.mxu0 0
        %2804 = vmatpush1.bf16.msra.mxu0 0
        %2805 = vmatprep.subr.bf16.mxu0 0
        %2806 = vmatpush1.bf16.msra.mxu0 0
        %2807 = vmatprep.subr.bf16.mxu0 0
        %2808 = vmatpush1.bf16.msra.mxu0 0
        %2809 = vmatprep.subr.bf16.mxu0 0
        %2810 = vmatpush1.bf16.msra.mxu0 %v2080
        %2811 = vmatprep.subr.bf16.mxu0 0
        %2812 = vmatpush2.bf16.msra.mxu0 0
        %2813 = vmatprep.subr.bf16.mxu0 0
        %2814 = vmatpush2.bf16.msra.mxu0 0
        %2815 = vmatprep.subr.bf16.mxu0 0
        %2816 = vmatpush2.bf16.msra.mxu0 0
        %2817 = vmatprep.subr.bf16.mxu0 0
        %2818 = vmatpush2.bf16.msra.mxu0 0
        %2819 = vmatprep.subr.bf16.mxu0 0
        %2820 = vmatpush2.bf16.msra.mxu0 0
        %2821 = vmatprep.subr.bf16.mxu0 0
        %2822 = vmatpush2.bf16.msra.mxu0 0
        %2823 = vmatprep.subr.bf16.mxu0 0
        %2824 = vmatpush2.bf16.msra.mxu0 0
        %2825 = vmatprep.subr.bf16.mxu0 0
        %2826 = vmatpush2.bf16.msra.mxu0 0
        %2827 = vmatprep.mubr.bf16.mxu0 0
        %2828 = vmatmul.mubr.bf16.gmra.mxu0 %v2793
        %v2829 = vpop.f32.mrf.mxu0
        %v2830 = vadd.f32 0.0, %v2829
        %v2831 = vpop.f32.mrf.mxu0
        %v2832 = vpop.f32.mrf.mxu0
        %v2833 = vadd.f32 0.0, %v2832
        %v2834 = vpop.f32.mrf.mxu0
        %2835 = vdwg.mxu0
        %v2837 = vsel %vm2463, %v2613, 0
        %2839 = vmatprep.subr.bf16.mxu0 0
        %2840 = vmatpush1.bf16.msra.mxu0 0
        %2841 = vmatprep.subr.bf16.mxu0 0
        %2842 = vmatpush1.bf16.msra.mxu0 0
        %2843 = vmatprep.subr.bf16.mxu0 0
        %2844 = vmatpush1.bf16.msra.mxu0 0
        %2845 = vmatprep.subr.bf16.mxu0 0
        %2846 = vmatpush1.bf16.msra.mxu0 0
        %2847 = vmatprep.subr.bf16.mxu0 0
        %2848 = vmatpush1.bf16.msra.mxu0 0
        %2849 = vmatprep.subr.bf16.mxu0 0
        %2850 = vmatpush1.bf16.msra.mxu0 0
        %2851 = vmatprep.subr.bf16.mxu0 0
        %2852 = vmatpush1.bf16.msra.mxu0 0
        %2853 = vmatprep.subr.bf16.mxu0 0
        %2854 = vmatpush1.bf16.msra.mxu0 %v2081
        %2855 = vmatprep.subr.bf16.mxu0 0
        %2856 = vmatpush2.bf16.msra.mxu0 0
        %2857 = vmatprep.subr.bf16.mxu0 0
        %2858 = vmatpush2.bf16.msra.mxu0 0
        %2859 = vmatprep.subr.bf16.mxu0 0
        %2860 = vmatpush2.bf16.msra.mxu0 0
        %2861 = vmatprep.subr.bf16.mxu0 0
        %2862 = vmatpush2.bf16.msra.mxu0 0
        %2863 = vmatprep.subr.bf16.mxu0 0
        %2864 = vmatpush2.bf16.msra.mxu0 0
        %2865 = vmatprep.subr.bf16.mxu0 0
        %2866 = vmatpush2.bf16.msra.mxu0 0
        %2867 = vmatprep.subr.bf16.mxu0 0
        %2868 = vmatpush2.bf16.msra.mxu0 0
        %2869 = vmatprep.subr.bf16.mxu0 0
        %2870 = vmatpush2.bf16.msra.mxu0 0
        %2871 = vmatprep.mubr.bf16.mxu0 0
        %2872 = vmatmul.mubr.bf16.gmra.mxu0 %v2837
        %v2873 = vpop.f32.mrf.mxu0
        %v2874 = vadd.f32 0.0, %v2873
        %v2875 = vpop.f32.mrf.mxu0
        %v2876 = vpop.f32.mrf.mxu0
        %v2877 = vadd.f32 0.0, %v2876
        %v2878 = vpop.f32.mrf.mxu0
        %2879 = vdwg.mxu0
        %v2881 = vsel %vm2463, %v2614, 0
        %2883 = vmatprep.subr.bf16.mxu0 0
        %2884 = vmatpush1.bf16.msra.mxu0 0
        %2885 = vmatprep.subr.bf16.mxu0 0
        %2886 = vmatpush1.bf16.msra.mxu0 0
        %2887 = vmatprep.subr.bf16.mxu0 0
        %2888 = vmatpush1.bf16.msra.mxu0 0
        %2889 = vmatprep.subr.bf16.mxu0 0
        %2890 = vmatpush1.bf16.msra.mxu0 0
        %2891 = vmatprep.subr.bf16.mxu0 0
        %2892 = vmatpush1.bf16.msra.mxu0 0
        %2893 = vmatprep.subr.bf16.mxu0 0
        %2894 = vmatpush1.bf16.msra.mxu0 0
        %2895 = vmatprep.subr.bf16.mxu0 0
        %2896 = vmatpush1.bf16.msra.mxu0 0
        %2897 = vmatprep.subr.bf16.mxu0 0
        %2898 = vmatpush1.bf16.msra.mxu0 %v2082
        %2899 = vmatprep.subr.bf16.mxu0 0
        %2900 = vmatpush2.bf16.msra.mxu0 0
        %2901 = vmatprep.subr.bf16.mxu0 0
        %2902 = vmatpush2.bf16.msra.mxu0 0
        %2903 = vmatprep.subr.bf16.mxu0 0
        %2904 = vmatpush2.bf16.msra.mxu0 0
        %2905 = vmatprep.subr.bf16.mxu0 0
        %2906 = vmatpush2.bf16.msra.mxu0 0
        %2907 = vmatprep.subr.bf16.mxu0 0
        %2908 = vmatpush2.bf16.msra.mxu0 0
        %2909 = vmatprep.subr.bf16.mxu0 0
        %2910 = vmatpush2.bf16.msra.mxu0 0
        %2911 = vmatprep.subr.bf16.mxu0 0
        %2912 = vmatpush2.bf16.msra.mxu0 0
        %2913 = vmatprep.subr.bf16.mxu0 0
        %2914 = vmatpush2.bf16.msra.mxu0 0
        %2915 = vmatprep.mubr.bf16.mxu0 0
        %2916 = vmatmul.mubr.bf16.gmra.mxu0 %v2881
        %v2917 = vpop.f32.mrf.mxu0
        %v2918 = vadd.f32 0.0, %v2917
        %v2919 = vpop.f32.mrf.mxu0
        %v2920 = vpop.f32.mrf.mxu0
        %v2921 = vadd.f32 0.0, %v2920
        %v2922 = vpop.f32.mrf.mxu0
        %2923 = vdwg.mxu0
        %v2925 = vsel %vm2463, %v2615, 0
        %2927 = vmatprep.subr.bf16.mxu0 0
        %2928 = vmatpush1.bf16.msra.mxu0 0
        %2929 = vmatprep.subr.bf16.mxu0 0
        %2930 = vmatpush1.bf16.msra.mxu0 0
        %2931 = vmatprep.subr.bf16.mxu0 0
        %2932 = vmatpush1.bf16.msra.mxu0 0
        %2933 = vmatprep.subr.bf16.mxu0 0
        %2934 = vmatpush1.bf16.msra.mxu0 0
        %2935 = vmatprep.subr.bf16.mxu0 0
        %2936 = vmatpush1.bf16.msra.mxu0 0
        %2937 = vmatprep.subr.bf16.mxu0 0
        %2938 = vmatpush1.bf16.msra.mxu0 0
        %2939 = vmatprep.subr.bf16.mxu0 0
        %2940 = vmatpush1.bf16.msra.mxu0 0
        %2941 = vmatprep.subr.bf16.mxu0 0
        %2942 = vmatpush1.bf16.msra.mxu0 %v2083
        %2943 = vmatprep.subr.bf16.mxu0 0
        %2944 = vmatpush2.bf16.msra.mxu0 0
        %2945 = vmatprep.subr.bf16.mxu0 0
        %2946 = vmatpush2.bf16.msra.mxu0 0
        %2947 = vmatprep.subr.bf16.mxu0 0
        %2948 = vmatpush2.bf16.msra.mxu0 0
        %2949 = vmatprep.subr.bf16.mxu0 0
        %2950 = vmatpush2.bf16.msra.mxu0 0
        %2951 = vmatprep.subr.bf16.mxu0 0
        %2952 = vmatpush2.bf16.msra.mxu0 0
        %2953 = vmatprep.subr.bf16.mxu0 0
        %2954 = vmatpush2.bf16.msra.mxu0 0
        %2955 = vmatprep.subr.bf16.mxu0 0
        %2956 = vmatpush2.bf16.msra.mxu0 0
        %2957 = vmatprep.subr.bf16.mxu0 0
        %2958 = vmatpush2.bf16.msra.mxu0 0
        %2959 = vmatprep.mubr.bf16.mxu0 0
        %2960 = vmatmul.mubr.bf16.gmra.mxu0 %v2925
        %v2961 = vpop.f32.mrf.mxu0
        %v2962 = vadd.f32 0.0, %v2961
        %v2963 = vpop.f32.mrf.mxu0
        %v2964 = vpop.f32.mrf.mxu0
        %v2965 = vadd.f32 0.0, %v2964
        %v2966 = vpop.f32.mrf.mxu0
        %2967 = vdwg.mxu0
        %v2968 = vrcp.pop %v2562
        %v2969 = vrcp.pop %v2565
        %v2970 = vrcp.pop %v2568
        %v2971 = vrcp.pop %v2571
        %v2972 = vrcp.pop %v2574
        %v2973 = vrcp.pop %v2577
        %v2974 = vrcp.pop %v2580
        %v2975 = vrcp.pop %v2583
        %v2976 = vrcp.pop %v2586
        %v2977 = vrcp.pop %v2589
        %v2978 = vrcp.pop %v2592
        %v2979 = vrcp.pop %v2595
        %v2980 = vrcp.pop %v2598
        %v2981 = vrcp.pop %v2601
        %v2982 = vrcp.pop %v2604
        %v2983 = vrcp.pop %v2607
        %v2984 = vmul.f32 %v2654, %v2968
        %v2985 = vmul.f32 %v2657, %v2969
        %v2986 = vmul.f32 %v2698, %v2970
        %v2987 = vmul.f32 %v2701, %v2971
        %v2988 = vmul.f32 %v2742, %v2972
        %v2989 = vmul.f32 %v2745, %v2973
        %v2990 = vmul.f32 %v2786, %v2974
        %v2991 = vmul.f32 %v2789, %v2975
        %v2992 = vmul.f32 %v2830, %v2976
        %v2993 = vmul.f32 %v2833, %v2977
        %v2994 = vmul.f32 %v2874, %v2978
        %v2995 = vmul.f32 %v2877, %v2979
        %v2996 = vmul.f32 %v2918, %v2980
        %v2997 = vmul.f32 %v2921, %v2981
        %v2998 = vmul.f32 %v2962, %v2982
        %v2999 = vmul.f32 %v2965, %v2983
        %v3000 = vpack.c.bf16 %v2985, %v2984
        %v3001 = vpack.c.bf16 %v2987, %v2986
        %v3002 = vpack.c.bf16 %v2989, %v2988
        %v3003 = vpack.c.bf16 %v2991, %v2990
        %v3004 = vpack.c.bf16 %v2993, %v2992
        %v3005 = vpack.c.bf16 %v2995, %v2994
        %v3006 = vpack.c.bf16 %v2997, %v2996
        %v3007 = vpack.c.bf16 %v2999, %v2998
        %v3009 = vunpack.c.l.b16 %v3000
        %v3010 = vunpack.c.h.b16 %v3000
        %v3011 = vpack.c.b16 %v3009, %v3009
        %v3012 = vpack.c.b16 %v3010, %v3010
        %vm3015 = vcmask 60416
        %3016 = vst.msk [vmem:[#allocation2] sm:$0xf] %vm3015, %v3011
        %3017 = vst.msk [vmem:[#allocation2 + $0x4] sm:$0xf] %vm3015, %v3012
        %v3019 = vunpack.c.l.b16 %v3001
        %v3020 = vunpack.c.h.b16 %v3001
        %v3021 = vpack.c.b16 %v3019, %v3019
        %v3022 = vpack.c.b16 %v3020, %v3020
        %3023 = vrot.lane.b32.xlu0 %v3021, 8
        %v3024 = vpop.permute.xlu0 %3023
        %3025 = vrot.lane.b32.xlu0 %v3022, 8
        %v3026 = vpop.permute.xlu0 %3025
        %vm3029 = vcmask 126016
        %3030 = vst.msk [vmem:[#allocation2] sm:$0xf] %vm3029, %v3024
        %3031 = vst.msk [vmem:[#allocation2 + $0x4] sm:$0xf] %vm3029, %v3026
        %v3033 = vunpack.c.l.b16 %v3002
        %v3034 = vunpack.c.h.b16 %v3002
        %v3035 = vpack.c.b16 %v3033, %v3033
        %v3036 = vpack.c.b16 %v3034, %v3034
        %3037 = vrot.lane.b32.xlu0 %v3035, 16
        %v3038 = vpop.permute.xlu0 %3037
        %3039 = vrot.lane.b32.xlu0 %v3036, 16
        %v3040 = vpop.permute.xlu0 %3039
        %vm3043 = vcmask 191616
        %3044 = vst.msk [vmem:[#allocation2] sm:$0xf] %vm3043, %v3038
        %3045 = vst.msk [vmem:[#allocation2 + $0x4] sm:$0xf] %vm3043, %v3040
        %v3047 = vunpack.c.l.b16 %v3003
        %v3048 = vunpack.c.h.b16 %v3003
        %v3049 = vpack.c.b16 %v3047, %v3047
        %v3050 = vpack.c.b16 %v3048, %v3048
        %3051 = vrot.lane.b32.xlu0 %v3049, 24
        %v3052 = vpop.permute.xlu0 %3051
        %3053 = vrot.lane.b32.xlu0 %v3050, 24
        %v3054 = vpop.permute.xlu0 %3053
        %vm3057 = vcmask 257216
        %3058 = vst.msk [vmem:[#allocation2] sm:$0xf] %vm3057, %v3052
        %3059 = vst.msk [vmem:[#allocation2 + $0x4] sm:$0xf] %vm3057, %v3054
        %v3061 = vunpack.c.l.b16 %v3004
        %v3062 = vunpack.c.h.b16 %v3004
        %v3063 = vpack.c.b16 %v3061, %v3061
        %v3064 = vpack.c.b16 %v3062, %v3062
        %3065 = vrot.lane.b32.xlu0 %v3063, 32
        %v3066 = vpop.permute.xlu0 %3065
        %3067 = vrot.lane.b32.xlu0 %v3064, 32
        %v3068 = vpop.permute.xlu0 %3067
        %vm3071 = vcmask 322816
        %3072 = vst.msk [vmem:[#allocation2] sm:$0xf] %vm3071, %v3066
        %3073 = vst.msk [vmem:[#allocation2 + $0x4] sm:$0xf] %vm3071, %v3068
        %v3075 = vunpack.c.l.b16 %v3005
        %v3076 = vunpack.c.h.b16 %v3005
        %v3077 = vpack.c.b16 %v3075, %v3075
        %v3078 = vpack.c.b16 %v3076, %v3076
        %3079 = vrot.lane.b32.xlu0 %v3077, 40
        %v3080 = vpop.permute.xlu0 %3079
        %3081 = vrot.lane.b32.xlu0 %v3078, 40
        %v3082 = vpop.permute.xlu0 %3081
        %vm3085 = vcmask 388416
        %3086 = vst.msk [vmem:[#allocation2] sm:$0xf] %vm3085, %v3080
        %3087 = vst.msk [vmem:[#allocation2 + $0x4] sm:$0xf] %vm3085, %v3082
        %v3089 = vunpack.c.l.b16 %v3006
        %v3090 = vunpack.c.h.b16 %v3006
        %v3091 = vpack.c.b16 %v3089, %v3089
        %v3092 = vpack.c.b16 %v3090, %v3090
        %3093 = vrot.lane.b32.xlu0 %v3091, 48
        %v3094 = vpop.permute.xlu0 %3093
        %3095 = vrot.lane.b32.xlu0 %v3092, 48
        %v3096 = vpop.permute.xlu0 %3095
        %vm3099 = vcmask 454016
        %3100 = vst.msk [vmem:[#allocation2] sm:$0xf] %vm3099, %v3094
        %3101 = vst.msk [vmem:[#allocation2 + $0x4] sm:$0xf] %vm3099, %v3096
        %v3103 = vunpack.c.l.b16 %v3007
        %v3104 = vunpack.c.h.b16 %v3007
        %v3105 = vpack.c.b16 %v3103, %v3103
        %v3106 = vpack.c.b16 %v3104, %v3104
        %3107 = vrot.lane.b32.xlu0 %v3105, 56
        %v3108 = vpop.permute.xlu0 %3107
        %3109 = vrot.lane.b32.xlu0 %v3106, 56
        %v3110 = vpop.permute.xlu0 %3109
        %vm3113 = vcmask 519616
        %3114 = vst.msk [vmem:[#allocation2] sm:$0xf] %vm3113, %v3108
        %3115 = vst.msk [vmem:[#allocation2 + $0x4] sm:$0xf] %vm3113, %v3110
        %v3116 = vld [vmem:[#allocation2] sm:$0xf]
        %v3117 = vld [vmem:[#allocation2 + $0x4] sm:$0xf]
        %v3118 = vld [vmem:[%s5] sm:$0xf]
        %v3119 = vld [vmem:[%s5 + $0x4] sm:$0xf]
        %v3120 = vld [vmem:[%s5 + $0x8] sm:$0xf]
        %v3121 = vld [vmem:[%s5 + $0xc] sm:$0xf]
        %v3122 = vld [vmem:[%s5 + $0x10] sm:$0xf]
        %v3123 = vld [vmem:[%s5 + $0x14] sm:$0xf]
        %v3124 = vld [vmem:[%s5 + $0x18] sm:$0xf]
        %v3125 = vld [vmem:[%s5 + $0x1c] sm:$0xf]
        %v3126 = vld [vmem:[%s6] sm:$0x1]
        %v3128 = vlaneseq
        %v3129 = vshrl.u32 %v3128, 7
        %v3130 = vsub.s32 0, %v3129
        %v3131 = vrot.slane %v3126, %v3130
        %v3135 = vunpack.c.l.b16 %v3116
        %v3136 = vunpack.c.l.b16 %v3117
        %v3137 = vpack.c.b16 %v3136, %v3135
        %v3146 = vunpack.c.l.b16 %v3118
        %v3147 = vunpack.c.l.b16 %v3119
        %v3148 = vunpack.c.l.b16 %v3120
        %v3149 = vunpack.c.l.b16 %v3121
        %v3150 = vunpack.c.l.b16 %v3122
        %v3151 = vunpack.c.l.b16 %v3123
        %v3152 = vunpack.c.l.b16 %v3124
        %v3153 = vunpack.c.l.b16 %v3125
        %v3154 = vpack.c.b16 %v3147, %v3146
        %v3155 = vpack.c.b16 %v3149, %v3148
        %v3156 = vpack.c.b16 %v3151, %v3150
        %v3157 = vpack.c.b16 %v3153, %v3152
        %v3163 = vsel %vm376, %v3137, 0
        %3165 = vmatprep.subr.bf16.mxu0 0
        %3166 = vmatpush1.bf16.msra.mxu0 0
        %3167 = vmatprep.subr.bf16.mxu0 0
        %3168 = vmatpush1.bf16.msra.mxu0 0
        %3169 = vmatprep.subr.bf16.mxu0 0
        %3170 = vmatpush1.bf16.msra.mxu0 0
        %3171 = vmatprep.subr.bf16.mxu0 0
        %3172 = vmatpush1.bf16.msra.mxu0 0
        %3173 = vmatprep.subr.bf16.mxu0 0
        %3174 = vmatpush1.bf16.msra.mxu0 %v3157
        %3175 = vmatprep.subr.bf16.mxu0 0
        %3176 = vmatpush1.bf16.msra.mxu0 %v3156
        %3177 = vmatprep.subr.bf16.mxu0 0
        %3178 = vmatpush1.bf16.msra.mxu0 %v3155
        %3179 = vmatprep.subr.bf16.mxu0 0
        %3180 = vmatpush1.bf16.msra.mxu0 %v3154
        %3181 = vmatprep.subr.bf16.mxu0 0
        %3182 = vmatpush2.bf16.msra.mxu0 0
        %3183 = vmatprep.subr.bf16.mxu0 0
        %3184 = vmatpush2.bf16.msra.mxu0 0
        %3185 = vmatprep.subr.bf16.mxu0 0
        %3186 = vmatpush2.bf16.msra.mxu0 0
        %3187 = vmatprep.subr.bf16.mxu0 0
        %3188 = vmatpush2.bf16.msra.mxu0 0
        %3189 = vmatprep.subr.bf16.mxu0 0
        %3190 = vmatpush2.bf16.msra.mxu0 0
        %3191 = vmatprep.subr.bf16.mxu0 0
        %3192 = vmatpush2.bf16.msra.mxu0 0
        %3193 = vmatprep.subr.bf16.mxu0 0
        %3194 = vmatpush2.bf16.msra.mxu0 0
        %3195 = vmatprep.subr.bf16.mxu0 0
        %3196 = vmatpush2.bf16.msra.mxu0 0
        %3197 = vmatprep.mubr.bf16.mxu0 0
        %3198 = vmatmul.mubr.bf16.gmra.mxu0 %v3163
        %v3199 = vpop.f32.mrf.mxu0
        %v3200 = vadd.f32 %v3131, %v3199
        %v3201 = vpop.f32.mrf.mxu0
        %v3202 = vpop.f32.mrf.mxu0
        %v3203 = vadd.f32 %v3131, %v3202
        %v3204 = vpop.f32.mrf.mxu0
        %3205 = vdwg.mxu0
        %v3206 = vpack.c.bf16 %v3203, %v3200
        %v3208 = vunpack.c.l.b16 %v3206
        %v3209 = vunpack.c.h.b16 %v3206
        %v3210 = vpack.c.b16 %v3208, %v3208
        %v3211 = vpack.c.b16 %v3209, %v3209
        %vm3214 = vcmask 519168
        %3215 = vst.msk [vmem:[%s272] sm:$0xf] %vm3214, %v3210
        %3216 = vst.msk [vmem:[%s272 + $0x4] sm:$0xf] %vm3214, %v3211
        %s3217 = sand.u32 %s181, 1
        %s3218 = scalar_lea.sflag [#allocation4], %s3217
        %s3219 = sand.u32 %s181, 1
        %s3220 = smul.addr %s3219, 8
        %s3221 = scalar_lea.vmem [#allocation3], %s3220
        // Predicated region
        $region49: #{tpu_custom_call.1} parent=47 // pred_check
          %p3222 = pneg %p191
        $region50: #{tpu_custom_call.1} parent=47 // pred_check_branch
          %3224 = sbr.rel (%p3222) target = $region52
        $region51: #{tpu_custom_call.1} parent=47 // pred_region
          %s3225 = smul.u32 2, %s21
          %s3227 = ssub.s32 128, 128
          %3228 = vsyncadd %s3218, %s3227
          %s3229 = smul.addr %s3225, 64
          %s3230 = scalar_lea.hbm %s7, %s3229
          %s3231 = sshll.u32 %s3221, 4
          %s3232 = int_to_ptr.vmem [resolvable:$true] %s3231
          %3237 = dma.vmem_to_hbm [thread:$0]  %s3232, 128, %s3230, %s3218, 64, 64, 4
        $region52: #{tpu_custom_call.1} parent=47 // pred_fallthru
          _
      $region48: #{tpu_custom_call.1} parent=5 // pred_fallthru
        _
      %p3238 = scmp.le.s32.totalorder 2, %s16
      // Predicated region
      $region53: #{tpu_custom_call.1} parent=5 // pred_check
        %p3239 = pneg %p3238
      $region54: #{tpu_custom_call.1} parent=5 // pred_check_branch
        %3241 = sbr.rel (%p3239) target = $region56
      $region55: #{tpu_custom_call.1} parent=5 // pred_region
        %s3242 = ssub.s32 %s16, 2
        // Predicated region
        $region57: #{tpu_custom_call.1} parent=55 // pred_check
          %p3243 = pneg %p197
        $region58: #{tpu_custom_call.1} parent=55 // pred_check_branch
          %3245 = sbr.rel (%p3243) target = $region60
        $region59: #{tpu_custom_call.1} parent=55 // pred_region
          %s3246 = sand.u32 %s182, 1
          %s3247 = scalar_lea.sflag [#allocation4], %s3246
          %s3248 = sand.u32 %s182, 1
          %s3249 = smul.addr %s3248, 8
          %s3250 = scalar_lea.vmem [#allocation3], %s3249
          %3251 = dma.done %s3247, 128
        $region60: #{tpu_custom_call.1} parent=55 // pred_fallthru
          _
      $region56: #{tpu_custom_call.1} parent=5 // pred_fallthru
        _
    $region6: #{tpu_custom_call.1} parent=1 // loop_footer
      %s20 = sadd.s32 1, %s16
    $region7: #{tpu_custom_call.1} parent=1 // loop_footer_branch
      %15 = sbr.rel target = $region3
    $region8: #{tpu_custom_call.1} parent=1 // loop_exit
      _
    %3252 = vsyncpa [#allocation4], 1
    %s3253 = scalar_lea.sflag [#allocation4], 1
    %3254 = vsyncpa %s3253, 1

</llo_original>
